<compile_context>
chip_gen: v5e
topology: v5e:2x2
jax: 0.10.0
libtpu: 0.0.40
codegen_flags: <defaults>
</compile_context>

<pallas_src>
import math

import numpy as np
import jax
import jax.numpy as jnp
from jax.experimental import pallas as pl

_MSSSIM_WEIGHTS = (0.0448, 0.2856, 0.3001, 0.2363, 0.1333)
_LANES = 128


# ----------------------------- compile-time tables ----------------------------

def _gaussian_1d_np(window_size, sigma=1.5):
    g = np.array(
        [math.exp(-((x - window_size // 2) ** 2) / (2.0 * sigma ** 2))
         for x in range(window_size)],
        dtype=np.float64,
    )
    return (g / g.sum()).astype(np.float32)


def _band_matrices(ws, h, w):
    """Left (Ho, H) and right (W, Wo) Gaussian Toeplitz band matrices ('valid')."""
    g = _gaussian_1d_np(ws)
    ho, wo = h - ws + 1, w - ws + 1
    th = np.zeros((ho, h), np.float32)
    for i in range(ho):
        th[i, i:i + ws] = g
    tw = np.zeros((w, wo), np.float32)
    for j in range(wo):
        tw[j:j + ws, j] = g
    return th, tw


def _block_diag(m, reps):
    r, c = m.shape
    out = np.zeros((r * reps, c * reps), m.dtype)
    for k in range(reps):
        out[k * r:(k + 1) * r, k * c:(k + 1) * c] = m
    return out


def _stacked_th(th, reps, row_pad):
    """Block-diagonal TH repeated `reps` times, each block's rows padded to
    `row_pad` so the output blocks land at sublane-aligned row offsets."""
    ho, h = th.shape
    out = np.zeros((reps * row_pad, reps * h), np.float32)
    for k in range(reps):
        out[k * row_pad:k * row_pad + ho, k * h:(k + 1) * h] = th
    return out


def _pool_matrices(h, w):
    """2x2 avg-pool (stride 2, floor) as PH (H/2, H) and PW (W, W/2) matmuls."""
    hp, wp = h // 2, w // 2
    ph = np.zeros((hp, h), np.float32)
    idx = np.arange(hp)
    ph[idx, 2 * idx] = 0.5
    ph[idx, 2 * idx + 1] = 0.5
    pw = np.zeros((w, wp), np.float32)
    jdx = np.arange(wp)
    pw[2 * jdx, jdx] = 0.5
    pw[2 * jdx + 1, jdx] = 0.5
    return ph, pw


# ------------------------------ fused Pallas kernel ---------------------------

def _make_msssim_kernel(cfgs, nc, fused, pad_ho):
    """Builds the fused 5-level MS-SSIM kernel (all shapes static per level)."""
    nlev = len(cfgs)

    def kernel(*refs):
        x1_ref, x2_ref = refs[0], refs[1]
        pos = 2
        a_refs = refs[pos:pos + nlev]; pos += nlev          # TH (block-diag) per level
        twb_refs = refs[pos:pos + nlev]; pos += nlev        # TW block-diag per level
        ph_refs = refs[pos:pos + nlev - 1]; pos += nlev - 1  # pool-left per level
        pwb_refs = refs[pos:pos + nlev - 1]; pos += nlev - 1  # pool-right per level
        ssim_ref, cs_ref = refs[pos], refs[pos + 1]

        x1 = x1_ref[...]          # (H, NC*W) slab, planes contiguous along lanes
        x2 = x2_ref[...]

        for l, (h, w, ws) in enumerate(cfgs):
            ho, wo = h - ws + 1, w - ws + 1

            # val_range=None path of the reference: dynamic range from this
            # level's img1 (computed in-kernel, no extra HBM pass).
            mx = jnp.max(x1)
            mn = jnp.min(x1)
            max_val = jnp.where(mx > 128.0, 255.0, 1.0)
            min_val = jnp.where(mn < -0.5, -1.0, 0.0)
            lr = max_val - min_val
            c1 = (0.01 * lr) ** 2
            c2 = (0.03 * lr) ** 2

            a = a_refs[l][...]
            twb = twb_refs[l][...]

            if fused[l]:
                # Fused path: stack the 5 conv inputs along sublanes, run the
                # whole separable conv as 2 MXU matmuls.
                hop = pad_ho[l]
                s = jnp.concatenate([x1, x2, x1 * x1, x2 * x2, x1 * x2], axis=0)
                t = jnp.dot(a, s, preferred_element_type=jnp.float32)     # (5*hop, NC*w)
                z = jnp.dot(t, twb, preferred_element_type=jnp.float32)   # (5*hop, NC*wo)
                mu1 = z[0 * hop:0 * hop + ho]
                mu2 = z[1 * hop:1 * hop + ho]
                e11 = z[2 * hop:2 * hop + ho]
                e22 = z[3 * hop:3 * hop + ho]
                e12 = z[4 * hop:4 * hop + ho]
            else:
                # Tiny deep levels (H not a multiple of 8): per-map 2D dots.
                def dwconv(xm):
                    t = jnp.dot(a, xm, preferred_element_type=jnp.float32)
                    return jnp.dot(t, twb, preferred_element_type=jnp.float32)
                mu1 = dwconv(x1)
                mu2 = dwconv(x2)
                e11 = dwconv(x1 * x1)
                e22 = dwconv(x2 * x2)
                e12 = dwconv(x1 * x2)

            mu1_sq = mu1 * mu1
            mu2_sq = mu2 * mu2
            mu1_mu2 = mu1 * mu2
            sigma1_sq = e11 - mu1_sq
            sigma2_sq = e22 - mu2_sq
            sigma12 = e12 - mu1_mu2

            v1 = 2.0 * sigma12 + c2
            v2 = sigma1_sq + sigma2_sq + c2
            # Divisions -> EUP approx reciprocals (off the VALU chain).
            cs_map = v1 * pl.reciprocal(v2, approx=True)
            lum = (2.0 * mu1_mu2 + c1) * pl.reciprocal(mu1_sq + mu2_sq + c1,
                                                       approx=True)
            ssim_map = cs_map * lum

            inv_n = 1.0 / float(ho * nc * wo)
            ssim_mean = jnp.sum(ssim_map) * inv_n
            cs_mean = jnp.sum(cs_map) * inv_n
            # Lane-dense row writes (unmasked stores), one row per level.
            ssim_ref[l:l + 1, :] = jnp.full((1, _LANES), ssim_mean, dtype=jnp.float32)
            cs_ref[l:l + 1, :] = jnp.full((1, _LANES), cs_mean, dtype=jnp.float32)

            if l + 1 < nlev:
                # In-kernel 2x2 avg-pool (floor mode) for the next level.
                ph = ph_refs[l][...]
                pwb = pwb_refs[l][...]
                x1 = jnp.dot(jnp.dot(ph, x1, preferred_element_type=jnp.float32),
                             pwb, preferred_element_type=jnp.float32)
                x2 = jnp.dot(jnp.dot(ph, x2, preferred_element_type=jnp.float32),
                             pwb, preferred_element_type=jnp.float32)

    return kernel


# ---------------------------------- wrapper -----------------------------------

def msssim_pallas(img1, img2, window_size=11, size_average=True, normalize=True):
    assert size_average, "only size_average=True is implemented (module default)"
    img1 = img1.astype(jnp.float32)
    img2 = img2.astype(jnp.float32)
    n, c, h0, w0 = img1.shape
    nc = n * c
    levels = len(_MSSSIM_WEIGHTS)

    # Per-level static configs (H, W, ws); ws shrinks like the reference.
    cfgs = []
    h, w = h0, w0
    for _ in range(levels):
        if h < 1 or w < 1:
            raise ValueError("input too small for 5 MS-SSIM levels")
        ws = min(window_size, h, w)
        cfgs.append((h, w, ws))
        h, w = h // 2, w // 2

    fused, pad_ho = [], []
    a_mats, twb_mats, ph_mats, pwb_mats = [], [], [], []
    for l, (h, w, ws) in enumerate(cfgs):
        th, tw = _band_matrices(ws, h, w)
        ho = h - ws + 1
        f = (h % 8 == 0)                       # sublane-aligned -> fused map stack
        hop = ((ho + 7) // 8) * 8
        fused.append(f)
        pad_ho.append(hop)
        a_mats.append(_stacked_th(th, 5, hop) if f else th)
        twb_mats.append(_block_diag(tw, nc))   # per-plane blocks along lanes
        if l + 1 < levels:
            ph, pw = _pool_matrices(h, w)
            ph_mats.append(ph)
            pwb_mats.append(_block_diag(pw, nc))

    # NCHW -> (H, NC*W): each plane occupies a contiguous W-wide lane block.
    def to_slab(x):
        return jnp.transpose(x.reshape(nc, h0, w0), (1, 0, 2)).reshape(h0, nc * w0)

    x1 = to_slab(img1)
    x2 = to_slab(img2)
    mats = [jnp.asarray(m) for m in (a_mats + twb_mats + ph_mats + pwb_mats)]

    kernel = _make_msssim_kernel(cfgs, nc, fused, pad_ho)
    # Grid-less pallas_call: everything resident in VMEM, single invocation.
    ssim_out, cs_out = pl.pallas_call(
        kernel,
        out_shape=(jax.ShapeDtypeStruct((levels, _LANES), jnp.float32),
                   jax.ShapeDtypeStruct((levels, _LANES), jnp.float32)),
    )(x1, x2, *mats)

    mssim = ssim_out[:, 0]
    mcs = cs_out[:, 0]
    weights = jnp.array(_MSSSIM_WEIGHTS, dtype=jnp.float32)
    if normalize:
        mssim = (mssim + 1.0) / 2.0
        mcs = (mcs + 1.0) / 2.0
    pow1 = mcs ** weights
    pow2 = mssim ** weights
    # Matches the reference's torch.prod(pow1[:-1] * pow2[-1]).
    return jnp.prod(pow1[:-1] * pow2[-1])


class MSSSIM:
    """JAX/Pallas equivalent of the PyTorch MSSSIM module (forward pass)."""

    def __init__(self, window_size=11, size_average=True, channel=1):
        self.window_size = window_size
        self.size_average = size_average
        self.channel = channel  # unused in forward (matches reference)

    def __call__(self, img1, img2):
        return msssim_pallas(img1, img2, window_size=self.window_size,
                             size_average=self.size_average, normalize=True)


# ----------------------- pure-JAX reference (sanity check) --------------------

def _avg_pool2(x):
    n, c, h, w = x.shape
    ho, wo = h // 2, w // 2
    x = x[:, :, : ho * 2, : wo * 2]
    x = x.reshape(n, c, ho, 2, wo, 2)
    return x.mean(axis=(3, 5))


def _ssim_ref(img1, img2, window_size=11):
    _, c, h, w = img1.shape
    max_val = jnp.where(jnp.max(img1) > 128.0, 255.0, 1.0)
    min_val = jnp.where(jnp.min(img1) < -0.5, -1.0, 0.0)
    lr = max_val - min_val
    c1 = (0.01 * lr) ** 2
    c2 = (0.03 * lr) ** 2
    ws = min(window_size, h, w)
    g = jnp.asarray(_gaussian_1d_np(ws))
    w2d = jnp.outer(g, g)
    win = jnp.broadcast_to(w2d[None, None], (c, 1, ws, ws))

    def conv(x):
        return jax.lax.conv_general_dilated(
            x, win, window_strides=(1, 1), padding="VALID",
            dimension_numbers=("NCHW", "OIHW", "NCHW"),
            feature_group_count=c)

    mu1 = conv(img1)
    mu2 = conv(img2)
    mu1_sq, mu2_sq, mu1_mu2 = mu1 * mu1, mu2 * mu2, mu1 * mu2
    s1 = conv(img1 * img1) - mu1_sq
    s2 = conv(img2 * img2) - mu2_sq
    s12 = conv(img1 * img2) - mu1_mu2
    v1 = 2.0 * s12 + c2
    v2 = s1 + s2 + c2
    cs = jnp.mean(v1 / v2)
    ssim_map = (2.0 * mu1_mu2 + c1) * v1 / ((mu1_sq + mu2_sq + c1) * v2)
    return jnp.mean(ssim_map), cs


def _msssim_ref(img1, img2, window_size=11, normalize=True):
    weights = jnp.array(_MSSSIM_WEIGHTS, dtype=jnp.float32)
    mssim, mcs = [], []
    x1, x2 = img1, img2
    for _ in range(weights.shape[0]):
        s, cval = _ssim_ref(x1, x2, window_size)
        mssim.append(s)
        mcs.append(cval)
        x1 = _avg_pool2(x1)
        x2 = _avg_pool2(x2)
    mssim = jnp.stack(mssim)
    mcs = jnp.stack(mcs)
    if normalize:
        mssim = (mssim + 1.0) / 2.0
        mcs = (mcs + 1.0) / 2.0
    pow1 = mcs ** weights
    pow2 = mssim ** weights
    return jnp.prod(pow1[:-1] * pow2[-1])


# ----------------------------------- main -------------------------------------

if __name__ == "__main__":
    key = jax.random.PRNGKey(0)
    k1, k2 = jax.random.split(key)
    # NCHW inputs; 32x32 so that all 5 MS-SSIM pyramid levels are valid.
    img1 = jax.random.uniform(k1, (2, 3, 32, 32), dtype=jnp.float32)
    img2 = jax.random.uniform(k2, (2, 3, 32, 32), dtype=jnp.float32)

    model = MSSSIM(window_size=11, size_average=True, channel=3)
    fn = jax.jit(lambda a, b: model(a, b))
    out = jax.block_until_ready(fn(img1, img2))

    ref = jax.block_until_ready(_msssim_ref(img1, img2, window_size=11, normalize=True))
    if not bool(jnp.allclose(out, ref, rtol=3e-3, atol=3e-3)):
        raise ValueError(f"mismatch: pallas={float(out)} ref={float(ref)}")

    print("KERNEL_OK")
</pallas_src>

<mosaic_0001>
module attributes {stable_mosaic.version = 11 : i64} {
  func.func @kernel(%arg0: memref<32x192xf32, #tpu.memory_space<vmem>>, %arg1: memref<32x192xf32, #tpu.memory_space<vmem>>, %arg2: memref<120x160xf32, #tpu.memory_space<vmem>>, %arg3: memref<40x80xf32, #tpu.memory_space<vmem>>, %arg4: memref<40x40xf32, #tpu.memory_space<vmem>>, %arg5: memref<1x4xf32, #tpu.memory_space<vmem>>, %arg6: memref<1x2xf32, #tpu.memory_space<vmem>>, %arg7: memref<192x132xf32, #tpu.memory_space<vmem>>, %arg8: memref<96x36xf32, #tpu.memory_space<vmem>>, %arg9: memref<48x6xf32, #tpu.memory_space<vmem>>, %arg10: memref<24x6xf32, #tpu.memory_space<vmem>>, %arg11: memref<12x6xf32, #tpu.memory_space<vmem>>, %arg12: memref<16x32xf32, #tpu.memory_space<vmem>>, %arg13: memref<8x16xf32, #tpu.memory_space<vmem>>, %arg14: memref<4x8xf32, #tpu.memory_space<vmem>>, %arg15: memref<2x4xf32, #tpu.memory_space<vmem>>, %arg16: memref<192x96xf32, #tpu.memory_space<vmem>>, %arg17: memref<96x48xf32, #tpu.memory_space<vmem>>, %arg18: memref<48x24xf32, #tpu.memory_space<vmem>>, %arg19: memref<24x12xf32, #tpu.memory_space<vmem>>, %arg20: memref<5x128xf32, #tpu.memory_space<vmem>>, %arg21: memref<5x128xf32, #tpu.memory_space<vmem>>) attributes {dimension_semantics = [], scalar_prefetch = 0 : i64, scratch_operands = 0 : i64, tpu.core_type = #tpu.core_type<tc>} {
    %c0 = arith.constant 0 : index
    %c0_0 = arith.constant 0 : index
    %0 = vector.load %arg0[%c0, %c0_0] : memref<32x192xf32, #tpu.memory_space<vmem>>, vector<32x192xf32>
    %c0_1 = arith.constant 0 : index
    %c0_2 = arith.constant 0 : index
    %1 = vector.load %arg1[%c0_1, %c0_2] : memref<32x192xf32, #tpu.memory_space<vmem>>, vector<32x192xf32>
    %2 = vector.shape_cast %0 : vector<32x192xf32> to vector<1x32x192xf32>
    %cst = arith.constant dense<0xFF800000> : vector<1xf32>
    %3 = vector.multi_reduction <maximumf>, %2, %cst [1, 2] : vector<1x32x192xf32> to vector<1xf32>
    %4 = vector.shape_cast %3 : vector<1xf32> to vector<1x1x1xf32>
    %5 = vector.extract %4[0, 0, 0] : f32 from vector<1x1x1xf32>
    %6 = vector.shape_cast %0 : vector<32x192xf32> to vector<1x32x192xf32>
    %cst_3 = arith.constant dense<0x7F800000> : vector<1xf32>
    %7 = vector.multi_reduction <minimumf>, %6, %cst_3 [1, 2] : vector<1x32x192xf32> to vector<1xf32>
    %8 = vector.shape_cast %7 : vector<1xf32> to vector<1x1x1xf32>
    %9 = vector.extract %8[0, 0, 0] : f32 from vector<1x1x1xf32>
    %cst_4 = arith.constant 1.280000e+02 : f32
    %10 = arith.cmpf ogt, %5, %cst_4 : f32
    %cst_5 = arith.constant 2.550000e+02 : f32
    %cst_6 = arith.constant 1.000000e+00 : f32
    %11 = arith.select %10, %cst_5, %cst_6 : f32
    %cst_7 = arith.constant -5.000000e-01 : f32
    %12 = arith.cmpf olt, %9, %cst_7 : f32
    %cst_8 = arith.constant -1.000000e+00 : f32
    %cst_9 = arith.constant 0.000000e+00 : f32
    %13 = arith.select %12, %cst_8, %cst_9 : f32
    %14 = arith.subf %11, %13 : f32
    %cst_10 = arith.constant 0.00999999977 : f32
    %15 = arith.mulf %cst_10, %14 : f32
    %16 = arith.mulf %15, %15 : f32
    %cst_11 = arith.constant 3.000000e-02 : f32
    %17 = arith.mulf %cst_11, %14 : f32
    %18 = arith.mulf %17, %17 : f32
    %c0_12 = arith.constant 0 : index
    %c0_13 = arith.constant 0 : index
    %19 = vector.load %arg2[%c0_12, %c0_13] : memref<120x160xf32, #tpu.memory_space<vmem>>, vector<120x160xf32>
    %c0_14 = arith.constant 0 : index
    %c0_15 = arith.constant 0 : index
    %20 = vector.load %arg7[%c0_14, %c0_15] : memref<192x132xf32, #tpu.memory_space<vmem>>, vector<192x132xf32>
    %21 = arith.mulf %0, %0 : vector<32x192xf32>
    %22 = arith.mulf %1, %1 : vector<32x192xf32>
    %23 = arith.mulf %0, %1 : vector<32x192xf32>
    %24 = tpu.concatenate %0, %1, %21, %22, %23 in 0 : vector<32x192xf32>, vector<32x192xf32>, vector<32x192xf32>, vector<32x192xf32>, vector<32x192xf32> -> vector<160x192xf32>
    %cst_16 = arith.constant dense<0.000000e+00> : vector<120x192xf32>
    %25 = tpu.matmul %19, %24, %cst_16 {dimension_numbers = #tpu.dot_dimension_numbers<[1], [0], [0], [1], [0, 0, 1, 1], [], []>} : vector<120x160xf32>, vector<160x192xf32>, vector<120x192xf32> -> vector<120x192xf32>
    %cst_17 = arith.constant dense<0.000000e+00> : vector<120x132xf32>
    %26 = tpu.matmul %25, %20, %cst_17 {dimension_numbers = #tpu.dot_dimension_numbers<[1], [0], [0], [1], [0, 0, 1, 1], [], []>} : vector<120x192xf32>, vector<192x132xf32>, vector<120x132xf32> -> vector<120x132xf32>
    %27 = vector.extract_strided_slice %26 {offsets = [0, 0], sizes = [22, 132], strides = [1, 1]} : vector<120x132xf32> to vector<22x132xf32>
    %28 = vector.extract_strided_slice %26 {offsets = [24, 0], sizes = [22, 132], strides = [1, 1]} : vector<120x132xf32> to vector<22x132xf32>
    %29 = vector.extract_strided_slice %26 {offsets = [48, 0], sizes = [22, 132], strides = [1, 1]} : vector<120x132xf32> to vector<22x132xf32>
    %30 = vector.extract_strided_slice %26 {offsets = [72, 0], sizes = [22, 132], strides = [1, 1]} : vector<120x132xf32> to vector<22x132xf32>
    %31 = vector.extract_strided_slice %26 {offsets = [96, 0], sizes = [22, 132], strides = [1, 1]} : vector<120x132xf32> to vector<22x132xf32>
    %32 = arith.mulf %27, %27 : vector<22x132xf32>
    %33 = arith.mulf %28, %28 : vector<22x132xf32>
    %34 = arith.mulf %27, %28 : vector<22x132xf32>
    %35 = arith.subf %29, %32 : vector<22x132xf32>
    %36 = arith.subf %30, %33 : vector<22x132xf32>
    %37 = arith.subf %31, %34 : vector<22x132xf32>
    %cst_18 = arith.constant 2.000000e+00 : f32
    %38 = vector.broadcast %cst_18 : f32 to vector<22x132xf32>
    %39 = arith.mulf %38, %37 : vector<22x132xf32>
    %40 = vector.broadcast %18 : f32 to vector<22x132xf32>
    %41 = arith.addf %39, %40 : vector<22x132xf32>
    %42 = arith.addf %35, %36 : vector<22x132xf32>
    %43 = vector.broadcast %18 : f32 to vector<22x132xf32>
    %44 = arith.addf %42, %43 : vector<22x132xf32>
    %45 = tpu.reciprocal %44 {approx = true} : vector<22x132xf32> -> vector<22x132xf32>
    %46 = arith.mulf %41, %45 : vector<22x132xf32>
    %cst_19 = arith.constant 2.000000e+00 : f32
    %47 = vector.broadcast %cst_19 : f32 to vector<22x132xf32>
    %48 = arith.mulf %47, %34 : vector<22x132xf32>
    %49 = vector.broadcast %16 : f32 to vector<22x132xf32>
    %50 = arith.addf %48, %49 : vector<22x132xf32>
    %51 = arith.addf %32, %33 : vector<22x132xf32>
    %52 = vector.broadcast %16 : f32 to vector<22x132xf32>
    %53 = arith.addf %51, %52 : vector<22x132xf32>
    %54 = tpu.reciprocal %53 {approx = true} : vector<22x132xf32> -> vector<22x132xf32>
    %55 = arith.mulf %50, %54 : vector<22x132xf32>
    %56 = arith.mulf %46, %55 : vector<22x132xf32>
    %57 = vector.shape_cast %56 : vector<22x132xf32> to vector<1x22x132xf32>
    %cst_20 = arith.constant dense<0.000000e+00> : vector<1xf32>
    %58 = vector.multi_reduction <add>, %57, %cst_20 [1, 2] : vector<1x22x132xf32> to vector<1xf32>
    %59 = vector.shape_cast %58 : vector<1xf32> to vector<1x1x1xf32>
    %60 = vector.extract %59[0, 0, 0] : f32 from vector<1x1x1xf32>
    %cst_21 = arith.constant 3.44352622E-4 : f32
    %61 = arith.mulf %60, %cst_21 : f32
    %62 = vector.shape_cast %46 : vector<22x132xf32> to vector<1x22x132xf32>
    %cst_22 = arith.constant dense<0.000000e+00> : vector<1xf32>
    %63 = vector.multi_reduction <add>, %62, %cst_22 [1, 2] : vector<1x22x132xf32> to vector<1xf32>
    %64 = vector.shape_cast %63 : vector<1xf32> to vector<1x1x1xf32>
    %65 = vector.extract %64[0, 0, 0] : f32 from vector<1x1x1xf32>
    %cst_23 = arith.constant 3.44352622E-4 : f32
    %66 = arith.mulf %65, %cst_23 : f32
    %67 = vector.broadcast %61 : f32 to vector<1x128xf32>
    %c0_24 = arith.constant 0 : index
    %c0_25 = arith.constant 0 : index
    %68 = vector.load %arg20[%c0_24, %c0_25] : memref<5x128xf32, #tpu.memory_space<vmem>>, vector<1x128xf32>
    tpu.vector_store %arg20[%c0_24, %c0_25], %67 {strides = array<i32>} : memref<5x128xf32, #tpu.memory_space<vmem>>, vector<1x128xf32>,
    %69 = vector.broadcast %66 : f32 to vector<1x128xf32>
    %c0_26 = arith.constant 0 : index
    %c0_27 = arith.constant 0 : index
    %70 = vector.load %arg21[%c0_26, %c0_27] : memref<5x128xf32, #tpu.memory_space<vmem>>, vector<1x128xf32>
    tpu.vector_store %arg21[%c0_26, %c0_27], %69 {strides = array<i32>} : memref<5x128xf32, #tpu.memory_space<vmem>>, vector<1x128xf32>,
    %c0_28 = arith.constant 0 : index
    %c0_29 = arith.constant 0 : index
    %71 = vector.load %arg12[%c0_28, %c0_29] : memref<16x32xf32, #tpu.memory_space<vmem>>, vector<16x32xf32>
    %c0_30 = arith.constant 0 : index
    %c0_31 = arith.constant 0 : index
    %72 = vector.load %arg16[%c0_30, %c0_31] : memref<192x96xf32, #tpu.memory_space<vmem>>, vector<192x96xf32>
    %cst_32 = arith.constant dense<0.000000e+00> : vector<16x192xf32>
    %73 = tpu.matmul %71, %0, %cst_32 {dimension_numbers = #tpu.dot_dimension_numbers<[1], [0], [0], [1], [0, 0, 1, 1], [], []>} : vector<16x32xf32>, vector<32x192xf32>, vector<16x192xf32> -> vector<16x192xf32>
    %cst_33 = arith.constant dense<0.000000e+00> : vector<16x96xf32>
    %74 = tpu.matmul %73, %72, %cst_33 {dimension_numbers = #tpu.dot_dimension_numbers<[1], [0], [0], [1], [0, 0, 1, 1], [], []>} : vector<16x192xf32>, vector<192x96xf32>, vector<16x96xf32> -> vector<16x96xf32>
    %cst_34 = arith.constant dense<0.000000e+00> : vector<16x192xf32>
    %75 = tpu.matmul %71, %1, %cst_34 {dimension_numbers = #tpu.dot_dimension_numbers<[1], [0], [0], [1], [0, 0, 1, 1], [], []>} : vector<16x32xf32>, vector<32x192xf32>, vector<16x192xf32> -> vector<16x192xf32>
    %cst_35 = arith.constant dense<0.000000e+00> : vector<16x96xf32>
    %76 = tpu.matmul %75, %72, %cst_35 {dimension_numbers = #tpu.dot_dimension_numbers<[1], [0], [0], [1], [0, 0, 1, 1], [], []>} : vector<16x192xf32>, vector<192x96xf32>, vector<16x96xf32> -> vector<16x96xf32>
    %77 = vector.shape_cast %74 : vector<16x96xf32> to vector<1x16x96xf32>
    %cst_36 = arith.constant dense<0xFF800000> : vector<1xf32>
    %78 = vector.multi_reduction <maximumf>, %77, %cst_36 [1, 2] : vector<1x16x96xf32> to vector<1xf32>
    %79 = vector.shape_cast %78 : vector<1xf32> to vector<1x1x1xf32>
    %80 = vector.extract %79[0, 0, 0] : f32 from vector<1x1x1xf32>
    %81 = vector.shape_cast %74 : vector<16x96xf32> to vector<1x16x96xf32>
    %cst_37 = arith.constant dense<0x7F800000> : vector<1xf32>
    %82 = vector.multi_reduction <minimumf>, %81, %cst_37 [1, 2] : vector<1x16x96xf32> to vector<1xf32>
    %83 = vector.shape_cast %82 : vector<1xf32> to vector<1x1x1xf32>
    %84 = vector.extract %83[0, 0, 0] : f32 from vector<1x1x1xf32>
    %cst_38 = arith.constant 1.280000e+02 : f32
    %85 = arith.cmpf ogt, %80, %cst_38 : f32
    %cst_39 = arith.constant 2.550000e+02 : f32
    %cst_40 = arith.constant 1.000000e+00 : f32
    %86 = arith.select %85, %cst_39, %cst_40 : f32
    %cst_41 = arith.constant -5.000000e-01 : f32
    %87 = arith.cmpf olt, %84, %cst_41 : f32
    %cst_42 = arith.constant -1.000000e+00 : f32
    %cst_43 = arith.constant 0.000000e+00 : f32
    %88 = arith.select %87, %cst_42, %cst_43 : f32
    %89 = arith.subf %86, %88 : f32
    %cst_44 = arith.constant 0.00999999977 : f32
    %90 = arith.mulf %cst_44, %89 : f32
    %91 = arith.mulf %90, %90 : f32
    %cst_45 = arith.constant 3.000000e-02 : f32
    %92 = arith.mulf %cst_45, %89 : f32
    %93 = arith.mulf %92, %92 : f32
    %c0_46 = arith.constant 0 : index
    %c0_47 = arith.constant 0 : index
    %94 = vector.load %arg3[%c0_46, %c0_47] : memref<40x80xf32, #tpu.memory_space<vmem>>, vector<40x80xf32>
    %c0_48 = arith.constant 0 : index
    %c0_49 = arith.constant 0 : index
    %95 = vector.load %arg8[%c0_48, %c0_49] : memref<96x36xf32, #tpu.memory_space<vmem>>, vector<96x36xf32>
    %96 = arith.mulf %74, %74 : vector<16x96xf32>
    %97 = arith.mulf %76, %76 : vector<16x96xf32>
    %98 = arith.mulf %74, %76 : vector<16x96xf32>
    %99 = tpu.concatenate %74, %76, %96, %97, %98 in 0 : vector<16x96xf32>, vector<16x96xf32>, vector<16x96xf32>, vector<16x96xf32>, vector<16x96xf32> -> vector<80x96xf32>
    %cst_50 = arith.constant dense<0.000000e+00> : vector<40x96xf32>
    %100 = tpu.matmul %94, %99, %cst_50 {dimension_numbers = #tpu.dot_dimension_numbers<[1], [0], [0], [1], [0, 0, 1, 1], [], []>} : vector<40x80xf32>, vector<80x96xf32>, vector<40x96xf32> -> vector<40x96xf32>
    %cst_51 = arith.constant dense<0.000000e+00> : vector<40x36xf32>
    %101 = tpu.matmul %100, %95, %cst_51 {dimension_numbers = #tpu.dot_dimension_numbers<[1], [0], [0], [1], [0, 0, 1, 1], [], []>} : vector<40x96xf32>, vector<96x36xf32>, vector<40x36xf32> -> vector<40x36xf32>
    %102 = vector.extract_strided_slice %101 {offsets = [0, 0], sizes = [6, 36], strides = [1, 1]} : vector<40x36xf32> to vector<6x36xf32>
    %103 = vector.extract_strided_slice %101 {offsets = [8, 0], sizes = [6, 36], strides = [1, 1]} : vector<40x36xf32> to vector<6x36xf32>
    %104 = vector.extract_strided_slice %101 {offsets = [16, 0], sizes = [6, 36], strides = [1, 1]} : vector<40x36xf32> to vector<6x36xf32>
    %105 = vector.extract_strided_slice %101 {offsets = [24, 0], sizes = [6, 36], strides = [1, 1]} : vector<40x36xf32> to vector<6x36xf32>
    %106 = vector.extract_strided_slice %101 {offsets = [32, 0], sizes = [6, 36], strides = [1, 1]} : vector<40x36xf32> to vector<6x36xf32>
    %107 = arith.mulf %102, %102 : vector<6x36xf32>
    %108 = arith.mulf %103, %103 : vector<6x36xf32>
    %109 = arith.mulf %102, %103 : vector<6x36xf32>
    %110 = arith.subf %104, %107 : vector<6x36xf32>
    %111 = arith.subf %105, %108 : vector<6x36xf32>
    %112 = arith.subf %106, %109 : vector<6x36xf32>
    %cst_52 = arith.constant 2.000000e+00 : f32
    %113 = vector.broadcast %cst_52 : f32 to vector<6x36xf32>
    %114 = arith.mulf %113, %112 : vector<6x36xf32>
    %115 = vector.broadcast %93 : f32 to vector<6x36xf32>
    %116 = arith.addf %114, %115 : vector<6x36xf32>
    %117 = arith.addf %110, %111 : vector<6x36xf32>
    %118 = vector.broadcast %93 : f32 to vector<6x36xf32>
    %119 = arith.addf %117, %118 : vector<6x36xf32>
    %120 = tpu.reciprocal %119 {approx = true} : vector<6x36xf32> -> vector<6x36xf32>
    %121 = arith.mulf %116, %120 : vector<6x36xf32>
    %cst_53 = arith.constant 2.000000e+00 : f32
    %122 = vector.broadcast %cst_53 : f32 to vector<6x36xf32>
    %123 = arith.mulf %122, %109 : vector<6x36xf32>
    %124 = vector.broadcast %91 : f32 to vector<6x36xf32>
    %125 = arith.addf %123, %124 : vector<6x36xf32>
    %126 = arith.addf %107, %108 : vector<6x36xf32>
    %127 = vector.broadcast %91 : f32 to vector<6x36xf32>
    %128 = arith.addf %126, %127 : vector<6x36xf32>
    %129 = tpu.reciprocal %128 {approx = true} : vector<6x36xf32> -> vector<6x36xf32>
    %130 = arith.mulf %125, %129 : vector<6x36xf32>
    %131 = arith.mulf %121, %130 : vector<6x36xf32>
    %132 = vector.shape_cast %131 : vector<6x36xf32> to vector<1x6x36xf32>
    %cst_54 = arith.constant dense<0.000000e+00> : vector<1xf32>
    %133 = vector.multi_reduction <add>, %132, %cst_54 [1, 2] : vector<1x6x36xf32> to vector<1xf32>
    %134 = vector.shape_cast %133 : vector<1xf32> to vector<1x1x1xf32>
    %135 = vector.extract %134[0, 0, 0] : f32 from vector<1x1x1xf32>
    %cst_55 = arith.constant 0.00462962966 : f32
    %136 = arith.mulf %135, %cst_55 : f32
    %137 = vector.shape_cast %121 : vector<6x36xf32> to vector<1x6x36xf32>
    %cst_56 = arith.constant dense<0.000000e+00> : vector<1xf32>
    %138 = vector.multi_reduction <add>, %137, %cst_56 [1, 2] : vector<1x6x36xf32> to vector<1xf32>
    %139 = vector.shape_cast %138 : vector<1xf32> to vector<1x1x1xf32>
    %140 = vector.extract %139[0, 0, 0] : f32 from vector<1x1x1xf32>
    %cst_57 = arith.constant 0.00462962966 : f32
    %141 = arith.mulf %140, %cst_57 : f32
    %142 = vector.broadcast %136 : f32 to vector<1x128xf32>
    %c1 = arith.constant 1 : index
    %c0_58 = arith.constant 0 : index
    %143 = vector.load %arg20[%c1, %c0_58] : memref<5x128xf32, #tpu.memory_space<vmem>>, vector<1x128xf32>
    tpu.vector_store %arg20[%c1, %c0_58], %142 {strides = array<i32>} : memref<5x128xf32, #tpu.memory_space<vmem>>, vector<1x128xf32>,
    %144 = vector.broadcast %141 : f32 to vector<1x128xf32>
    %c1_59 = arith.constant 1 : index
    %c0_60 = arith.constant 0 : index
    %145 = vector.load %arg21[%c1_59, %c0_60] : memref<5x128xf32, #tpu.memory_space<vmem>>, vector<1x128xf32>
    tpu.vector_store %arg21[%c1_59, %c0_60], %144 {strides = array<i32>} : memref<5x128xf32, #tpu.memory_space<vmem>>, vector<1x128xf32>,
    %c0_61 = arith.constant 0 : index
    %c0_62 = arith.constant 0 : index
    %146 = vector.load %arg13[%c0_61, %c0_62] : memref<8x16xf32, #tpu.memory_space<vmem>>, vector<8x16xf32>
    %c0_63 = arith.constant 0 : index
    %c0_64 = arith.constant 0 : index
    %147 = vector.load %arg17[%c0_63, %c0_64] : memref<96x48xf32, #tpu.memory_space<vmem>>, vector<96x48xf32>
    %cst_65 = arith.constant dense<0.000000e+00> : vector<8x96xf32>
    %148 = tpu.matmul %146, %74, %cst_65 {dimension_numbers = #tpu.dot_dimension_numbers<[1], [0], [0], [1], [0, 0, 1, 1], [], []>} : vector<8x16xf32>, vector<16x96xf32>, vector<8x96xf32> -> vector<8x96xf32>
    %cst_66 = arith.constant dense<0.000000e+00> : vector<8x48xf32>
    %149 = tpu.matmul %148, %147, %cst_66 {dimension_numbers = #tpu.dot_dimension_numbers<[1], [0], [0], [1], [0, 0, 1, 1], [], []>} : vector<8x96xf32>, vector<96x48xf32>, vector<8x48xf32> -> vector<8x48xf32>
    %cst_67 = arith.constant dense<0.000000e+00> : vector<8x96xf32>
    %150 = tpu.matmul %146, %76, %cst_67 {dimension_numbers = #tpu.dot_dimension_numbers<[1], [0], [0], [1], [0, 0, 1, 1], [], []>} : vector<8x16xf32>, vector<16x96xf32>, vector<8x96xf32> -> vector<8x96xf32>
    %cst_68 = arith.constant dense<0.000000e+00> : vector<8x48xf32>
    %151 = tpu.matmul %150, %147, %cst_68 {dimension_numbers = #tpu.dot_dimension_numbers<[1], [0], [0], [1], [0, 0, 1, 1], [], []>} : vector<8x96xf32>, vector<96x48xf32>, vector<8x48xf32> -> vector<8x48xf32>
    %152 = vector.shape_cast %149 : vector<8x48xf32> to vector<1x8x48xf32>
    %cst_69 = arith.constant dense<0xFF800000> : vector<1xf32>
    %153 = vector.multi_reduction <maximumf>, %152, %cst_69 [1, 2] : vector<1x8x48xf32> to vector<1xf32>
    %154 = vector.shape_cast %153 : vector<1xf32> to vector<1x1x1xf32>
    %155 = vector.extract %154[0, 0, 0] : f32 from vector<1x1x1xf32>
    %156 = vector.shape_cast %149 : vector<8x48xf32> to vector<1x8x48xf32>
    %cst_70 = arith.constant dense<0x7F800000> : vector<1xf32>
    %157 = vector.multi_reduction <minimumf>, %156, %cst_70 [1, 2] : vector<1x8x48xf32> to vector<1xf32>
    %158 = vector.shape_cast %157 : vector<1xf32> to vector<1x1x1xf32>
    %159 = vector.extract %158[0, 0, 0] : f32 from vector<1x1x1xf32>
    %cst_71 = arith.constant 1.280000e+02 : f32
    %160 = arith.cmpf ogt, %155, %cst_71 : f32
    %cst_72 = arith.constant 2.550000e+02 : f32
    %cst_73 = arith.constant 1.000000e+00 : f32
    %161 = arith.select %160, %cst_72, %cst_73 : f32
    %cst_74 = arith.constant -5.000000e-01 : f32
    %162 = arith.cmpf olt, %159, %cst_74 : f32
    %cst_75 = arith.constant -1.000000e+00 : f32
    %cst_76 = arith.constant 0.000000e+00 : f32
    %163 = arith.select %162, %cst_75, %cst_76 : f32
    %164 = arith.subf %161, %163 : f32
    %cst_77 = arith.constant 0.00999999977 : f32
    %165 = arith.mulf %cst_77, %164 : f32
    %166 = arith.mulf %165, %165 : f32
    %cst_78 = arith.constant 3.000000e-02 : f32
    %167 = arith.mulf %cst_78, %164 : f32
    %168 = arith.mulf %167, %167 : f32
    %c0_79 = arith.constant 0 : index
    %c0_80 = arith.constant 0 : index
    %169 = vector.load %arg4[%c0_79, %c0_80] : memref<40x40xf32, #tpu.memory_space<vmem>>, vector<40x40xf32>
    %c0_81 = arith.constant 0 : index
    %c0_82 = arith.constant 0 : index
    %170 = vector.load %arg9[%c0_81, %c0_82] : memref<48x6xf32, #tpu.memory_space<vmem>>, vector<48x6xf32>
    %171 = arith.mulf %149, %149 : vector<8x48xf32>
    %172 = arith.mulf %151, %151 : vector<8x48xf32>
    %173 = arith.mulf %149, %151 : vector<8x48xf32>
    %174 = tpu.concatenate %149, %151, %171, %172, %173 in 0 : vector<8x48xf32>, vector<8x48xf32>, vector<8x48xf32>, vector<8x48xf32>, vector<8x48xf32> -> vector<40x48xf32>
    %cst_83 = arith.constant dense<0.000000e+00> : vector<40x48xf32>
    %175 = tpu.matmul %169, %174, %cst_83 {dimension_numbers = #tpu.dot_dimension_numbers<[1], [0], [0], [1], [0, 0, 1, 1], [], []>} : vector<40x40xf32>, vector<40x48xf32>, vector<40x48xf32> -> vector<40x48xf32>
    %cst_84 = arith.constant dense<0.000000e+00> : vector<40x6xf32>
    %176 = tpu.matmul %175, %170, %cst_84 {dimension_numbers = #tpu.dot_dimension_numbers<[1], [0], [0], [1], [0, 0, 1, 1], [], []>} : vector<40x48xf32>, vector<48x6xf32>, vector<40x6xf32> -> vector<40x6xf32>
    %177 = vector.extract_strided_slice %176 {offsets = [0, 0], sizes = [1, 6], strides = [1, 1]} : vector<40x6xf32> to vector<1x6xf32>
    %178 = vector.extract_strided_slice %176 {offsets = [8, 0], sizes = [1, 6], strides = [1, 1]} : vector<40x6xf32> to vector<1x6xf32>
    %179 = vector.extract_strided_slice %176 {offsets = [16, 0], sizes = [1, 6], strides = [1, 1]} : vector<40x6xf32> to vector<1x6xf32>
    %180 = vector.extract_strided_slice %176 {offsets = [24, 0], sizes = [1, 6], strides = [1, 1]} : vector<40x6xf32> to vector<1x6xf32>
    %181 = vector.extract_strided_slice %176 {offsets = [32, 0], sizes = [1, 6], strides = [1, 1]} : vector<40x6xf32> to vector<1x6xf32>
    %182 = arith.mulf %177, %177 : vector<1x6xf32>
    %183 = arith.mulf %178, %178 : vector<1x6xf32>
    %184 = arith.mulf %177, %178 : vector<1x6xf32>
    %185 = arith.subf %179, %182 : vector<1x6xf32>
    %186 = arith.subf %180, %183 : vector<1x6xf32>
    %187 = arith.subf %181, %184 : vector<1x6xf32>
    %cst_85 = arith.constant 2.000000e+00 : f32
    %188 = vector.broadcast %cst_85 : f32 to vector<1x6xf32>
    %189 = arith.mulf %188, %187 : vector<1x6xf32>
    %190 = vector.broadcast %168 : f32 to vector<1x6xf32>
    %191 = arith.addf %189, %190 : vector<1x6xf32>
    %192 = arith.addf %185, %186 : vector<1x6xf32>
    %193 = vector.broadcast %168 : f32 to vector<1x6xf32>
    %194 = arith.addf %192, %193 : vector<1x6xf32>
    %195 = tpu.reciprocal %194 {approx = true} : vector<1x6xf32> -> vector<1x6xf32>
    %196 = arith.mulf %191, %195 : vector<1x6xf32>
    %cst_86 = arith.constant 2.000000e+00 : f32
    %197 = vector.broadcast %cst_86 : f32 to vector<1x6xf32>
    %198 = arith.mulf %197, %184 : vector<1x6xf32>
    %199 = vector.broadcast %166 : f32 to vector<1x6xf32>
    %200 = arith.addf %198, %199 : vector<1x6xf32>
    %201 = arith.addf %182, %183 : vector<1x6xf32>
    %202 = vector.broadcast %166 : f32 to vector<1x6xf32>
    %203 = arith.addf %201, %202 : vector<1x6xf32>
    %204 = tpu.reciprocal %203 {approx = true} : vector<1x6xf32> -> vector<1x6xf32>
    %205 = arith.mulf %200, %204 : vector<1x6xf32>
    %206 = arith.mulf %196, %205 : vector<1x6xf32>
    %207 = vector.shape_cast %206 : vector<1x6xf32> to vector<1x1x6xf32>
    %cst_87 = arith.constant dense<0.000000e+00> : vector<1xf32>
    %208 = vector.multi_reduction <add>, %207, %cst_87 [1, 2] : vector<1x1x6xf32> to vector<1xf32>
    %209 = vector.shape_cast %208 : vector<1xf32> to vector<1x1x1xf32>
    %210 = vector.extract %209[0, 0, 0] : f32 from vector<1x1x1xf32>
    %cst_88 = arith.constant 0.166666672 : f32
    %211 = arith.mulf %210, %cst_88 : f32
    %212 = vector.shape_cast %196 : vector<1x6xf32> to vector<1x1x6xf32>
    %cst_89 = arith.constant dense<0.000000e+00> : vector<1xf32>
    %213 = vector.multi_reduction <add>, %212, %cst_89 [1, 2] : vector<1x1x6xf32> to vector<1xf32>
    %214 = vector.shape_cast %213 : vector<1xf32> to vector<1x1x1xf32>
    %215 = vector.extract %214[0, 0, 0] : f32 from vector<1x1x1xf32>
    %cst_90 = arith.constant 0.166666672 : f32
    %216 = arith.mulf %215, %cst_90 : f32
    %217 = vector.broadcast %211 : f32 to vector<1x128xf32>
    %c2 = arith.constant 2 : index
    %c0_91 = arith.constant 0 : index
    %218 = vector.load %arg20[%c2, %c0_91] : memref<5x128xf32, #tpu.memory_space<vmem>>, vector<1x128xf32>
    tpu.vector_store %arg20[%c2, %c0_91], %217 {strides = array<i32>} : memref<5x128xf32, #tpu.memory_space<vmem>>, vector<1x128xf32>,
    %219 = vector.broadcast %216 : f32 to vector<1x128xf32>
    %c2_92 = arith.constant 2 : index
    %c0_93 = arith.constant 0 : index
    %220 = vector.load %arg21[%c2_92, %c0_93] : memref<5x128xf32, #tpu.memory_space<vmem>>, vector<1x128xf32>
    tpu.vector_store %arg21[%c2_92, %c0_93], %219 {strides = array<i32>} : memref<5x128xf32, #tpu.memory_space<vmem>>, vector<1x128xf32>,
    %c0_94 = arith.constant 0 : index
    %c0_95 = arith.constant 0 : index
    %221 = vector.load %arg14[%c0_94, %c0_95] : memref<4x8xf32, #tpu.memory_space<vmem>>, vector<4x8xf32>
    %c0_96 = arith.constant 0 : index
    %c0_97 = arith.constant 0 : index
    %222 = vector.load %arg18[%c0_96, %c0_97] : memref<48x24xf32, #tpu.memory_space<vmem>>, vector<48x24xf32>
    %cst_98 = arith.constant dense<0.000000e+00> : vector<4x48xf32>
    %223 = tpu.matmul %221, %149, %cst_98 {dimension_numbers = #tpu.dot_dimension_numbers<[1], [0], [0], [1], [0, 0, 1, 1], [], []>} : vector<4x8xf32>, vector<8x48xf32>, vector<4x48xf32> -> vector<4x48xf32>
    %cst_99 = arith.constant dense<0.000000e+00> : vector<4x24xf32>
    %224 = tpu.matmul %223, %222, %cst_99 {dimension_numbers = #tpu.dot_dimension_numbers<[1], [0], [0], [1], [0, 0, 1, 1], [], []>} : vector<4x48xf32>, vector<48x24xf32>, vector<4x24xf32> -> vector<4x24xf32>
    %cst_100 = arith.constant dense<0.000000e+00> : vector<4x48xf32>
    %225 = tpu.matmul %221, %151, %cst_100 {dimension_numbers = #tpu.dot_dimension_numbers<[1], [0], [0], [1], [0, 0, 1, 1], [], []>} : vector<4x8xf32>, vector<8x48xf32>, vector<4x48xf32> -> vector<4x48xf32>
    %cst_101 = arith.constant dense<0.000000e+00> : vector<4x24xf32>
    %226 = tpu.matmul %225, %222, %cst_101 {dimension_numbers = #tpu.dot_dimension_numbers<[1], [0], [0], [1], [0, 0, 1, 1], [], []>} : vector<4x48xf32>, vector<48x24xf32>, vector<4x24xf32> -> vector<4x24xf32>
    %227 = vector.shape_cast %224 : vector<4x24xf32> to vector<1x4x24xf32>
    %cst_102 = arith.constant dense<0xFF800000> : vector<1xf32>
    %228 = vector.multi_reduction <maximumf>, %227, %cst_102 [1, 2] : vector<1x4x24xf32> to vector<1xf32>
    %229 = vector.shape_cast %228 : vector<1xf32> to vector<1x1x1xf32>
    %230 = vector.extract %229[0, 0, 0] : f32 from vector<1x1x1xf32>
    %231 = vector.shape_cast %224 : vector<4x24xf32> to vector<1x4x24xf32>
    %cst_103 = arith.constant dense<0x7F800000> : vector<1xf32>
    %232 = vector.multi_reduction <minimumf>, %231, %cst_103 [1, 2] : vector<1x4x24xf32> to vector<1xf32>
    %233 = vector.shape_cast %232 : vector<1xf32> to vector<1x1x1xf32>
    %234 = vector.extract %233[0, 0, 0] : f32 from vector<1x1x1xf32>
    %cst_104 = arith.constant 1.280000e+02 : f32
    %235 = arith.cmpf ogt, %230, %cst_104 : f32
    %cst_105 = arith.constant 2.550000e+02 : f32
    %cst_106 = arith.constant 1.000000e+00 : f32
    %236 = arith.select %235, %cst_105, %cst_106 : f32
    %cst_107 = arith.constant -5.000000e-01 : f32
    %237 = arith.cmpf olt, %234, %cst_107 : f32
    %cst_108 = arith.constant -1.000000e+00 : f32
    %cst_109 = arith.constant 0.000000e+00 : f32
    %238 = arith.select %237, %cst_108, %cst_109 : f32
    %239 = arith.subf %236, %238 : f32
    %cst_110 = arith.constant 0.00999999977 : f32
    %240 = arith.mulf %cst_110, %239 : f32
    %241 = arith.mulf %240, %240 : f32
    %cst_111 = arith.constant 3.000000e-02 : f32
    %242 = arith.mulf %cst_111, %239 : f32
    %243 = arith.mulf %242, %242 : f32
    %c0_112 = arith.constant 0 : index
    %c0_113 = arith.constant 0 : index
    %244 = vector.load %arg5[%c0_112, %c0_113] : memref<1x4xf32, #tpu.memory_space<vmem>>, vector<1x4xf32>
    %c0_114 = arith.constant 0 : index
    %c0_115 = arith.constant 0 : index
    %245 = vector.load %arg10[%c0_114, %c0_115] : memref<24x6xf32, #tpu.memory_space<vmem>>, vector<24x6xf32>
    %cst_116 = arith.constant dense<0.000000e+00> : vector<1x24xf32>
    %246 = tpu.matmul %244, %224, %cst_116 {dimension_numbers = #tpu.dot_dimension_numbers<[1], [0], [0], [1], [0, 0, 1, 1], [], []>} : vector<1x4xf32>, vector<4x24xf32>, vector<1x24xf32> -> vector<1x24xf32>
    %cst_117 = arith.constant dense<0.000000e+00> : vector<1x6xf32>
    %247 = tpu.matmul %246, %245, %cst_117 {dimension_numbers = #tpu.dot_dimension_numbers<[1], [0], [0], [1], [0, 0, 1, 1], [], []>} : vector<1x24xf32>, vector<24x6xf32>, vector<1x6xf32> -> vector<1x6xf32>
    %cst_118 = arith.constant dense<0.000000e+00> : vector<1x24xf32>
    %248 = tpu.matmul %244, %226, %cst_118 {dimension_numbers = #tpu.dot_dimension_numbers<[1], [0], [0], [1], [0, 0, 1, 1], [], []>} : vector<1x4xf32>, vector<4x24xf32>, vector<1x24xf32> -> vector<1x24xf32>
    %cst_119 = arith.constant dense<0.000000e+00> : vector<1x6xf32>
    %249 = tpu.matmul %248, %245, %cst_119 {dimension_numbers = #tpu.dot_dimension_numbers<[1], [0], [0], [1], [0, 0, 1, 1], [], []>} : vector<1x24xf32>, vector<24x6xf32>, vector<1x6xf32> -> vector<1x6xf32>
    %250 = arith.mulf %224, %224 : vector<4x24xf32>
    %cst_120 = arith.constant dense<0.000000e+00> : vector<1x24xf32>
    %251 = tpu.matmul %244, %250, %cst_120 {dimension_numbers = #tpu.dot_dimension_numbers<[1], [0], [0], [1], [0, 0, 1, 1], [], []>} : vector<1x4xf32>, vector<4x24xf32>, vector<1x24xf32> -> vector<1x24xf32>
    %cst_121 = arith.constant dense<0.000000e+00> : vector<1x6xf32>
    %252 = tpu.matmul %251, %245, %cst_121 {dimension_numbers = #tpu.dot_dimension_numbers<[1], [0], [0], [1], [0, 0, 1, 1], [], []>} : vector<1x24xf32>, vector<24x6xf32>, vector<1x6xf32> -> vector<1x6xf32>
    %253 = arith.mulf %226, %226 : vector<4x24xf32>
    %cst_122 = arith.constant dense<0.000000e+00> : vector<1x24xf32>
    %254 = tpu.matmul %244, %253, %cst_122 {dimension_numbers = #tpu.dot_dimension_numbers<[1], [0], [0], [1], [0, 0, 1, 1], [], []>} : vector<1x4xf32>, vector<4x24xf32>, vector<1x24xf32> -> vector<1x24xf32>
    %cst_123 = arith.constant dense<0.000000e+00> : vector<1x6xf32>
    %255 = tpu.matmul %254, %245, %cst_123 {dimension_numbers = #tpu.dot_dimension_numbers<[1], [0], [0], [1], [0, 0, 1, 1], [], []>} : vector<1x24xf32>, vector<24x6xf32>, vector<1x6xf32> -> vector<1x6xf32>
    %256 = arith.mulf %224, %226 : vector<4x24xf32>
    %cst_124 = arith.constant dense<0.000000e+00> : vector<1x24xf32>
    %257 = tpu.matmul %244, %256, %cst_124 {dimension_numbers = #tpu.dot_dimension_numbers<[1], [0], [0], [1], [0, 0, 1, 1], [], []>} : vector<1x4xf32>, vector<4x24xf32>, vector<1x24xf32> -> vector<1x24xf32>
    %cst_125 = arith.constant dense<0.000000e+00> : vector<1x6xf32>
    %258 = tpu.matmul %257, %245, %cst_125 {dimension_numbers = #tpu.dot_dimension_numbers<[1], [0], [0], [1], [0, 0, 1, 1], [], []>} : vector<1x24xf32>, vector<24x6xf32>, vector<1x6xf32> -> vector<1x6xf32>
    %259 = arith.mulf %247, %247 : vector<1x6xf32>
    %260 = arith.mulf %249, %249 : vector<1x6xf32>
    %261 = arith.mulf %247, %249 : vector<1x6xf32>
    %262 = arith.subf %252, %259 : vector<1x6xf32>
    %263 = arith.subf %255, %260 : vector<1x6xf32>
    %264 = arith.subf %258, %261 : vector<1x6xf32>
    %cst_126 = arith.constant 2.000000e+00 : f32
    %265 = vector.broadcast %cst_126 : f32 to vector<1x6xf32>
    %266 = arith.mulf %265, %264 : vector<1x6xf32>
    %267 = vector.broadcast %243 : f32 to vector<1x6xf32>
    %268 = arith.addf %266, %267 : vector<1x6xf32>
    %269 = arith.addf %262, %263 : vector<1x6xf32>
    %270 = vector.broadcast %243 : f32 to vector<1x6xf32>
    %271 = arith.addf %269, %270 : vector<1x6xf32>
    %272 = tpu.reciprocal %271 {approx = true} : vector<1x6xf32> -> vector<1x6xf32>
    %273 = arith.mulf %268, %272 : vector<1x6xf32>
    %cst_127 = arith.constant 2.000000e+00 : f32
    %274 = vector.broadcast %cst_127 : f32 to vector<1x6xf32>
    %275 = arith.mulf %274, %261 : vector<1x6xf32>
    %276 = vector.broadcast %241 : f32 to vector<1x6xf32>
    %277 = arith.addf %275, %276 : vector<1x6xf32>
    %278 = arith.addf %259, %260 : vector<1x6xf32>
    %279 = vector.broadcast %241 : f32 to vector<1x6xf32>
    %280 = arith.addf %278, %279 : vector<1x6xf32>
    %281 = tpu.reciprocal %280 {approx = true} : vector<1x6xf32> -> vector<1x6xf32>
    %282 = arith.mulf %277, %281 : vector<1x6xf32>
    %283 = arith.mulf %273, %282 : vector<1x6xf32>
    %284 = vector.shape_cast %283 : vector<1x6xf32> to vector<1x1x6xf32>
    %cst_128 = arith.constant dense<0.000000e+00> : vector<1xf32>
    %285 = vector.multi_reduction <add>, %284, %cst_128 [1, 2] : vector<1x1x6xf32> to vector<1xf32>
    %286 = vector.shape_cast %285 : vector<1xf32> to vector<1x1x1xf32>
    %287 = vector.extract %286[0, 0, 0] : f32 from vector<1x1x1xf32>
    %cst_129 = arith.constant 0.166666672 : f32
    %288 = arith.mulf %287, %cst_129 : f32
    %289 = vector.shape_cast %273 : vector<1x6xf32> to vector<1x1x6xf32>
    %cst_130 = arith.constant dense<0.000000e+00> : vector<1xf32>
    %290 = vector.multi_reduction <add>, %289, %cst_130 [1, 2] : vector<1x1x6xf32> to vector<1xf32>
    %291 = vector.shape_cast %290 : vector<1xf32> to vector<1x1x1xf32>
    %292 = vector.extract %291[0, 0, 0] : f32 from vector<1x1x1xf32>
    %cst_131 = arith.constant 0.166666672 : f32
    %293 = arith.mulf %292, %cst_131 : f32
    %294 = vector.broadcast %288 : f32 to vector<1x128xf32>
    %c3 = arith.constant 3 : index
    %c0_132 = arith.constant 0 : index
    %295 = vector.load %arg20[%c3, %c0_132] : memref<5x128xf32, #tpu.memory_space<vmem>>, vector<1x128xf32>
    tpu.vector_store %arg20[%c3, %c0_132], %294 {strides = array<i32>} : memref<5x128xf32, #tpu.memory_space<vmem>>, vector<1x128xf32>,
    %296 = vector.broadcast %293 : f32 to vector<1x128xf32>
    %c3_133 = arith.constant 3 : index
    %c0_134 = arith.constant 0 : index
    %297 = vector.load %arg21[%c3_133, %c0_134] : memref<5x128xf32, #tpu.memory_space<vmem>>, vector<1x128xf32>
    tpu.vector_store %arg21[%c3_133, %c0_134], %296 {strides = array<i32>} : memref<5x128xf32, #tpu.memory_space<vmem>>, vector<1x128xf32>,
    %c0_135 = arith.constant 0 : index
    %c0_136 = arith.constant 0 : index
    %298 = vector.load %arg15[%c0_135, %c0_136] : memref<2x4xf32, #tpu.memory_space<vmem>>, vector<2x4xf32>
    %c0_137 = arith.constant 0 : index
    %c0_138 = arith.constant 0 : index
    %299 = vector.load %arg19[%c0_137, %c0_138] : memref<24x12xf32, #tpu.memory_space<vmem>>, vector<24x12xf32>
    %cst_139 = arith.constant dense<0.000000e+00> : vector<2x24xf32>
    %300 = tpu.matmul %298, %224, %cst_139 {dimension_numbers = #tpu.dot_dimension_numbers<[1], [0], [0], [1], [0, 0, 1, 1], [], []>} : vector<2x4xf32>, vector<4x24xf32>, vector<2x24xf32> -> vector<2x24xf32>
    %cst_140 = arith.constant dense<0.000000e+00> : vector<2x12xf32>
    %301 = tpu.matmul %300, %299, %cst_140 {dimension_numbers = #tpu.dot_dimension_numbers<[1], [0], [0], [1], [0, 0, 1, 1], [], []>} : vector<2x24xf32>, vector<24x12xf32>, vector<2x12xf32> -> vector<2x12xf32>
    %cst_141 = arith.constant dense<0.000000e+00> : vector<2x24xf32>
    %302 = tpu.matmul %298, %226, %cst_141 {dimension_numbers = #tpu.dot_dimension_numbers<[1], [0], [0], [1], [0, 0, 1, 1], [], []>} : vector<2x4xf32>, vector<4x24xf32>, vector<2x24xf32> -> vector<2x24xf32>
    %cst_142 = arith.constant dense<0.000000e+00> : vector<2x12xf32>
    %303 = tpu.matmul %302, %299, %cst_142 {dimension_numbers = #tpu.dot_dimension_numbers<[1], [0], [0], [1], [0, 0, 1, 1], [], []>} : vector<2x24xf32>, vector<24x12xf32>, vector<2x12xf32> -> vector<2x12xf32>
    %304 = vector.shape_cast %301 : vector<2x12xf32> to vector<1x2x12xf32>
    %cst_143 = arith.constant dense<0xFF800000> : vector<1xf32>
    %305 = vector.multi_reduction <maximumf>, %304, %cst_143 [1, 2] : vector<1x2x12xf32> to vector<1xf32>
    %306 = vector.shape_cast %305 : vector<1xf32> to vector<1x1x1xf32>
    %307 = vector.extract %306[0, 0, 0] : f32 from vector<1x1x1xf32>
    %308 = vector.shape_cast %301 : vector<2x12xf32> to vector<1x2x12xf32>
    %cst_144 = arith.constant dense<0x7F800000> : vector<1xf32>
    %309 = vector.multi_reduction <minimumf>, %308, %cst_144 [1, 2] : vector<1x2x12xf32> to vector<1xf32>
    %310 = vector.shape_cast %309 : vector<1xf32> to vector<1x1x1xf32>
    %311 = vector.extract %310[0, 0, 0] : f32 from vector<1x1x1xf32>
    %cst_145 = arith.constant 1.280000e+02 : f32
    %312 = arith.cmpf ogt, %307, %cst_145 : f32
    %cst_146 = arith.constant 2.550000e+02 : f32
    %cst_147 = arith.constant 1.000000e+00 : f32
    %313 = arith.select %312, %cst_146, %cst_147 : f32
    %cst_148 = arith.constant -5.000000e-01 : f32
    %314 = arith.cmpf olt, %311, %cst_148 : f32
    %cst_149 = arith.constant -1.000000e+00 : f32
    %cst_150 = arith.constant 0.000000e+00 : f32
    %315 = arith.select %314, %cst_149, %cst_150 : f32
    %316 = arith.subf %313, %315 : f32
    %cst_151 = arith.constant 0.00999999977 : f32
    %317 = arith.mulf %cst_151, %316 : f32
    %318 = arith.mulf %317, %317 : f32
    %cst_152 = arith.constant 3.000000e-02 : f32
    %319 = arith.mulf %cst_152, %316 : f32
    %320 = arith.mulf %319, %319 : f32
    %c0_153 = arith.constant 0 : index
    %c0_154 = arith.constant 0 : index
    %321 = vector.load %arg6[%c0_153, %c0_154] : memref<1x2xf32, #tpu.memory_space<vmem>>, vector<1x2xf32>
    %c0_155 = arith.constant 0 : index
    %c0_156 = arith.constant 0 : index
    %322 = vector.load %arg11[%c0_155, %c0_156] : memref<12x6xf32, #tpu.memory_space<vmem>>, vector<12x6xf32>
    %cst_157 = arith.constant dense<0.000000e+00> : vector<1x12xf32>
    %323 = tpu.matmul %321, %301, %cst_157 {dimension_numbers = #tpu.dot_dimension_numbers<[1], [0], [0], [1], [0, 0, 1, 1], [], []>} : vector<1x2xf32>, vector<2x12xf32>, vector<1x12xf32> -> vector<1x12xf32>
    %cst_158 = arith.constant dense<0.000000e+00> : vector<1x6xf32>
    %324 = tpu.matmul %323, %322, %cst_158 {dimension_numbers = #tpu.dot_dimension_numbers<[1], [0], [0], [1], [0, 0, 1, 1], [], []>} : vector<1x12xf32>, vector<12x6xf32>, vector<1x6xf32> -> vector<1x6xf32>
    %cst_159 = arith.constant dense<0.000000e+00> : vector<1x12xf32>
    %325 = tpu.matmul %321, %303, %cst_159 {dimension_numbers = #tpu.dot_dimension_numbers<[1], [0], [0], [1], [0, 0, 1, 1], [], []>} : vector<1x2xf32>, vector<2x12xf32>, vector<1x12xf32> -> vector<1x12xf32>
    %cst_160 = arith.constant dense<0.000000e+00> : vector<1x6xf32>
    %326 = tpu.matmul %325, %322, %cst_160 {dimension_numbers = #tpu.dot_dimension_numbers<[1], [0], [0], [1], [0, 0, 1, 1], [], []>} : vector<1x12xf32>, vector<12x6xf32>, vector<1x6xf32> -> vector<1x6xf32>
    %327 = arith.mulf %301, %301 : vector<2x12xf32>
    %cst_161 = arith.constant dense<0.000000e+00> : vector<1x12xf32>
    %328 = tpu.matmul %321, %327, %cst_161 {dimension_numbers = #tpu.dot_dimension_numbers<[1], [0], [0], [1], [0, 0, 1, 1], [], []>} : vector<1x2xf32>, vector<2x12xf32>, vector<1x12xf32> -> vector<1x12xf32>
    %cst_162 = arith.constant dense<0.000000e+00> : vector<1x6xf32>
    %329 = tpu.matmul %328, %322, %cst_162 {dimension_numbers = #tpu.dot_dimension_numbers<[1], [0], [0], [1], [0, 0, 1, 1], [], []>} : vector<1x12xf32>, vector<12x6xf32>, vector<1x6xf32> -> vector<1x6xf32>
    %330 = arith.mulf %303, %303 : vector<2x12xf32>
    %cst_163 = arith.constant dense<0.000000e+00> : vector<1x12xf32>
    %331 = tpu.matmul %321, %330, %cst_163 {dimension_numbers = #tpu.dot_dimension_numbers<[1], [0], [0], [1], [0, 0, 1, 1], [], []>} : vector<1x2xf32>, vector<2x12xf32>, vector<1x12xf32> -> vector<1x12xf32>
    %cst_164 = arith.constant dense<0.000000e+00> : vector<1x6xf32>
    %332 = tpu.matmul %331, %322, %cst_164 {dimension_numbers = #tpu.dot_dimension_numbers<[1], [0], [0], [1], [0, 0, 1, 1], [], []>} : vector<1x12xf32>, vector<12x6xf32>, vector<1x6xf32> -> vector<1x6xf32>
    %333 = arith.mulf %301, %303 : vector<2x12xf32>
    %cst_165 = arith.constant dense<0.000000e+00> : vector<1x12xf32>
    %334 = tpu.matmul %321, %333, %cst_165 {dimension_numbers = #tpu.dot_dimension_numbers<[1], [0], [0], [1], [0, 0, 1, 1], [], []>} : vector<1x2xf32>, vector<2x12xf32>, vector<1x12xf32> -> vector<1x12xf32>
    %cst_166 = arith.constant dense<0.000000e+00> : vector<1x6xf32>
    %335 = tpu.matmul %334, %322, %cst_166 {dimension_numbers = #tpu.dot_dimension_numbers<[1], [0], [0], [1], [0, 0, 1, 1], [], []>} : vector<1x12xf32>, vector<12x6xf32>, vector<1x6xf32> -> vector<1x6xf32>
    %336 = arith.mulf %324, %324 : vector<1x6xf32>
    %337 = arith.mulf %326, %326 : vector<1x6xf32>
    %338 = arith.mulf %324, %326 : vector<1x6xf32>
    %339 = arith.subf %329, %336 : vector<1x6xf32>
    %340 = arith.subf %332, %337 : vector<1x6xf32>
    %341 = arith.subf %335, %338 : vector<1x6xf32>
    %cst_167 = arith.constant 2.000000e+00 : f32
    %342 = vector.broadcast %cst_167 : f32 to vector<1x6xf32>
    %343 = arith.mulf %342, %341 : vector<1x6xf32>
    %344 = vector.broadcast %320 : f32 to vector<1x6xf32>
    %345 = arith.addf %343, %344 : vector<1x6xf32>
    %346 = arith.addf %339, %340 : vector<1x6xf32>
    %347 = vector.broadcast %320 : f32 to vector<1x6xf32>
    %348 = arith.addf %346, %347 : vector<1x6xf32>
    %349 = tpu.reciprocal %348 {approx = true} : vector<1x6xf32> -> vector<1x6xf32>
    %350 = arith.mulf %345, %349 : vector<1x6xf32>
    %cst_168 = arith.constant 2.000000e+00 : f32
    %351 = vector.broadcast %cst_168 : f32 to vector<1x6xf32>
    %352 = arith.mulf %351, %338 : vector<1x6xf32>
    %353 = vector.broadcast %318 : f32 to vector<1x6xf32>
    %354 = arith.addf %352, %353 : vector<1x6xf32>
    %355 = arith.addf %336, %337 : vector<1x6xf32>
    %356 = vector.broadcast %318 : f32 to vector<1x6xf32>
    %357 = arith.addf %355, %356 : vector<1x6xf32>
    %358 = tpu.reciprocal %357 {approx = true} : vector<1x6xf32> -> vector<1x6xf32>
    %359 = arith.mulf %354, %358 : vector<1x6xf32>
    %360 = arith.mulf %350, %359 : vector<1x6xf32>
    %361 = vector.shape_cast %360 : vector<1x6xf32> to vector<1x1x6xf32>
    %cst_169 = arith.constant dense<0.000000e+00> : vector<1xf32>
    %362 = vector.multi_reduction <add>, %361, %cst_169 [1, 2] : vector<1x1x6xf32> to vector<1xf32>
    %363 = vector.shape_cast %362 : vector<1xf32> to vector<1x1x1xf32>
    %364 = vector.extract %363[0, 0, 0] : f32 from vector<1x1x1xf32>
    %cst_170 = arith.constant 0.166666672 : f32
    %365 = arith.mulf %364, %cst_170 : f32
    %366 = vector.shape_cast %350 : vector<1x6xf32> to vector<1x1x6xf32>
    %cst_171 = arith.constant dense<0.000000e+00> : vector<1xf32>
    %367 = vector.multi_reduction <add>, %366, %cst_171 [1, 2] : vector<1x1x6xf32> to vector<1xf32>
    %368 = vector.shape_cast %367 : vector<1xf32> to vector<1x1x1xf32>
    %369 = vector.extract %368[0, 0, 0] : f32 from vector<1x1x1xf32>
    %cst_172 = arith.constant 0.166666672 : f32
    %370 = arith.mulf %369, %cst_172 : f32
    %371 = vector.broadcast %365 : f32 to vector<1x128xf32>
    %c4 = arith.constant 4 : index
    %c0_173 = arith.constant 0 : index
    %372 = vector.load %arg20[%c4, %c0_173] : memref<5x128xf32, #tpu.memory_space<vmem>>, vector<1x128xf32>
    tpu.vector_store %arg20[%c4, %c0_173], %371 {strides = array<i32>} : memref<5x128xf32, #tpu.memory_space<vmem>>, vector<1x128xf32>,
    %373 = vector.broadcast %370 : f32 to vector<1x128xf32>
    %c4_174 = arith.constant 4 : index
    %c0_175 = arith.constant 0 : index
    %374 = vector.load %arg21[%c4_174, %c0_175] : memref<5x128xf32, #tpu.memory_space<vmem>>, vector<1x128xf32>
    tpu.vector_store %arg21[%c4_174, %c0_175], %373 {strides = array<i32>} : memref<5x128xf32, #tpu.memory_space<vmem>>, vector<1x128xf32>,
    return
  }
}

</mosaic_0001>

<llo_original>
// kernel: _lambda_.1
$region0: #{_lambda_.1}
  #allocation0 [shape = 'u32[]', space=smem, size = 0x4, offset = 0x4, fixed_abs, tag = 'smem constant byte address 0x4 - core index']
  #allocation1 [shape = 'u32[72,128]{1,0:T(1,128)}', space=vmem, size = 0x9000, scoped, tag = 'internal scratch']
  %s0 = inlined_call_operand.vmem [shape: f32[32,192], index: 0, kind: input, shape index: {}]
  %s1 = inlined_call_operand.vmem [shape: f32[32,192], index: 1, kind: input, shape index: {}]
  %s2 = inlined_call_operand.vmem [shape: f32[120,160], index: 2, kind: input, shape index: {}]
  %s3 = inlined_call_operand.vmem [shape: f32[40,80], index: 3, kind: input, shape index: {}]
  %s4 = inlined_call_operand.vmem [shape: f32[40,40], index: 4, kind: input, shape index: {}]
  %s5 = inlined_call_operand.vmem [shape: f32[1,4], index: 5, kind: input, shape index: {}]
  %s6 = inlined_call_operand.vmem [shape: f32[1,2], index: 6, kind: input, shape index: {}]
  %s7 = inlined_call_operand.vmem [shape: f32[192,132], index: 7, kind: input, shape index: {}]
  %s8 = inlined_call_operand.vmem [shape: f32[96,36], index: 8, kind: input, shape index: {}]
  %s9 = inlined_call_operand.vmem [shape: f32[48,6], index: 9, kind: input, shape index: {}]
  %s10 = inlined_call_operand.vmem [shape: f32[24,6], index: 10, kind: input, shape index: {}]
  %s11 = inlined_call_operand.vmem [shape: f32[12,6], index: 11, kind: input, shape index: {}]
  %s12 = inlined_call_operand.vmem [shape: f32[16,32], index: 12, kind: input, shape index: {}]
  %s13 = inlined_call_operand.vmem [shape: f32[8,16], index: 13, kind: input, shape index: {}]
  %s14 = inlined_call_operand.vmem [shape: f32[4,8], index: 14, kind: input, shape index: {}]
  %s15 = inlined_call_operand.vmem [shape: f32[2,4], index: 15, kind: input, shape index: {}]
  %s16 = inlined_call_operand.vmem [shape: f32[192,96], index: 16, kind: input, shape index: {}]
  %s17 = inlined_call_operand.vmem [shape: f32[96,48], index: 17, kind: input, shape index: {}]
  %s18 = inlined_call_operand.vmem [shape: f32[48,24], index: 18, kind: input, shape index: {}]
  %s19 = inlined_call_operand.vmem [shape: f32[24,12], index: 19, kind: input, shape index: {}]
  %s20 = inlined_call_operand.vmem [shape: f32[5,128], index: 20, kind: output, shape index: {0}]
  %s21 = inlined_call_operand.vmem [shape: f32[5,128], index: 21, kind: output, shape index: {1}]
  %22 = xla_tuple %s20, %s21
  %s23 = sld [smem:[#allocation0]]
  $region98: #{_lambda_.1} parent=0
    _
  %s25 = ssub.s32 1, %s23
  %s26 = scalar_select 0, %s25, %s23
  // Predicated region
  $region2: #{_lambda_.1} parent=0 // pred_check
    _
  $region3: #{_lambda_.1} parent=0 // pred_check_branch
    %28 = sbr.rel (0) target = $region5
  $region4: #{_lambda_.1} parent=0 // pred_region
    _
  $region5: #{_lambda_.1} parent=0 // pred_fallthru
    _
  // Predicated region
  $region6: #{_lambda_.1} parent=0 // pred_check
    _
  $region7: #{_lambda_.1} parent=0 // pred_check_branch
    %30 = sbr.rel (0) target = $region9
  $region8: #{_lambda_.1} parent=0 // pred_region
    _
  $region9: #{_lambda_.1} parent=0 // pred_fallthru
    _
  // Predicated region
  $region10: #{_lambda_.1} parent=0 // pred_check
    _
  $region11: #{_lambda_.1} parent=0 // pred_check_branch
    %32 = sbr.rel (0) target = $region13
  $region12: #{_lambda_.1} parent=0 // pred_region
    _
  $region13: #{_lambda_.1} parent=0 // pred_fallthru
    _
  // Predicated region
  $region14: #{_lambda_.1} parent=0 // pred_check
    _
  $region15: #{_lambda_.1} parent=0 // pred_check_branch
    %34 = sbr.rel (0) target = $region17
  $region16: #{_lambda_.1} parent=0 // pred_region
    _
  $region17: #{_lambda_.1} parent=0 // pred_fallthru
    _
  // Predicated region
  $region18: #{_lambda_.1} parent=0 // pred_check
    _
  $region19: #{_lambda_.1} parent=0 // pred_check_branch
    %36 = sbr.rel (0) target = $region21
  $region20: #{_lambda_.1} parent=0 // pred_region
    _
  $region21: #{_lambda_.1} parent=0 // pred_fallthru
    _
  // Predicated region
  $region22: #{_lambda_.1} parent=0 // pred_check
    _
  $region23: #{_lambda_.1} parent=0 // pred_check_branch
    %38 = sbr.rel (0) target = $region25
  $region24: #{_lambda_.1} parent=0 // pred_region
    _
  $region25: #{_lambda_.1} parent=0 // pred_fallthru
    _
  // Predicated region
  $region26: #{_lambda_.1} parent=0 // pred_check
    _
  $region27: #{_lambda_.1} parent=0 // pred_check_branch
    %40 = sbr.rel (0) target = $region29
  $region28: #{_lambda_.1} parent=0 // pred_region
    _
  $region29: #{_lambda_.1} parent=0 // pred_fallthru
    _
  // Predicated region
  $region30: #{_lambda_.1} parent=0 // pred_check
    _
  $region31: #{_lambda_.1} parent=0 // pred_check_branch
    %42 = sbr.rel (0) target = $region33
  $region32: #{_lambda_.1} parent=0 // pred_region
    _
  $region33: #{_lambda_.1} parent=0 // pred_fallthru
    _
  // Predicated region
  $region34: #{_lambda_.1} parent=0 // pred_check
    _
  $region35: #{_lambda_.1} parent=0 // pred_check_branch
    %44 = sbr.rel (0) target = $region37
  $region36: #{_lambda_.1} parent=0 // pred_region
    _
  $region37: #{_lambda_.1} parent=0 // pred_fallthru
    _
  // Predicated region
  $region38: #{_lambda_.1} parent=0 // pred_check
    _
  $region39: #{_lambda_.1} parent=0 // pred_check_branch
    %46 = sbr.rel (0) target = $region41
  $region40: #{_lambda_.1} parent=0 // pred_region
    _
  $region41: #{_lambda_.1} parent=0 // pred_fallthru
    _
  // Predicated region
  $region42: #{_lambda_.1} parent=0 // pred_check
    _
  $region43: #{_lambda_.1} parent=0 // pred_check_branch
    %48 = sbr.rel (0) target = $region45
  $region44: #{_lambda_.1} parent=0 // pred_region
    _
  $region45: #{_lambda_.1} parent=0 // pred_fallthru
    _
  // Predicated region
  $region46: #{_lambda_.1} parent=0 // pred_check
    _
  $region47: #{_lambda_.1} parent=0 // pred_check_branch
    %50 = sbr.rel (0) target = $region49
  $region48: #{_lambda_.1} parent=0 // pred_region
    _
  $region49: #{_lambda_.1} parent=0 // pred_fallthru
    _
  // Predicated region
  $region50: #{_lambda_.1} parent=0 // pred_check
    _
  $region51: #{_lambda_.1} parent=0 // pred_check_branch
    %52 = sbr.rel (0) target = $region53
  $region52: #{_lambda_.1} parent=0 // pred_region
    _
  $region53: #{_lambda_.1} parent=0 // pred_fallthru
    _
  // Predicated region
  $region54: #{_lambda_.1} parent=0 // pred_check
    _
  $region55: #{_lambda_.1} parent=0 // pred_check_branch
    %54 = sbr.rel (0) target = $region57
  $region56: #{_lambda_.1} parent=0 // pred_region
    _
  $region57: #{_lambda_.1} parent=0 // pred_fallthru
    _
  // Predicated region
  $region58: #{_lambda_.1} parent=0 // pred_check
    _
  $region59: #{_lambda_.1} parent=0 // pred_check_branch
    %56 = sbr.rel (0) target = $region61
  $region60: #{_lambda_.1} parent=0 // pred_region
    _
  $region61: #{_lambda_.1} parent=0 // pred_fallthru
    _
  // Predicated region
  $region62: #{_lambda_.1} parent=0 // pred_check
    _
  $region63: #{_lambda_.1} parent=0 // pred_check_branch
    %58 = sbr.rel (0) target = $region65
  $region64: #{_lambda_.1} parent=0 // pred_region
    _
  $region65: #{_lambda_.1} parent=0 // pred_fallthru
    _
  // Predicated region
  $region66: #{_lambda_.1} parent=0 // pred_check
    _
  $region67: #{_lambda_.1} parent=0 // pred_check_branch
    %60 = sbr.rel (0) target = $region69
  $region68: #{_lambda_.1} parent=0 // pred_region
    _
  $region69: #{_lambda_.1} parent=0 // pred_fallthru
    _
  // Predicated region
  $region70: #{_lambda_.1} parent=0 // pred_check
    _
  $region71: #{_lambda_.1} parent=0 // pred_check_branch
    %62 = sbr.rel (0) target = $region73
  $region72: #{_lambda_.1} parent=0 // pred_region
    _
  $region73: #{_lambda_.1} parent=0 // pred_fallthru
    _
  // Predicated region
  $region74: #{_lambda_.1} parent=0 // pred_check
    _
  $region75: #{_lambda_.1} parent=0 // pred_check_branch
    %64 = sbr.rel (0) target = $region77
  $region76: #{_lambda_.1} parent=0 // pred_region
    _
  $region77: #{_lambda_.1} parent=0 // pred_fallthru
    _
  // Predicated region
  $region78: #{_lambda_.1} parent=0 // pred_check
    _
  $region79: #{_lambda_.1} parent=0 // pred_check_branch
    %66 = sbr.rel (0) target = $region81
  $region80: #{_lambda_.1} parent=0 // pred_region
    _
  $region81: #{_lambda_.1} parent=0 // pred_fallthru
    _
  %v67 = vld [vmem:[%s0] sm:$0xff]
  %v68 = vld [vmem:[%s0 + $0x8] sm:$0xff]
  %v69 = vld [vmem:[%s0 + $0x10] sm:$0xff]
  %v70 = vld [vmem:[%s0 + $0x18] sm:$0xff]
  %v71 = vld [vmem:[%s0 + $0x20] sm:$0xff]
  %v72 = vld [vmem:[%s0 + $0x28] sm:$0xff]
  %v73 = vld [vmem:[%s0 + $0x30] sm:$0xff]
  %v74 = vld [vmem:[%s0 + $0x38] sm:$0xff]
  %v75 = vld [vmem:[%s1] sm:$0xff]
  %v76 = vld [vmem:[%s1 + $0x8] sm:$0xff]
  %v77 = vld [vmem:[%s1 + $0x10] sm:$0xff]
  %v78 = vld [vmem:[%s1 + $0x18] sm:$0xff]
  %v79 = vld [vmem:[%s1 + $0x20] sm:$0xff]
  %v80 = vld [vmem:[%s1 + $0x28] sm:$0xff]
  %v81 = vld [vmem:[%s1 + $0x30] sm:$0xff]
  %v82 = vld [vmem:[%s1 + $0x38] sm:$0xff]
  %vm83 = vcmask 523264
  %v84 = vsel %vm83, %v68, -inf
  %v85 = vsel %vm83, %v70, -inf
  %v86 = vmax.f32 %v67, %v71
  %v87 = vsel %vm83, %v72, -inf
  %v88 = vmax.f32 %v84, %v87
  %v89 = vmax.f32 %v69, %v73
  %v90 = vsel %vm83, %v74, -inf
  %v91 = vmax.f32 %v85, %v90
  %v92 = vmax.f32 %v86, %v88
  %v93 = vmax.f32 %v89, %v91
  %v94 = vmax.f32 %v92, %v93
  %95 = vmax.xlane.f32.xlu0 %v94
  %v96 = vpop.xlane.xlu0 %95
  %v97 = vrot.slane %v96, 4
  %v98 = vmax.f32 %v96, %v97
  %v99 = vrot.slane %v98, 2
  %v100 = vmax.f32 %v98, %v99
  %v101 = vrot.slane %v100, 1
  %v102 = vmax.f32 %v100, %v101
  %s103 = vtos %v102
  %v104 = vsel %vm83, %v68, inf
  %v105 = vsel %vm83, %v70, inf
  %v106 = vmin.f32 %v67, %v71
  %v107 = vsel %vm83, %v72, inf
  %v108 = vmin.f32 %v104, %v107
  %v109 = vmin.f32 %v69, %v73
  %v110 = vsel %vm83, %v74, inf
  %v111 = vmin.f32 %v105, %v110
  %v112 = vmin.f32 %v106, %v108
  %v113 = vmin.f32 %v109, %v111
  %v114 = vmin.f32 %v112, %v113
  %115 = vmin.xlane.f32.xlu0 %v114
  %v116 = vpop.xlane.xlu0 %115
  %v117 = vrot.slane %v116, 4
  %v118 = vmin.f32 %v116, %v117
  %v119 = vrot.slane %v118, 2
  %v120 = vmin.f32 %v118, %v119
  %v121 = vrot.slane %v120, 1
  %v122 = vmin.f32 %v120, %v121
  %s123 = vtos %v122
  %p124 = scmp.gt.f32.partialorder %s103, 128.0
  %s125 = scalar_select %p124, 255.0, 1.0
  %p126 = scmp.lt.f32.partialorder %s123, -0.5
  %s127 = scalar_select %p126, -1.0, 0.0
  %s128 = ssub.f32 %s125, %s127
  %s129 = smul.f32 %s128, 0.01
  %s130 = smul.f32 %s129, %s129
  %s131 = smul.f32 %s128, 0.03
  %s132 = smul.f32 %s131, %s131
  %v133 = vld [vmem:[%s2] sm:$0xff]
  %v134 = vld [vmem:[%s2 + $0x8] sm:$0xff]
  %v135 = vld [vmem:[%s2 + $0x10] sm:$0xff]
  %v136 = vld [vmem:[%s2 + $0x18] sm:$0xff]
  %v137 = vld [vmem:[%s2 + $0x20] sm:$0xff]
  %v138 = vld [vmem:[%s2 + $0x28] sm:$0xff]
  %v139 = vld [vmem:[%s2 + $0x30] sm:$0xff]
  %v140 = vld [vmem:[%s2 + $0x38] sm:$0xff]
  %v141 = vld [vmem:[%s2 + $0x40] sm:$0xff]
  %v142 = vld [vmem:[%s2 + $0x48] sm:$0xff]
  %v143 = vld [vmem:[%s2 + $0x50] sm:$0xff]
  %v144 = vld [vmem:[%s2 + $0x58] sm:$0xff]
  %v145 = vld [vmem:[%s2 + $0x60] sm:$0xff]
  %v146 = vld [vmem:[%s2 + $0x68] sm:$0xff]
  %v147 = vld [vmem:[%s2 + $0x70] sm:$0xff]
  %v148 = vld [vmem:[%s2 + $0x78] sm:$0xff]
  %v149 = vld [vmem:[%s2 + $0x80] sm:$0xff]
  %v150 = vld [vmem:[%s2 + $0x88] sm:$0xff]
  %v151 = vld [vmem:[%s2 + $0x90] sm:$0xff]
  %v152 = vld [vmem:[%s2 + $0x98] sm:$0xff]
  %v153 = vld [vmem:[%s2 + $0xa0] sm:$0xff]
  %v154 = vld [vmem:[%s2 + $0xa8] sm:$0xff]
  %v155 = vld [vmem:[%s2 + $0xb0] sm:$0xff]
  %v156 = vld [vmem:[%s2 + $0xb8] sm:$0xff]
  %v157 = vld [vmem:[%s2 + $0xc0] sm:$0xff]
  %v158 = vld [vmem:[%s2 + $0xc8] sm:$0xff]
  %v159 = vld [vmem:[%s2 + $0xd0] sm:$0xff]
  %v160 = vld [vmem:[%s2 + $0xd8] sm:$0xff]
  %v161 = vld [vmem:[%s2 + $0xe0] sm:$0xff]
  %v162 = vld [vmem:[%s2 + $0xe8] sm:$0xff]
  %v163 = vld [vmem:[%s7] sm:$0xff]
  %v164 = vld [vmem:[%s7 + $0x8] sm:$0xff]
  %v165 = vld [vmem:[%s7 + $0x10] sm:$0xff]
  %v166 = vld [vmem:[%s7 + $0x18] sm:$0xff]
  %v167 = vld [vmem:[%s7 + $0x20] sm:$0xff]
  %v168 = vld [vmem:[%s7 + $0x28] sm:$0xff]
  %v169 = vld [vmem:[%s7 + $0x30] sm:$0xff]
  %v170 = vld [vmem:[%s7 + $0x38] sm:$0xff]
  %v171 = vld [vmem:[%s7 + $0x40] sm:$0xff]
  %v172 = vld [vmem:[%s7 + $0x48] sm:$0xff]
  %v173 = vld [vmem:[%s7 + $0x50] sm:$0xff]
  %v174 = vld [vmem:[%s7 + $0x58] sm:$0xff]
  %v175 = vld [vmem:[%s7 + $0x60] sm:$0xff]
  %v176 = vld [vmem:[%s7 + $0x68] sm:$0xff]
  %v177 = vld [vmem:[%s7 + $0x70] sm:$0xff]
  %v178 = vld [vmem:[%s7 + $0x78] sm:$0xff]
  %v179 = vld [vmem:[%s7 + $0x80] sm:$0xff]
  %v180 = vld [vmem:[%s7 + $0x88] sm:$0xff]
  %v181 = vld [vmem:[%s7 + $0x90] sm:$0xff]
  %v182 = vld [vmem:[%s7 + $0x98] sm:$0xff]
  %v183 = vld [vmem:[%s7 + $0xa0] sm:$0xff]
  %v184 = vld [vmem:[%s7 + $0xa8] sm:$0xff]
  %v185 = vld [vmem:[%s7 + $0xb0] sm:$0xff]
  %v186 = vld [vmem:[%s7 + $0xb8] sm:$0xff]
  %v187 = vld [vmem:[%s7 + $0xc0] sm:$0xff]
  %v188 = vld [vmem:[%s7 + $0xc8] sm:$0xff]
  %v189 = vld [vmem:[%s7 + $0xd0] sm:$0xff]
  %v190 = vld [vmem:[%s7 + $0xd8] sm:$0xff]
  %v191 = vld [vmem:[%s7 + $0xe0] sm:$0xff]
  %v192 = vld [vmem:[%s7 + $0xe8] sm:$0xff]
  %v193 = vld [vmem:[%s7 + $0xf0] sm:$0xff]
  %v194 = vld [vmem:[%s7 + $0xf8] sm:$0xff]
  %v195 = vld [vmem:[%s7 + $0x100] sm:$0xff]
  %v196 = vld [vmem:[%s7 + $0x108] sm:$0xff]
  %v197 = vld [vmem:[%s7 + $0x110] sm:$0xff]
  %v198 = vld [vmem:[%s7 + $0x118] sm:$0xff]
  %v199 = vld [vmem:[%s7 + $0x120] sm:$0xff]
  %v200 = vld [vmem:[%s7 + $0x128] sm:$0xff]
  %v201 = vld [vmem:[%s7 + $0x130] sm:$0xff]
  %v202 = vld [vmem:[%s7 + $0x138] sm:$0xff]
  %v203 = vld [vmem:[%s7 + $0x140] sm:$0xff]
  %v204 = vld [vmem:[%s7 + $0x148] sm:$0xff]
  %v205 = vld [vmem:[%s7 + $0x150] sm:$0xff]
  %v206 = vld [vmem:[%s7 + $0x158] sm:$0xff]
  %v207 = vld [vmem:[%s7 + $0x160] sm:$0xff]
  %v208 = vld [vmem:[%s7 + $0x168] sm:$0xff]
  %v209 = vld [vmem:[%s7 + $0x170] sm:$0xff]
  %v210 = vld [vmem:[%s7 + $0x178] sm:$0xff]
  %v211 = vmul.f32 %v67, %v67
  %v212 = vmul.f32 %v68, %v68
  %v213 = vmul.f32 %v69, %v69
  %v214 = vmul.f32 %v70, %v70
  %v215 = vmul.f32 %v71, %v71
  %v216 = vmul.f32 %v72, %v72
  %v217 = vmul.f32 %v73, %v73
  %v218 = vmul.f32 %v74, %v74
  %v219 = vmul.f32 %v75, %v75
  %v220 = vmul.f32 %v76, %v76
  %v221 = vmul.f32 %v77, %v77
  %v222 = vmul.f32 %v78, %v78
  %v223 = vmul.f32 %v79, %v79
  %v224 = vmul.f32 %v80, %v80
  %v225 = vmul.f32 %v81, %v81
  %v226 = vmul.f32 %v82, %v82
  %v227 = vmul.f32 %v67, %v75
  %v228 = vmul.f32 %v68, %v76
  %v229 = vmul.f32 %v69, %v77
  %v230 = vmul.f32 %v70, %v78
  %v231 = vmul.f32 %v71, %v79
  %v232 = vmul.f32 %v72, %v80
  %v233 = vmul.f32 %v73, %v81
  %v234 = vmul.f32 %v74, %v82
  %vm235 = vcmask 261120
  %v237 = vsel %vm235, %v134, 0
  %v240 = vsel %vm235, %v136, 0
  %v243 = vsel %vm235, %v138, 0
  %v246 = vsel %vm235, %v140, 0
  %v249 = vsel %vm235, %v142, 0
  %v252 = vsel %vm235, %v144, 0
  %v255 = vsel %vm235, %v146, 0
  %v258 = vsel %vm235, %v148, 0
  %v261 = vsel %vm235, %v150, 0
  %v264 = vsel %vm235, %v152, 0
  %v267 = vsel %vm235, %v154, 0
  %v270 = vsel %vm235, %v156, 0
  %v273 = vsel %vm235, %v158, 0
  %v276 = vsel %vm235, %v160, 0
  %v279 = vsel %vm235, %v162, 0
  %281 = vmatpush.msra.mxu0 %v225
  %282 = vmatpush.msra.mxu0 %v223
  %283 = vmatpush.msra.mxu0 %v221
  %284 = vmatpush.msra.mxu0 %v219
  %285 = vmatpush.msra.mxu0 %v217
  %286 = vmatpush.msra.mxu0 %v215
  %287 = vmatpush.msra.mxu0 %v213
  %288 = vmatpush.msra.mxu0 %v211
  %289 = vmatpush.msra.mxu0 %v81
  %290 = vmatpush.msra.mxu0 %v79
  %291 = vmatpush.msra.mxu0 %v77
  %292 = vmatpush.msra.mxu0 %v75
  %293 = vmatpush.msra.mxu0 %v73
  %294 = vmatpush.msra.mxu0 %v71
  %295 = vmatpush.msra.mxu0 %v69
  %296 = vmatpush.msra.mxu0 %v67
  %297 = vmatmul.f32.gmra.mxu0 %v133
  %v298 = vpop.f32.mrf.mxu0
  %v299 = vadd.f32 0.0, %v298
  %300 = vmatmul.f32.gmra.mxu0 %v135
  %v301 = vpop.f32.mrf.mxu0
  %v302 = vadd.f32 0.0, %v301
  %303 = vmatmul.f32.gmra.mxu0 %v137
  %v304 = vpop.f32.mrf.mxu0
  %v305 = vadd.f32 0.0, %v304
  %306 = vmatmul.f32.gmra.mxu0 %v139
  %v307 = vpop.f32.mrf.mxu0
  %v308 = vadd.f32 0.0, %v307
  %309 = vmatmul.f32.gmra.mxu0 %v141
  %v310 = vpop.f32.mrf.mxu0
  %v311 = vadd.f32 0.0, %v310
  %312 = vmatmul.f32.gmra.mxu0 %v143
  %v313 = vpop.f32.mrf.mxu0
  %v314 = vadd.f32 0.0, %v313
  %315 = vmatmul.f32.gmra.mxu0 %v145
  %v316 = vpop.f32.mrf.mxu0
  %v317 = vadd.f32 0.0, %v316
  %318 = vmatmul.f32.gmra.mxu0 %v147
  %v319 = vpop.f32.mrf.mxu0
  %v320 = vadd.f32 0.0, %v319
  %321 = vmatmul.f32.gmra.mxu0 %v149
  %v322 = vpop.f32.mrf.mxu0
  %v323 = vadd.f32 0.0, %v322
  %324 = vmatmul.f32.gmra.mxu0 %v151
  %v325 = vpop.f32.mrf.mxu0
  %v326 = vadd.f32 0.0, %v325
  %327 = vmatmul.f32.gmra.mxu0 %v153
  %v328 = vpop.f32.mrf.mxu0
  %v329 = vadd.f32 0.0, %v328
  %330 = vmatmul.f32.gmra.mxu0 %v155
  %v331 = vpop.f32.mrf.mxu0
  %v332 = vadd.f32 0.0, %v331
  %333 = vmatmul.f32.gmra.mxu0 %v157
  %v334 = vpop.f32.mrf.mxu0
  %v335 = vadd.f32 0.0, %v334
  %336 = vmatmul.f32.gmra.mxu0 %v159
  %v337 = vpop.f32.mrf.mxu0
  %v338 = vadd.f32 0.0, %v337
  %339 = vmatmul.f32.gmra.mxu0 %v161
  %v340 = vpop.f32.mrf.mxu0
  %v341 = vadd.f32 0.0, %v340
  %342 = vdwg.mxu0
  %343 = vmatpush.msra.mxu0 0.0
  %344 = vmatpush.msra.mxu0 0.0
  %345 = vmatpush.msra.mxu0 0.0
  %346 = vmatpush.msra.mxu0 0.0
  %347 = vmatpush.msra.mxu0 0.0
  %348 = vmatpush.msra.mxu0 0.0
  %349 = vmatpush.msra.mxu0 0.0
  %350 = vmatpush.msra.mxu0 0.0
  %351 = vmatpush.msra.mxu0 0.0
  %352 = vmatpush.msra.mxu0 0.0
  %353 = vmatpush.msra.mxu0 0.0
  %354 = vmatpush.msra.mxu0 0.0
  %355 = vmatpush.msra.mxu0 %v233
  %356 = vmatpush.msra.mxu0 %v231
  %357 = vmatpush.msra.mxu0 %v229
  %358 = vmatpush.msra.mxu0 %v227
  %359 = vmatmul.f32.gmra.mxu0 %v237
  %v360 = vpop.f32.mrf.mxu0
  %v361 = vadd.f32 %v299, %v360
  %362 = vmatmul.f32.gmra.mxu0 %v240
  %v363 = vpop.f32.mrf.mxu0
  %v364 = vadd.f32 %v302, %v363
  %365 = vmatmul.f32.gmra.mxu0 %v243
  %v366 = vpop.f32.mrf.mxu0
  %v367 = vadd.f32 %v305, %v366
  %368 = vmatmul.f32.gmra.mxu0 %v246
  %v369 = vpop.f32.mrf.mxu0
  %v370 = vadd.f32 %v308, %v369
  %371 = vmatmul.f32.gmra.mxu0 %v249
  %v372 = vpop.f32.mrf.mxu0
  %v373 = vadd.f32 %v311, %v372
  %374 = vmatmul.f32.gmra.mxu0 %v252
  %v375 = vpop.f32.mrf.mxu0
  %v376 = vadd.f32 %v314, %v375
  %377 = vmatmul.f32.gmra.mxu0 %v255
  %v378 = vpop.f32.mrf.mxu0
  %v379 = vadd.f32 %v317, %v378
  %380 = vmatmul.f32.gmra.mxu0 %v258
  %v381 = vpop.f32.mrf.mxu0
  %v382 = vadd.f32 %v320, %v381
  %383 = vmatmul.f32.gmra.mxu0 %v261
  %v384 = vpop.f32.mrf.mxu0
  %v385 = vadd.f32 %v323, %v384
  %386 = vmatmul.f32.gmra.mxu0 %v264
  %v387 = vpop.f32.mrf.mxu0
  %v388 = vadd.f32 %v326, %v387
  %389 = vmatmul.f32.gmra.mxu0 %v267
  %v390 = vpop.f32.mrf.mxu0
  %v391 = vadd.f32 %v329, %v390
  %392 = vmatmul.f32.gmra.mxu0 %v270
  %v393 = vpop.f32.mrf.mxu0
  %v394 = vadd.f32 %v332, %v393
  %395 = vmatmul.f32.gmra.mxu0 %v273
  %v396 = vpop.f32.mrf.mxu0
  %v397 = vadd.f32 %v335, %v396
  %398 = vmatmul.f32.gmra.mxu0 %v276
  %v399 = vpop.f32.mrf.mxu0
  %v400 = vadd.f32 %v338, %v399
  %401 = vmatmul.f32.gmra.mxu0 %v279
  %v402 = vpop.f32.mrf.mxu0
  %v403 = vadd.f32 %v341, %v402
  %404 = vdwg.mxu0
  %405 = vmatpush.msra.mxu0 %v226
  %406 = vmatpush.msra.mxu0 %v224
  %407 = vmatpush.msra.mxu0 %v222
  %408 = vmatpush.msra.mxu0 %v220
  %409 = vmatpush.msra.mxu0 %v218
  %410 = vmatpush.msra.mxu0 %v216
  %411 = vmatpush.msra.mxu0 %v214
  %412 = vmatpush.msra.mxu0 %v212
  %413 = vmatpush.msra.mxu0 %v82
  %414 = vmatpush.msra.mxu0 %v80
  %415 = vmatpush.msra.mxu0 %v78
  %416 = vmatpush.msra.mxu0 %v76
  %417 = vmatpush.msra.mxu0 %v74
  %418 = vmatpush.msra.mxu0 %v72
  %419 = vmatpush.msra.mxu0 %v70
  %420 = vmatpush.msra.mxu0 %v68
  %421 = vmatmul.f32.gmra.mxu0 %v133
  %v422 = vpop.f32.mrf.mxu0
  %v423 = vadd.f32 0.0, %v422
  %424 = vmatmul.f32.gmra.mxu0 %v135
  %v425 = vpop.f32.mrf.mxu0
  %v426 = vadd.f32 0.0, %v425
  %427 = vmatmul.f32.gmra.mxu0 %v137
  %v428 = vpop.f32.mrf.mxu0
  %v429 = vadd.f32 0.0, %v428
  %430 = vmatmul.f32.gmra.mxu0 %v139
  %v431 = vpop.f32.mrf.mxu0
  %v432 = vadd.f32 0.0, %v431
  %433 = vmatmul.f32.gmra.mxu0 %v141
  %v434 = vpop.f32.mrf.mxu0
  %v435 = vadd.f32 0.0, %v434
  %436 = vmatmul.f32.gmra.mxu0 %v143
  %v437 = vpop.f32.mrf.mxu0
  %v438 = vadd.f32 0.0, %v437
  %439 = vmatmul.f32.gmra.mxu0 %v145
  %v440 = vpop.f32.mrf.mxu0
  %v441 = vadd.f32 0.0, %v440
  %442 = vmatmul.f32.gmra.mxu0 %v147
  %v443 = vpop.f32.mrf.mxu0
  %v444 = vadd.f32 0.0, %v443
  %445 = vmatmul.f32.gmra.mxu0 %v149
  %v446 = vpop.f32.mrf.mxu0
  %v447 = vadd.f32 0.0, %v446
  %448 = vmatmul.f32.gmra.mxu0 %v151
  %v449 = vpop.f32.mrf.mxu0
  %v450 = vadd.f32 0.0, %v449
  %451 = vmatmul.f32.gmra.mxu0 %v153
  %v452 = vpop.f32.mrf.mxu0
  %v453 = vadd.f32 0.0, %v452
  %454 = vmatmul.f32.gmra.mxu0 %v155
  %v455 = vpop.f32.mrf.mxu0
  %v456 = vadd.f32 0.0, %v455
  %457 = vmatmul.f32.gmra.mxu0 %v157
  %v458 = vpop.f32.mrf.mxu0
  %v459 = vadd.f32 0.0, %v458
  %460 = vmatmul.f32.gmra.mxu0 %v159
  %v461 = vpop.f32.mrf.mxu0
  %v462 = vadd.f32 0.0, %v461
  %463 = vmatmul.f32.gmra.mxu0 %v161
  %v464 = vpop.f32.mrf.mxu0
  %v465 = vadd.f32 0.0, %v464
  %466 = vdwg.mxu0
  %467 = vmatpush.msra.mxu0 0.0
  %468 = vmatpush.msra.mxu0 0.0
  %469 = vmatpush.msra.mxu0 0.0
  %470 = vmatpush.msra.mxu0 0.0
  %471 = vmatpush.msra.mxu0 0.0
  %472 = vmatpush.msra.mxu0 0.0
  %473 = vmatpush.msra.mxu0 0.0
  %474 = vmatpush.msra.mxu0 0.0
  %475 = vmatpush.msra.mxu0 0.0
  %476 = vmatpush.msra.mxu0 0.0
  %477 = vmatpush.msra.mxu0 0.0
  %478 = vmatpush.msra.mxu0 0.0
  %479 = vmatpush.msra.mxu0 %v234
  %480 = vmatpush.msra.mxu0 %v232
  %481 = vmatpush.msra.mxu0 %v230
  %482 = vmatpush.msra.mxu0 %v228
  %483 = vmatmul.f32.gmra.mxu0 %v237
  %v484 = vpop.f32.mrf.mxu0
  %v485 = vadd.f32 %v423, %v484
  %486 = vmatmul.f32.gmra.mxu0 %v240
  %v487 = vpop.f32.mrf.mxu0
  %v488 = vadd.f32 %v426, %v487
  %489 = vmatmul.f32.gmra.mxu0 %v243
  %v490 = vpop.f32.mrf.mxu0
  %v491 = vadd.f32 %v429, %v490
  %492 = vmatmul.f32.gmra.mxu0 %v246
  %v493 = vpop.f32.mrf.mxu0
  %v494 = vadd.f32 %v432, %v493
  %495 = vmatmul.f32.gmra.mxu0 %v249
  %v496 = vpop.f32.mrf.mxu0
  %v497 = vadd.f32 %v435, %v496
  %498 = vmatmul.f32.gmra.mxu0 %v252
  %v499 = vpop.f32.mrf.mxu0
  %v500 = vadd.f32 %v438, %v499
  %501 = vmatmul.f32.gmra.mxu0 %v255
  %v502 = vpop.f32.mrf.mxu0
  %v503 = vadd.f32 %v441, %v502
  %504 = vmatmul.f32.gmra.mxu0 %v258
  %v505 = vpop.f32.mrf.mxu0
  %v506 = vadd.f32 %v444, %v505
  %507 = vmatmul.f32.gmra.mxu0 %v261
  %v508 = vpop.f32.mrf.mxu0
  %v509 = vadd.f32 %v447, %v508
  %510 = vmatmul.f32.gmra.mxu0 %v264
  %v511 = vpop.f32.mrf.mxu0
  %v512 = vadd.f32 %v450, %v511
  %513 = vmatmul.f32.gmra.mxu0 %v267
  %v514 = vpop.f32.mrf.mxu0
  %v515 = vadd.f32 %v453, %v514
  %516 = vmatmul.f32.gmra.mxu0 %v270
  %v517 = vpop.f32.mrf.mxu0
  %v518 = vadd.f32 %v456, %v517
  %519 = vmatmul.f32.gmra.mxu0 %v273
  %v520 = vpop.f32.mrf.mxu0
  %v521 = vadd.f32 %v459, %v520
  %522 = vmatmul.f32.gmra.mxu0 %v276
  %v523 = vpop.f32.mrf.mxu0
  %v524 = vadd.f32 %v462, %v523
  %525 = vmatmul.f32.gmra.mxu0 %v279
  %v526 = vpop.f32.mrf.mxu0
  %v527 = vadd.f32 %v465, %v526
  %528 = vdwg.mxu0
  %v530 = vsel %vm83, %v485, 0
  %v533 = vsel %vm83, %v488, 0
  %v536 = vsel %vm83, %v491, 0
  %v539 = vsel %vm83, %v494, 0
  %v542 = vsel %vm83, %v497, 0
  %v545 = vsel %vm83, %v500, 0
  %v548 = vsel %vm83, %v503, 0
  %v551 = vsel %vm83, %v506, 0
  %v554 = vsel %vm83, %v509, 0
  %v557 = vsel %vm83, %v512, 0
  %v560 = vsel %vm83, %v515, 0
  %v563 = vsel %vm83, %v518, 0
  %v566 = vsel %vm83, %v521, 0
  %v569 = vsel %vm83, %v524, 0
  %v572 = vsel %vm83, %v527, 0
  %574 = vmatpush.msra.mxu0 %v193
  %575 = vmatpush.msra.mxu0 %v191
  %576 = vmatpush.msra.mxu0 %v189
  %577 = vmatpush.msra.mxu0 %v187
  %578 = vmatpush.msra.mxu0 %v185
  %579 = vmatpush.msra.mxu0 %v183
  %580 = vmatpush.msra.mxu0 %v181
  %581 = vmatpush.msra.mxu0 %v179
  %582 = vmatpush.msra.mxu0 %v177
  %583 = vmatpush.msra.mxu0 %v175
  %584 = vmatpush.msra.mxu0 %v173
  %585 = vmatpush.msra.mxu0 %v171
  %586 = vmatpush.msra.mxu0 %v169
  %587 = vmatpush.msra.mxu0 %v167
  %588 = vmatpush.msra.mxu0 %v165
  %589 = vmatpush.msra.mxu0 %v163
  %590 = vmatmul.f32.gmra.mxu0 %v361
  %v591 = vpop.f32.mrf.mxu0
  %v592 = vadd.f32 0.0, %v591
  %593 = vmatmul.f32.gmra.mxu0 %v364
  %v594 = vpop.f32.mrf.mxu0
  %v595 = vadd.f32 0.0, %v594
  %596 = vmatmul.f32.gmra.mxu0 %v367
  %v597 = vpop.f32.mrf.mxu0
  %v598 = vadd.f32 0.0, %v597
  %599 = vmatmul.f32.gmra.mxu0 %v370
  %v600 = vpop.f32.mrf.mxu0
  %v601 = vadd.f32 0.0, %v600
  %602 = vmatmul.f32.gmra.mxu0 %v373
  %v603 = vpop.f32.mrf.mxu0
  %v604 = vadd.f32 0.0, %v603
  %605 = vmatmul.f32.gmra.mxu0 %v376
  %v606 = vpop.f32.mrf.mxu0
  %v607 = vadd.f32 0.0, %v606
  %608 = vmatmul.f32.gmra.mxu0 %v379
  %v609 = vpop.f32.mrf.mxu0
  %v610 = vadd.f32 0.0, %v609
  %611 = vmatmul.f32.gmra.mxu0 %v382
  %v612 = vpop.f32.mrf.mxu0
  %v613 = vadd.f32 0.0, %v612
  %614 = vmatmul.f32.gmra.mxu0 %v385
  %v615 = vpop.f32.mrf.mxu0
  %v616 = vadd.f32 0.0, %v615
  %617 = vmatmul.f32.gmra.mxu0 %v388
  %v618 = vpop.f32.mrf.mxu0
  %v619 = vadd.f32 0.0, %v618
  %620 = vmatmul.f32.gmra.mxu0 %v391
  %v621 = vpop.f32.mrf.mxu0
  %v622 = vadd.f32 0.0, %v621
  %623 = vmatmul.f32.gmra.mxu0 %v394
  %v624 = vpop.f32.mrf.mxu0
  %v625 = vadd.f32 0.0, %v624
  %626 = vmatmul.f32.gmra.mxu0 %v397
  %v627 = vpop.f32.mrf.mxu0
  %v628 = vadd.f32 0.0, %v627
  %629 = vmatmul.f32.gmra.mxu0 %v400
  %v630 = vpop.f32.mrf.mxu0
  %v631 = vadd.f32 0.0, %v630
  %632 = vmatmul.f32.gmra.mxu0 %v403
  %v633 = vpop.f32.mrf.mxu0
  %v634 = vadd.f32 0.0, %v633
  %635 = vdwg.mxu0
  %636 = vmatpush.msra.mxu0 0.0
  %637 = vmatpush.msra.mxu0 0.0
  %638 = vmatpush.msra.mxu0 0.0
  %639 = vmatpush.msra.mxu0 0.0
  %640 = vmatpush.msra.mxu0 0.0
  %641 = vmatpush.msra.mxu0 0.0
  %642 = vmatpush.msra.mxu0 0.0
  %643 = vmatpush.msra.mxu0 0.0
  %644 = vmatpush.msra.mxu0 %v209
  %645 = vmatpush.msra.mxu0 %v207
  %646 = vmatpush.msra.mxu0 %v205
  %647 = vmatpush.msra.mxu0 %v203
  %648 = vmatpush.msra.mxu0 %v201
  %649 = vmatpush.msra.mxu0 %v199
  %650 = vmatpush.msra.mxu0 %v197
  %651 = vmatpush.msra.mxu0 %v195
  %652 = vmatmul.f32.gmra.mxu0 %v530
  %v653 = vpop.f32.mrf.mxu0
  %v654 = vadd.f32 %v592, %v653
  %655 = vmatmul.f32.gmra.mxu0 %v533
  %v656 = vpop.f32.mrf.mxu0
  %v657 = vadd.f32 %v595, %v656
  %658 = vmatmul.f32.gmra.mxu0 %v536
  %v659 = vpop.f32.mrf.mxu0
  %v660 = vadd.f32 %v598, %v659
  %661 = vmatmul.f32.gmra.mxu0 %v539
  %v662 = vpop.f32.mrf.mxu0
  %v663 = vadd.f32 %v601, %v662
  %664 = vmatmul.f32.gmra.mxu0 %v542
  %v665 = vpop.f32.mrf.mxu0
  %v666 = vadd.f32 %v604, %v665
  %667 = vmatmul.f32.gmra.mxu0 %v545
  %v668 = vpop.f32.mrf.mxu0
  %v669 = vadd.f32 %v607, %v668
  %670 = vmatmul.f32.gmra.mxu0 %v548
  %v671 = vpop.f32.mrf.mxu0
  %v672 = vadd.f32 %v610, %v671
  %673 = vmatmul.f32.gmra.mxu0 %v551
  %v674 = vpop.f32.mrf.mxu0
  %v675 = vadd.f32 %v613, %v674
  %676 = vmatmul.f32.gmra.mxu0 %v554
  %v677 = vpop.f32.mrf.mxu0
  %v678 = vadd.f32 %v616, %v677
  %679 = vmatmul.f32.gmra.mxu0 %v557
  %v680 = vpop.f32.mrf.mxu0
  %v681 = vadd.f32 %v619, %v680
  %682 = vmatmul.f32.gmra.mxu0 %v560
  %v683 = vpop.f32.mrf.mxu0
  %v684 = vadd.f32 %v622, %v683
  %685 = vmatmul.f32.gmra.mxu0 %v563
  %v686 = vpop.f32.mrf.mxu0
  %v687 = vadd.f32 %v625, %v686
  %688 = vmatmul.f32.gmra.mxu0 %v566
  %v689 = vpop.f32.mrf.mxu0
  %v690 = vadd.f32 %v628, %v689
  %691 = vmatmul.f32.gmra.mxu0 %v569
  %v692 = vpop.f32.mrf.mxu0
  %v693 = vadd.f32 %v631, %v692
  %694 = vmatmul.f32.gmra.mxu0 %v572
  %v695 = vpop.f32.mrf.mxu0
  %v696 = vadd.f32 %v634, %v695
  %697 = vdwg.mxu0
  %698 = vmatpush.msra.mxu0 %v194
  %699 = vmatpush.msra.mxu0 %v192
  %700 = vmatpush.msra.mxu0 %v190
  %701 = vmatpush.msra.mxu0 %v188
  %702 = vmatpush.msra.mxu0 %v186
  %703 = vmatpush.msra.mxu0 %v184
  %704 = vmatpush.msra.mxu0 %v182
  %705 = vmatpush.msra.mxu0 %v180
  %706 = vmatpush.msra.mxu0 %v178
  %707 = vmatpush.msra.mxu0 %v176
  %708 = vmatpush.msra.mxu0 %v174
  %709 = vmatpush.msra.mxu0 %v172
  %710 = vmatpush.msra.mxu0 %v170
  %711 = vmatpush.msra.mxu0 %v168
  %712 = vmatpush.msra.mxu0 %v166
  %713 = vmatpush.msra.mxu0 %v164
  %714 = vmatmul.f32.gmra.mxu0 %v361
  %v715 = vpop.f32.mrf.mxu0
  %v716 = vadd.f32 0.0, %v715
  %717 = vmatmul.f32.gmra.mxu0 %v364
  %v718 = vpop.f32.mrf.mxu0
  %v719 = vadd.f32 0.0, %v718
  %720 = vmatmul.f32.gmra.mxu0 %v367
  %v721 = vpop.f32.mrf.mxu0
  %v722 = vadd.f32 0.0, %v721
  %723 = vmatmul.f32.gmra.mxu0 %v370
  %v724 = vpop.f32.mrf.mxu0
  %v725 = vadd.f32 0.0, %v724
  %726 = vmatmul.f32.gmra.mxu0 %v373
  %v727 = vpop.f32.mrf.mxu0
  %v728 = vadd.f32 0.0, %v727
  %729 = vmatmul.f32.gmra.mxu0 %v376
  %v730 = vpop.f32.mrf.mxu0
  %v731 = vadd.f32 0.0, %v730
  %732 = vmatmul.f32.gmra.mxu0 %v379
  %v733 = vpop.f32.mrf.mxu0
  %v734 = vadd.f32 0.0, %v733
  %735 = vmatmul.f32.gmra.mxu0 %v382
  %v736 = vpop.f32.mrf.mxu0
  %v737 = vadd.f32 0.0, %v736
  %738 = vmatmul.f32.gmra.mxu0 %v385
  %v739 = vpop.f32.mrf.mxu0
  %v740 = vadd.f32 0.0, %v739
  %741 = vmatmul.f32.gmra.mxu0 %v388
  %v742 = vpop.f32.mrf.mxu0
  %v743 = vadd.f32 0.0, %v742
  %744 = vmatmul.f32.gmra.mxu0 %v391
  %v745 = vpop.f32.mrf.mxu0
  %v746 = vadd.f32 0.0, %v745
  %747 = vmatmul.f32.gmra.mxu0 %v394
  %v748 = vpop.f32.mrf.mxu0
  %v749 = vadd.f32 0.0, %v748
  %750 = vmatmul.f32.gmra.mxu0 %v397
  %v751 = vpop.f32.mrf.mxu0
  %v752 = vadd.f32 0.0, %v751
  %753 = vmatmul.f32.gmra.mxu0 %v400
  %v754 = vpop.f32.mrf.mxu0
  %v755 = vadd.f32 0.0, %v754
  %756 = vmatmul.f32.gmra.mxu0 %v403
  %v757 = vpop.f32.mrf.mxu0
  %v758 = vadd.f32 0.0, %v757
  %759 = vdwg.mxu0
  %760 = vmatpush.msra.mxu0 0.0
  %761 = vmatpush.msra.mxu0 0.0
  %762 = vmatpush.msra.mxu0 0.0
  %763 = vmatpush.msra.mxu0 0.0
  %764 = vmatpush.msra.mxu0 0.0
  %765 = vmatpush.msra.mxu0 0.0
  %766 = vmatpush.msra.mxu0 0.0
  %767 = vmatpush.msra.mxu0 0.0
  %768 = vmatpush.msra.mxu0 %v210
  %769 = vmatpush.msra.mxu0 %v208
  %770 = vmatpush.msra.mxu0 %v206
  %771 = vmatpush.msra.mxu0 %v204
  %772 = vmatpush.msra.mxu0 %v202
  %773 = vmatpush.msra.mxu0 %v200
  %774 = vmatpush.msra.mxu0 %v198
  %775 = vmatpush.msra.mxu0 %v196
  %776 = vmatmul.f32.gmra.mxu0 %v530
  %v777 = vpop.f32.mrf.mxu0
  %v778 = vadd.f32 %v716, %v777
  %779 = vmatmul.f32.gmra.mxu0 %v533
  %v780 = vpop.f32.mrf.mxu0
  %v781 = vadd.f32 %v719, %v780
  %782 = vmatmul.f32.gmra.mxu0 %v536
  %v783 = vpop.f32.mrf.mxu0
  %v784 = vadd.f32 %v722, %v783
  %785 = vmatmul.f32.gmra.mxu0 %v539
  %v786 = vpop.f32.mrf.mxu0
  %v787 = vadd.f32 %v725, %v786
  %788 = vmatmul.f32.gmra.mxu0 %v542
  %v789 = vpop.f32.mrf.mxu0
  %v790 = vadd.f32 %v728, %v789
  %791 = vmatmul.f32.gmra.mxu0 %v545
  %v792 = vpop.f32.mrf.mxu0
  %v793 = vadd.f32 %v731, %v792
  %794 = vmatmul.f32.gmra.mxu0 %v548
  %v795 = vpop.f32.mrf.mxu0
  %v796 = vadd.f32 %v734, %v795
  %797 = vmatmul.f32.gmra.mxu0 %v551
  %v798 = vpop.f32.mrf.mxu0
  %v799 = vadd.f32 %v737, %v798
  %800 = vmatmul.f32.gmra.mxu0 %v554
  %v801 = vpop.f32.mrf.mxu0
  %v802 = vadd.f32 %v740, %v801
  %803 = vmatmul.f32.gmra.mxu0 %v557
  %v804 = vpop.f32.mrf.mxu0
  %v805 = vadd.f32 %v743, %v804
  %806 = vmatmul.f32.gmra.mxu0 %v560
  %v807 = vpop.f32.mrf.mxu0
  %v808 = vadd.f32 %v746, %v807
  %809 = vmatmul.f32.gmra.mxu0 %v563
  %v810 = vpop.f32.mrf.mxu0
  %v811 = vadd.f32 %v749, %v810
  %812 = vmatmul.f32.gmra.mxu0 %v566
  %v813 = vpop.f32.mrf.mxu0
  %v814 = vadd.f32 %v752, %v813
  %815 = vmatmul.f32.gmra.mxu0 %v569
  %v816 = vpop.f32.mrf.mxu0
  %v817 = vadd.f32 %v755, %v816
  %818 = vmatmul.f32.gmra.mxu0 %v572
  %v819 = vpop.f32.mrf.mxu0
  %v820 = vadd.f32 %v758, %v819
  %821 = vdwg.mxu0
  %v822 = vmul.f32 %v654, %v654
  %v823 = vmul.f32 %v778, %v778
  %v824 = vmul.f32 %v657, %v657
  %v825 = vmul.f32 %v781, %v781
  %v826 = vmul.f32 %v660, %v660
  %v827 = vmul.f32 %v784, %v784
  %v828 = vmul.f32 %v663, %v663
  %v829 = vmul.f32 %v787, %v787
  %v830 = vmul.f32 %v666, %v666
  %v831 = vmul.f32 %v790, %v790
  %v832 = vmul.f32 %v669, %v669
  %v833 = vmul.f32 %v793, %v793
  %v834 = vmul.f32 %v654, %v663
  %v835 = vmul.f32 %v778, %v787
  %v836 = vmul.f32 %v657, %v666
  %v837 = vmul.f32 %v781, %v790
  %v838 = vmul.f32 %v660, %v669
  %v839 = vmul.f32 %v784, %v793
  %v840 = vsub.f32 %v672, %v822
  %v841 = vsub.f32 %v796, %v823
  %v842 = vsub.f32 %v675, %v824
  %v843 = vsub.f32 %v799, %v825
  %v844 = vsub.f32 %v678, %v826
  %v845 = vsub.f32 %v802, %v827
  %v846 = vsub.f32 %v681, %v828
  %v847 = vsub.f32 %v805, %v829
  %v848 = vsub.f32 %v684, %v830
  %v849 = vsub.f32 %v808, %v831
  %v850 = vsub.f32 %v687, %v832
  %v851 = vsub.f32 %v811, %v833
  %v852 = vsub.f32 %v690, %v834
  %v853 = vsub.f32 %v814, %v835
  %v854 = vsub.f32 %v693, %v836
  %v855 = vsub.f32 %v817, %v837
  %v856 = vsub.f32 %v696, %v838
  %v857 = vsub.f32 %v820, %v839
  %v858 = vmul.f32 %v852, 2.0
  %v859 = vmul.f32 %v853, 2.0
  %v860 = vmul.f32 %v854, 2.0
  %v861 = vmul.f32 %v855, 2.0
  %v862 = vmul.f32 %v856, 2.0
  %v863 = vmul.f32 %v857, 2.0
  %v864 = vstv %s132
  %v865 = vadd.f32 %v858, %v864
  %v866 = vadd.f32 %v859, %v864
  %v867 = vadd.f32 %v860, %v864
  %v868 = vadd.f32 %v861, %v864
  %v869 = vadd.f32 %v862, %v864
  %v870 = vadd.f32 %v863, %v864
  %v871 = vadd.f32 %v840, %v846
  %v872 = vadd.f32 %v841, %v847
  %v873 = vadd.f32 %v842, %v848
  %v874 = vadd.f32 %v843, %v849
  %v875 = vadd.f32 %v844, %v850
  %v876 = vadd.f32 %v845, %v851
  %v877 = vadd.f32 %v871, %v864
  %v878 = vadd.f32 %v872, %v864
  %v879 = vadd.f32 %v873, %v864
  %v880 = vadd.f32 %v874, %v864
  %v881 = vadd.f32 %v875, %v864
  %v882 = vadd.f32 %v876, %v864
  %v883 = vrcp.pop %v877
  %v884 = vrcp.pop %v878
  %v885 = vrcp.pop %v879
  %v886 = vrcp.pop %v880
  %v887 = vrcp.pop %v881
  %v888 = vrcp.pop %v882
  %v889 = vmul.f32 %v865, %v883
  %v890 = vmul.f32 %v866, %v884
  %v891 = vmul.f32 %v867, %v885
  %v892 = vmul.f32 %v868, %v886
  %v893 = vmul.f32 %v869, %v887
  %v894 = vmul.f32 %v870, %v888
  %v895 = vmul.f32 %v834, 2.0
  %v896 = vmul.f32 %v835, 2.0
  %v897 = vmul.f32 %v836, 2.0
  %v898 = vmul.f32 %v837, 2.0
  %v899 = vmul.f32 %v838, 2.0
  %v900 = vmul.f32 %v839, 2.0
  %v901 = vstv %s130
  %v902 = vadd.f32 %v895, %v901
  %v903 = vadd.f32 %v896, %v901
  %v904 = vadd.f32 %v897, %v901
  %v905 = vadd.f32 %v898, %v901
  %v906 = vadd.f32 %v899, %v901
  %v907 = vadd.f32 %v900, %v901
  %v908 = vadd.f32 %v822, %v828
  %v909 = vadd.f32 %v823, %v829
  %v910 = vadd.f32 %v824, %v830
  %v911 = vadd.f32 %v825, %v831
  %v912 = vadd.f32 %v826, %v832
  %v913 = vadd.f32 %v827, %v833
  %v914 = vadd.f32 %v908, %v901
  %v915 = vadd.f32 %v909, %v901
  %v916 = vadd.f32 %v910, %v901
  %v917 = vadd.f32 %v911, %v901
  %v918 = vadd.f32 %v912, %v901
  %v919 = vadd.f32 %v913, %v901
  %v920 = vrcp.pop %v914
  %v921 = vrcp.pop %v915
  %v922 = vrcp.pop %v916
  %v923 = vrcp.pop %v917
  %v924 = vrcp.pop %v918
  %v925 = vrcp.pop %v919
  %v926 = vmul.f32 %v902, %v920
  %v927 = vmul.f32 %v903, %v921
  %v928 = vmul.f32 %v904, %v922
  %v929 = vmul.f32 %v905, %v923
  %v930 = vmul.f32 %v906, %v924
  %v931 = vmul.f32 %v907, %v925
  %v932 = vmul.f32 %v889, %v926
  %v933 = vmul.f32 %v890, %v927
  %v934 = vmul.f32 %v891, %v928
  %v935 = vmul.f32 %v892, %v929
  %v936 = vmul.f32 %v893, %v930
  %v937 = vmul.f32 %v894, %v931
  %vm938 = vcmask 31744
  %v939 = vsel %vm938, %v933, 0.0
  %v940 = vadd.f32 %v932, %v939
  %v941 = vadd.f32 %v940, %v934
  %v942 = vsel %vm938, %v935, 0.0
  %v943 = vadd.f32 %v941, %v942
  %vm944 = vcmask 1045504
  %v945 = vsel %vm944, %v936, 0.0
  %v946 = vadd.f32 %v943, %v945
  %vm947 = vcmask 29696
  %v948 = vsel %vm947, %v937, 0.0
  %v949 = vadd.f32 %v946, %v948
  %950 = vadd.xlane.f32.xlu0 %v949
  %v951 = vpop.xlane.xlu0 %950
  %v952 = vrot.slane %v951, 4
  %v953 = vadd.f32 %v951, %v952
  %v954 = vrot.slane %v953, 2
  %v955 = vadd.f32 %v953, %v954
  %v956 = vrot.slane %v955, 1
  %v957 = vadd.f32 %v955, %v956
  %s958 = vtos %v957
  %s959 = smul.f32 %s958, 0.00034435262
  %v960 = vsel %vm938, %v890, 0.0
  %v961 = vadd.f32 %v889, %v960
  %v962 = vadd.f32 %v961, %v891
  %v963 = vsel %vm938, %v892, 0.0
  %v964 = vadd.f32 %v962, %v963
  %v965 = vsel %vm944, %v893, 0.0
  %v966 = vadd.f32 %v964, %v965
  %v967 = vsel %vm947, %v894, 0.0
  %v968 = vadd.f32 %v966, %v967
  %969 = vadd.xlane.f32.xlu0 %v968
  %v970 = vpop.xlane.xlu0 %969
  %v971 = vrot.slane %v970, 4
  %v972 = vadd.f32 %v970, %v971
  %v973 = vrot.slane %v972, 2
  %v974 = vadd.f32 %v972, %v973
  %v975 = vrot.slane %v974, 1
  %v976 = vadd.f32 %v974, %v975
  %s977 = vtos %v976
  %s978 = smul.f32 %s977, 0.00034435262
  %v979 = vstv %s959
  %980 = vst [vmem:[%s20] sm:$0x1] %v979
  %v981 = vstv %s978
  %982 = vst [vmem:[%s21] sm:$0x1] %v981
  %v983 = vld [vmem:[%s12] sm:$0xff]
  %v984 = vld [vmem:[%s12 + $0x8] sm:$0xff]
  %v985 = vld [vmem:[%s16] sm:$0xff]
  %v986 = vld [vmem:[%s16 + $0x8] sm:$0xff]
  %v987 = vld [vmem:[%s16 + $0x10] sm:$0xff]
  %v988 = vld [vmem:[%s16 + $0x18] sm:$0xff]
  %v989 = vld [vmem:[%s16 + $0x20] sm:$0xff]
  %v990 = vld [vmem:[%s16 + $0x28] sm:$0xff]
  %v991 = vld [vmem:[%s16 + $0x30] sm:$0xff]
  %v992 = vld [vmem:[%s16 + $0x38] sm:$0xff]
  %v993 = vld [vmem:[%s16 + $0x40] sm:$0xff]
  %v994 = vld [vmem:[%s16 + $0x48] sm:$0xff]
  %v995 = vld [vmem:[%s16 + $0x50] sm:$0xff]
  %v996 = vld [vmem:[%s16 + $0x58] sm:$0xff]
  %v997 = vld [vmem:[%s16 + $0x60] sm:$0xff]
  %v998 = vld [vmem:[%s16 + $0x68] sm:$0xff]
  %v999 = vld [vmem:[%s16 + $0x70] sm:$0xff]
  %v1000 = vld [vmem:[%s16 + $0x78] sm:$0xff]
  %v1001 = vld [vmem:[%s16 + $0x80] sm:$0xff]
  %v1002 = vld [vmem:[%s16 + $0x88] sm:$0xff]
  %v1003 = vld [vmem:[%s16 + $0x90] sm:$0xff]
  %v1004 = vld [vmem:[%s16 + $0x98] sm:$0xff]
  %v1005 = vld [vmem:[%s16 + $0xa0] sm:$0xff]
  %v1006 = vld [vmem:[%s16 + $0xa8] sm:$0xff]
  %v1007 = vld [vmem:[%s16 + $0xb0] sm:$0xff]
  %v1008 = vld [vmem:[%s16 + $0xb8] sm:$0xff]
  %v1010 = vsel %vm235, %v983, 0
  %v1013 = vsel %vm235, %v984, 0
  %1015 = vmatpush.msra.mxu0 0.0
  %1016 = vmatpush.msra.mxu0 0.0
  %1017 = vmatpush.msra.mxu0 0.0
  %1018 = vmatpush.msra.mxu0 0.0
  %1019 = vmatpush.msra.mxu0 0.0
  %1020 = vmatpush.msra.mxu0 0.0
  %1021 = vmatpush.msra.mxu0 0.0
  %1022 = vmatpush.msra.mxu0 0.0
  %1023 = vmatpush.msra.mxu0 0.0
  %1024 = vmatpush.msra.mxu0 0.0
  %1025 = vmatpush.msra.mxu0 0.0
  %1026 = vmatpush.msra.mxu0 0.0
  %1027 = vmatpush.msra.mxu0 %v73
  %1028 = vmatpush.msra.mxu0 %v71
  %1029 = vmatpush.msra.mxu0 %v69
  %1030 = vmatpush.msra.mxu0 %v67
  %1031 = vmatmul.f32.gmra.mxu0 %v1010
  %v1032 = vpop.f32.mrf.mxu0
  %v1033 = vadd.f32 0.0, %v1032
  %1034 = vmatmul.f32.gmra.mxu0 %v1013
  %v1035 = vpop.f32.mrf.mxu0
  %v1036 = vadd.f32 0.0, %v1035
  %1037 = vdwg.mxu0
  %1038 = vmatpush.msra.mxu0 0.0
  %1039 = vmatpush.msra.mxu0 0.0
  %1040 = vmatpush.msra.mxu0 0.0
  %1041 = vmatpush.msra.mxu0 0.0
  %1042 = vmatpush.msra.mxu0 0.0
  %1043 = vmatpush.msra.mxu0 0.0
  %1044 = vmatpush.msra.mxu0 0.0
  %1045 = vmatpush.msra.mxu0 0.0
  %1046 = vmatpush.msra.mxu0 0.0
  %1047 = vmatpush.msra.mxu0 0.0
  %1048 = vmatpush.msra.mxu0 0.0
  %1049 = vmatpush.msra.mxu0 0.0
  %1050 = vmatpush.msra.mxu0 %v74
  %1051 = vmatpush.msra.mxu0 %v72
  %1052 = vmatpush.msra.mxu0 %v70
  %1053 = vmatpush.msra.mxu0 %v68
  %1054 = vmatmul.f32.gmra.mxu0 %v1010
  %v1055 = vpop.f32.mrf.mxu0
  %v1056 = vadd.f32 0.0, %v1055
  %1057 = vmatmul.f32.gmra.mxu0 %v1013
  %v1058 = vpop.f32.mrf.mxu0
  %v1059 = vadd.f32 0.0, %v1058
  %1060 = vdwg.mxu0
  %v1062 = vsel %vm83, %v1056, 0
  %v1065 = vsel %vm83, %v1059, 0
  %1067 = vmatpush.msra.mxu0 %v1000
  %1068 = vmatpush.msra.mxu0 %v999
  %1069 = vmatpush.msra.mxu0 %v998
  %1070 = vmatpush.msra.mxu0 %v997
  %1071 = vmatpush.msra.mxu0 %v996
  %1072 = vmatpush.msra.mxu0 %v995
  %1073 = vmatpush.msra.mxu0 %v994
  %1074 = vmatpush.msra.mxu0 %v993
  %1075 = vmatpush.msra.mxu0 %v992
  %1076 = vmatpush.msra.mxu0 %v991
  %1077 = vmatpush.msra.mxu0 %v990
  %1078 = vmatpush.msra.mxu0 %v989
  %1079 = vmatpush.msra.mxu0 %v988
  %1080 = vmatpush.msra.mxu0 %v987
  %1081 = vmatpush.msra.mxu0 %v986
  %1082 = vmatpush.msra.mxu0 %v985
  %1083 = vmatmul.f32.gmra.mxu0 %v1033
  %v1084 = vpop.f32.mrf.mxu0
  %v1085 = vadd.f32 0.0, %v1084
  %1086 = vmatmul.f32.gmra.mxu0 %v1036
  %v1087 = vpop.f32.mrf.mxu0
  %v1088 = vadd.f32 0.0, %v1087
  %1089 = vdwg.mxu0
  %1090 = vmatpush.msra.mxu0 0.0
  %1091 = vmatpush.msra.mxu0 0.0
  %1092 = vmatpush.msra.mxu0 0.0
  %1093 = vmatpush.msra.mxu0 0.0
  %1094 = vmatpush.msra.mxu0 0.0
  %1095 = vmatpush.msra.mxu0 0.0
  %1096 = vmatpush.msra.mxu0 0.0
  %1097 = vmatpush.msra.mxu0 0.0
  %1098 = vmatpush.msra.mxu0 %v1008
  %1099 = vmatpush.msra.mxu0 %v1007
  %1100 = vmatpush.msra.mxu0 %v1006
  %1101 = vmatpush.msra.mxu0 %v1005
  %1102 = vmatpush.msra.mxu0 %v1004
  %1103 = vmatpush.msra.mxu0 %v1003
  %1104 = vmatpush.msra.mxu0 %v1002
  %1105 = vmatpush.msra.mxu0 %v1001
  %1106 = vmatmul.f32.gmra.mxu0 %v1062
  %v1107 = vpop.f32.mrf.mxu0
  %v1108 = vadd.f32 %v1085, %v1107
  %1109 = vmatmul.f32.gmra.mxu0 %v1065
  %v1110 = vpop.f32.mrf.mxu0
  %v1111 = vadd.f32 %v1088, %v1110
  %1112 = vdwg.mxu0
  %1113 = vmatpush.msra.mxu0 0.0
  %1114 = vmatpush.msra.mxu0 0.0
  %1115 = vmatpush.msra.mxu0 0.0
  %1116 = vmatpush.msra.mxu0 0.0
  %1117 = vmatpush.msra.mxu0 0.0
  %1118 = vmatpush.msra.mxu0 0.0
  %1119 = vmatpush.msra.mxu0 0.0
  %1120 = vmatpush.msra.mxu0 0.0
  %1121 = vmatpush.msra.mxu0 0.0
  %1122 = vmatpush.msra.mxu0 0.0
  %1123 = vmatpush.msra.mxu0 0.0
  %1124 = vmatpush.msra.mxu0 0.0
  %1125 = vmatpush.msra.mxu0 %v81
  %1126 = vmatpush.msra.mxu0 %v79
  %1127 = vmatpush.msra.mxu0 %v77
  %1128 = vmatpush.msra.mxu0 %v75
  %1129 = vmatmul.f32.gmra.mxu0 %v1010
  %v1130 = vpop.f32.mrf.mxu0
  %v1131 = vadd.f32 0.0, %v1130
  %1132 = vmatmul.f32.gmra.mxu0 %v1013
  %v1133 = vpop.f32.mrf.mxu0
  %v1134 = vadd.f32 0.0, %v1133
  %1135 = vdwg.mxu0
  %1136 = vmatpush.msra.mxu0 0.0
  %1137 = vmatpush.msra.mxu0 0.0
  %1138 = vmatpush.msra.mxu0 0.0
  %1139 = vmatpush.msra.mxu0 0.0
  %1140 = vmatpush.msra.mxu0 0.0
  %1141 = vmatpush.msra.mxu0 0.0
  %1142 = vmatpush.msra.mxu0 0.0
  %1143 = vmatpush.msra.mxu0 0.0
  %1144 = vmatpush.msra.mxu0 0.0
  %1145 = vmatpush.msra.mxu0 0.0
  %1146 = vmatpush.msra.mxu0 0.0
  %1147 = vmatpush.msra.mxu0 0.0
  %1148 = vmatpush.msra.mxu0 %v82
  %1149 = vmatpush.msra.mxu0 %v80
  %1150 = vmatpush.msra.mxu0 %v78
  %1151 = vmatpush.msra.mxu0 %v76
  %1152 = vmatmul.f32.gmra.mxu0 %v1010
  %v1153 = vpop.f32.mrf.mxu0
  %v1154 = vadd.f32 0.0, %v1153
  %1155 = vmatmul.f32.gmra.mxu0 %v1013
  %v1156 = vpop.f32.mrf.mxu0
  %v1157 = vadd.f32 0.0, %v1156
  %1158 = vdwg.mxu0
  %v1160 = vsel %vm83, %v1154, 0
  %v1163 = vsel %vm83, %v1157, 0
  %1165 = vmatpush.msra.mxu0 %v1000
  %1166 = vmatpush.msra.mxu0 %v999
  %1167 = vmatpush.msra.mxu0 %v998
  %1168 = vmatpush.msra.mxu0 %v997
  %1169 = vmatpush.msra.mxu0 %v996
  %1170 = vmatpush.msra.mxu0 %v995
  %1171 = vmatpush.msra.mxu0 %v994
  %1172 = vmatpush.msra.mxu0 %v993
  %1173 = vmatpush.msra.mxu0 %v992
  %1174 = vmatpush.msra.mxu0 %v991
  %1175 = vmatpush.msra.mxu0 %v990
  %1176 = vmatpush.msra.mxu0 %v989
  %1177 = vmatpush.msra.mxu0 %v988
  %1178 = vmatpush.msra.mxu0 %v987
  %1179 = vmatpush.msra.mxu0 %v986
  %1180 = vmatpush.msra.mxu0 %v985
  %1181 = vmatmul.f32.gmra.mxu0 %v1131
  %v1182 = vpop.f32.mrf.mxu0
  %v1183 = vadd.f32 0.0, %v1182
  %1184 = vmatmul.f32.gmra.mxu0 %v1134
  %v1185 = vpop.f32.mrf.mxu0
  %v1186 = vadd.f32 0.0, %v1185
  %1187 = vdwg.mxu0
  %1188 = vmatpush.msra.mxu0 0.0
  %1189 = vmatpush.msra.mxu0 0.0
  %1190 = vmatpush.msra.mxu0 0.0
  %1191 = vmatpush.msra.mxu0 0.0
  %1192 = vmatpush.msra.mxu0 0.0
  %1193 = vmatpush.msra.mxu0 0.0
  %1194 = vmatpush.msra.mxu0 0.0
  %1195 = vmatpush.msra.mxu0 0.0
  %1196 = vmatpush.msra.mxu0 %v1008
  %1197 = vmatpush.msra.mxu0 %v1007
  %1198 = vmatpush.msra.mxu0 %v1006
  %1199 = vmatpush.msra.mxu0 %v1005
  %1200 = vmatpush.msra.mxu0 %v1004
  %1201 = vmatpush.msra.mxu0 %v1003
  %1202 = vmatpush.msra.mxu0 %v1002
  %1203 = vmatpush.msra.mxu0 %v1001
  %1204 = vmatmul.f32.gmra.mxu0 %v1160
  %v1205 = vpop.f32.mrf.mxu0
  %v1206 = vadd.f32 %v1183, %v1205
  %1207 = vmatmul.f32.gmra.mxu0 %v1163
  %v1208 = vpop.f32.mrf.mxu0
  %v1209 = vadd.f32 %v1186, %v1208
  %1210 = vdwg.mxu0
  %vm1211 = vcmask 785408
  %v1212 = vsel %vm1211, %v1108, -inf
  %v1213 = vsel %vm1211, %v1111, -inf
  %v1214 = vmax.f32 %v1212, %v1213
  %1215 = vmax.xlane.f32.xlu0 %v1214
  %v1216 = vpop.xlane.xlu0 %1215
  %v1217 = vrot.slane %v1216, 4
  %v1218 = vmax.f32 %v1216, %v1217
  %v1219 = vrot.slane %v1218, 2
  %v1220 = vmax.f32 %v1218, %v1219
  %v1221 = vrot.slane %v1220, 1
  %v1222 = vmax.f32 %v1220, %v1221
  %s1223 = vtos %v1222
  %v1224 = vsel %vm1211, %v1108, inf
  %v1225 = vsel %vm1211, %v1111, inf
  %v1226 = vmin.f32 %v1224, %v1225
  %1227 = vmin.xlane.f32.xlu0 %v1226
  %v1228 = vpop.xlane.xlu0 %1227
  %v1229 = vrot.slane %v1228, 4
  %v1230 = vmin.f32 %v1228, %v1229
  %v1231 = vrot.slane %v1230, 2
  %v1232 = vmin.f32 %v1230, %v1231
  %v1233 = vrot.slane %v1232, 1
  %v1234 = vmin.f32 %v1232, %v1233
  %s1235 = vtos %v1234
  %p1236 = scmp.gt.f32.partialorder %s1223, 128.0
  %s1237 = scalar_select %p1236, 255.0, 1.0
  %p1238 = scmp.lt.f32.partialorder %s1235, -0.5
  %s1239 = scalar_select %p1238, -1.0, 0.0
  %s1240 = ssub.f32 %s1237, %s1239
  %s1241 = smul.f32 %s1240, 0.01
  %s1242 = smul.f32 %s1241, %s1241
  %s1243 = smul.f32 %s1240, 0.03
  %s1244 = smul.f32 %s1243, %s1243
  %v1245 = vld [vmem:[%s3] sm:$0xff]
  %v1246 = vld [vmem:[%s3 + $0x8] sm:$0xff]
  %v1247 = vld [vmem:[%s3 + $0x10] sm:$0xff]
  %v1248 = vld [vmem:[%s3 + $0x18] sm:$0xff]
  %v1249 = vld [vmem:[%s3 + $0x20] sm:$0xff]
  %v1250 = vld [vmem:[%s8] sm:$0xff]
  %v1251 = vld [vmem:[%s8 + $0x8] sm:$0xff]
  %v1252 = vld [vmem:[%s8 + $0x10] sm:$0xff]
  %v1253 = vld [vmem:[%s8 + $0x18] sm:$0xff]
  %v1254 = vld [vmem:[%s8 + $0x20] sm:$0xff]
  %v1255 = vld [vmem:[%s8 + $0x28] sm:$0xff]
  %v1256 = vld [vmem:[%s8 + $0x30] sm:$0xff]
  %v1257 = vld [vmem:[%s8 + $0x38] sm:$0xff]
  %v1258 = vld [vmem:[%s8 + $0x40] sm:$0xff]
  %v1259 = vld [vmem:[%s8 + $0x48] sm:$0xff]
  %v1260 = vld [vmem:[%s8 + $0x50] sm:$0xff]
  %v1261 = vld [vmem:[%s8 + $0x58] sm:$0xff]
  %v1262 = vmul.f32 %v1108, %v1108
  %v1263 = vmul.f32 %v1111, %v1111
  %v1264 = vmul.f32 %v1206, %v1206
  %v1265 = vmul.f32 %v1209, %v1209
  %v1266 = vmul.f32 %v1108, %v1206
  %v1267 = vmul.f32 %v1111, %v1209
  %vm1268 = vcmask 654336
  %v1270 = vsel %vm1268, %v1245, 0
  %v1273 = vsel %vm1268, %v1246, 0
  %v1276 = vsel %vm1268, %v1247, 0
  %v1279 = vsel %vm1268, %v1248, 0
  %v1282 = vsel %vm1268, %v1249, 0
  %1284 = vmatpush.msra.mxu0 0.0
  %1285 = vmatpush.msra.mxu0 0.0
  %1286 = vmatpush.msra.mxu0 0.0
  %1287 = vmatpush.msra.mxu0 0.0
  %1288 = vmatpush.msra.mxu0 0.0
  %1289 = vmatpush.msra.mxu0 0.0
  %1290 = vmatpush.msra.mxu0 %v1267
  %1291 = vmatpush.msra.mxu0 %v1266
  %1292 = vmatpush.msra.mxu0 %v1265
  %1293 = vmatpush.msra.mxu0 %v1264
  %1294 = vmatpush.msra.mxu0 %v1263
  %1295 = vmatpush.msra.mxu0 %v1262
  %1296 = vmatpush.msra.mxu0 %v1209
  %1297 = vmatpush.msra.mxu0 %v1206
  %1298 = vmatpush.msra.mxu0 %v1111
  %1299 = vmatpush.msra.mxu0 %v1108
  %1300 = vmatmul.f32.gmra.mxu0 %v1270
  %v1301 = vpop.f32.mrf.mxu0
  %v1302 = vadd.f32 0.0, %v1301
  %1303 = vmatmul.f32.gmra.mxu0 %v1273
  %v1304 = vpop.f32.mrf.mxu0
  %v1305 = vadd.f32 0.0, %v1304
  %1306 = vmatmul.f32.gmra.mxu0 %v1276
  %v1307 = vpop.f32.mrf.mxu0
  %v1308 = vadd.f32 0.0, %v1307
  %1309 = vmatmul.f32.gmra.mxu0 %v1279
  %v1310 = vpop.f32.mrf.mxu0
  %v1311 = vadd.f32 0.0, %v1310
  %1312 = vmatmul.f32.gmra.mxu0 %v1282
  %v1313 = vpop.f32.mrf.mxu0
  %v1314 = vadd.f32 0.0, %v1313
  %1315 = vdwg.mxu0
  %v1317 = vsel %vm1211, %v1302, 0
  %v1320 = vsel %vm1211, %v1305, 0
  %v1323 = vsel %vm1211, %v1308, 0
  %v1326 = vsel %vm1211, %v1311, 0
  %v1329 = vsel %vm1211, %v1314, 0
  %1331 = vmatpush.msra.mxu0 0.0
  %1332 = vmatpush.msra.mxu0 0.0
  %1333 = vmatpush.msra.mxu0 0.0
  %1334 = vmatpush.msra.mxu0 0.0
  %1335 = vmatpush.msra.mxu0 %v1261
  %1336 = vmatpush.msra.mxu0 %v1260
  %1337 = vmatpush.msra.mxu0 %v1259
  %1338 = vmatpush.msra.mxu0 %v1258
  %1339 = vmatpush.msra.mxu0 %v1257
  %1340 = vmatpush.msra.mxu0 %v1256
  %1341 = vmatpush.msra.mxu0 %v1255
  %1342 = vmatpush.msra.mxu0 %v1254
  %1343 = vmatpush.msra.mxu0 %v1253
  %1344 = vmatpush.msra.mxu0 %v1252
  %1345 = vmatpush.msra.mxu0 %v1251
  %1346 = vmatpush.msra.mxu0 %v1250
  %1347 = vmatmul.f32.gmra.mxu0 %v1317
  %v1348 = vpop.f32.mrf.mxu0
  %v1349 = vadd.f32 0.0, %v1348
  %1350 = vmatmul.f32.gmra.mxu0 %v1320
  %v1351 = vpop.f32.mrf.mxu0
  %v1352 = vadd.f32 0.0, %v1351
  %1353 = vmatmul.f32.gmra.mxu0 %v1323
  %v1354 = vpop.f32.mrf.mxu0
  %v1355 = vadd.f32 0.0, %v1354
  %1356 = vmatmul.f32.gmra.mxu0 %v1326
  %v1357 = vpop.f32.mrf.mxu0
  %v1358 = vadd.f32 0.0, %v1357
  %1359 = vmatmul.f32.gmra.mxu0 %v1329
  %v1360 = vpop.f32.mrf.mxu0
  %v1361 = vadd.f32 0.0, %v1360
  %1362 = vdwg.mxu0
  %v1363 = vmul.f32 %v1349, %v1349
  %v1364 = vmul.f32 %v1352, %v1352
  %v1365 = vmul.f32 %v1349, %v1352
  %v1366 = vsub.f32 %v1355, %v1363
  %v1367 = vsub.f32 %v1358, %v1364
  %v1368 = vsub.f32 %v1361, %v1365
  %v1369 = vmul.f32 %v1368, 2.0
  %v1370 = vstv %s1244
  %v1371 = vadd.f32 %v1369, %v1370
  %v1372 = vadd.f32 %v1366, %v1367
  %v1373 = vadd.f32 %v1372, %v1370
  %v1374 = vrcp.pop %v1373
  %v1375 = vmul.f32 %v1371, %v1374
  %v1376 = vmul.f32 %v1365, 2.0
  %v1377 = vstv %s1242
  %v1378 = vadd.f32 %v1376, %v1377
  %v1379 = vadd.f32 %v1363, %v1364
  %v1380 = vadd.f32 %v1379, %v1377
  %v1381 = vrcp.pop %v1380
  %v1382 = vmul.f32 %v1378, %v1381
  %v1383 = vmul.f32 %v1375, %v1382
  %vm1384 = vcmask 291840
  %v1385 = vsel %vm1384, %v1383, 0.0
  %1386 = vadd.xlane.f32.xlu0 %v1385
  %v1387 = vpop.xlane.xlu0 %1386
  %v1388 = vrot.slane %v1387, 4
  %v1389 = vadd.f32 %v1387, %v1388
  %v1390 = vrot.slane %v1389, 2
  %v1391 = vadd.f32 %v1389, %v1390
  %v1392 = vrot.slane %v1391, 1
  %v1393 = vadd.f32 %v1391, %v1392
  %s1394 = vtos %v1393
  %s1395 = smul.f32 %s1394, 0.0046296297
  %v1396 = vsel %vm1384, %v1375, 0.0
  %1397 = vadd.xlane.f32.xlu0 %v1396
  %v1398 = vpop.xlane.xlu0 %1397
  %v1399 = vrot.slane %v1398, 4
  %v1400 = vadd.f32 %v1398, %v1399
  %v1401 = vrot.slane %v1400, 2
  %v1402 = vadd.f32 %v1400, %v1401
  %v1403 = vrot.slane %v1402, 1
  %v1404 = vadd.f32 %v1402, %v1403
  %s1405 = vtos %v1404
  %s1406 = smul.f32 %s1405, 0.0046296297
  %v1407 = vstv %s1395
  %1408 = vst [vmem:[%s20 + $0x1] sm:$0x1] %v1407
  %v1409 = vstv %s1406
  %1410 = vst [vmem:[%s21 + $0x1] sm:$0x1] %v1409
  %v1411 = vld [vmem:[%s13] sm:$0xff]
  %v1412 = vld [vmem:[%s17] sm:$0xff]
  %v1413 = vld [vmem:[%s17 + $0x8] sm:$0xff]
  %v1414 = vld [vmem:[%s17 + $0x10] sm:$0xff]
  %v1415 = vld [vmem:[%s17 + $0x18] sm:$0xff]
  %v1416 = vld [vmem:[%s17 + $0x20] sm:$0xff]
  %v1417 = vld [vmem:[%s17 + $0x28] sm:$0xff]
  %v1418 = vld [vmem:[%s17 + $0x30] sm:$0xff]
  %v1419 = vld [vmem:[%s17 + $0x38] sm:$0xff]
  %v1420 = vld [vmem:[%s17 + $0x40] sm:$0xff]
  %v1421 = vld [vmem:[%s17 + $0x48] sm:$0xff]
  %v1422 = vld [vmem:[%s17 + $0x50] sm:$0xff]
  %v1423 = vld [vmem:[%s17 + $0x58] sm:$0xff]
  %vm1424 = vcmask 130048
  %v1426 = vsel %vm1424, %v1411, 0
  %1428 = vmatpush.msra.mxu0 0.0
  %1429 = vmatpush.msra.mxu0 0.0
  %1430 = vmatpush.msra.mxu0 0.0
  %1431 = vmatpush.msra.mxu0 0.0
  %1432 = vmatpush.msra.mxu0 0.0
  %1433 = vmatpush.msra.mxu0 0.0
  %1434 = vmatpush.msra.mxu0 0.0
  %1435 = vmatpush.msra.mxu0 0.0
  %1436 = vmatpush.msra.mxu0 0.0
  %1437 = vmatpush.msra.mxu0 0.0
  %1438 = vmatpush.msra.mxu0 0.0
  %1439 = vmatpush.msra.mxu0 0.0
  %1440 = vmatpush.msra.mxu0 0.0
  %1441 = vmatpush.msra.mxu0 0.0
  %1442 = vmatpush.msra.mxu0 %v1111
  %1443 = vmatpush.msra.mxu0 %v1108
  %1444 = vmatmul.f32.gmra.mxu0 %v1426
  %v1445 = vpop.f32.mrf.mxu0
  %v1446 = vadd.f32 0.0, %v1445
  %1447 = vdwg.mxu0
  %v1449 = vsel %vm1211, %v1446, 0
  %1451 = vmatpush.msra.mxu0 0.0
  %1452 = vmatpush.msra.mxu0 0.0
  %1453 = vmatpush.msra.mxu0 0.0
  %1454 = vmatpush.msra.mxu0 0.0
  %1455 = vmatpush.msra.mxu0 %v1423
  %1456 = vmatpush.msra.mxu0 %v1422
  %1457 = vmatpush.msra.mxu0 %v1421
  %1458 = vmatpush.msra.mxu0 %v1420
  %1459 = vmatpush.msra.mxu0 %v1419
  %1460 = vmatpush.msra.mxu0 %v1418
  %1461 = vmatpush.msra.mxu0 %v1417
  %1462 = vmatpush.msra.mxu0 %v1416
  %1463 = vmatpush.msra.mxu0 %v1415
  %1464 = vmatpush.msra.mxu0 %v1414
  %1465 = vmatpush.msra.mxu0 %v1413
  %1466 = vmatpush.msra.mxu0 %v1412
  %1467 = vmatmul.f32.gmra.mxu0 %v1449
  %v1468 = vpop.f32.mrf.mxu0
  %v1469 = vadd.f32 0.0, %v1468
  %1470 = vdwg.mxu0
  %1471 = vmatpush.msra.mxu0 0.0
  %1472 = vmatpush.msra.mxu0 0.0
  %1473 = vmatpush.msra.mxu0 0.0
  %1474 = vmatpush.msra.mxu0 0.0
  %1475 = vmatpush.msra.mxu0 0.0
  %1476 = vmatpush.msra.mxu0 0.0
  %1477 = vmatpush.msra.mxu0 0.0
  %1478 = vmatpush.msra.mxu0 0.0
  %1479 = vmatpush.msra.mxu0 0.0
  %1480 = vmatpush.msra.mxu0 0.0
  %1481 = vmatpush.msra.mxu0 0.0
  %1482 = vmatpush.msra.mxu0 0.0
  %1483 = vmatpush.msra.mxu0 0.0
  %1484 = vmatpush.msra.mxu0 0.0
  %1485 = vmatpush.msra.mxu0 %v1209
  %1486 = vmatpush.msra.mxu0 %v1206
  %1487 = vmatmul.f32.gmra.mxu0 %v1426
  %v1488 = vpop.f32.mrf.mxu0
  %v1489 = vadd.f32 0.0, %v1488
  %1490 = vdwg.mxu0
  %v1492 = vsel %vm1211, %v1489, 0
  %1494 = vmatpush.msra.mxu0 0.0
  %1495 = vmatpush.msra.mxu0 0.0
  %1496 = vmatpush.msra.mxu0 0.0
  %1497 = vmatpush.msra.mxu0 0.0
  %1498 = vmatpush.msra.mxu0 %v1423
  %1499 = vmatpush.msra.mxu0 %v1422
  %1500 = vmatpush.msra.mxu0 %v1421
  %1501 = vmatpush.msra.mxu0 %v1420
  %1502 = vmatpush.msra.mxu0 %v1419
  %1503 = vmatpush.msra.mxu0 %v1418
  %1504 = vmatpush.msra.mxu0 %v1417
  %1505 = vmatpush.msra.mxu0 %v1416
  %1506 = vmatpush.msra.mxu0 %v1415
  %1507 = vmatpush.msra.mxu0 %v1414
  %1508 = vmatpush.msra.mxu0 %v1413
  %1509 = vmatpush.msra.mxu0 %v1412
  %1510 = vmatmul.f32.gmra.mxu0 %v1492
  %v1511 = vpop.f32.mrf.mxu0
  %v1512 = vadd.f32 0.0, %v1511
  %1513 = vdwg.mxu0
  %vm1514 = vcmask 392192
  %v1515 = vsel %vm1514, %v1469, -inf
  %1516 = vmax.xlane.f32.xlu0 %v1515
  %v1517 = vpop.xlane.xlu0 %1516
  %v1518 = vrot.slane %v1517, 4
  %v1519 = vmax.f32 %v1517, %v1518
  %v1520 = vrot.slane %v1519, 2
  %v1521 = vmax.f32 %v1519, %v1520
  %v1522 = vrot.slane %v1521, 1
  %v1523 = vmax.f32 %v1521, %v1522
  %s1524 = vtos %v1523
  %v1525 = vsel %vm1514, %v1469, inf
  %1526 = vmin.xlane.f32.xlu0 %v1525
  %v1527 = vpop.xlane.xlu0 %1526
  %v1528 = vrot.slane %v1527, 4
  %v1529 = vmin.f32 %v1527, %v1528
  %v1530 = vrot.slane %v1529, 2
  %v1531 = vmin.f32 %v1529, %v1530
  %v1532 = vrot.slane %v1531, 1
  %v1533 = vmin.f32 %v1531, %v1532
  %s1534 = vtos %v1533
  %p1535 = scmp.gt.f32.partialorder %s1524, 128.0
  %s1536 = scalar_select %p1535, 255.0, 1.0
  %p1537 = scmp.lt.f32.partialorder %s1534, -0.5
  %s1538 = scalar_select %p1537, -1.0, 0.0
  %s1539 = ssub.f32 %s1536, %s1538
  %s1540 = smul.f32 %s1539, 0.01
  %s1541 = smul.f32 %s1540, %s1540
  %s1542 = smul.f32 %s1539, 0.03
  %s1543 = smul.f32 %s1542, %s1542
  %v1544 = vld [vmem:[%s4] sm:$0xff]
  %v1545 = vld [vmem:[%s4 + $0x8] sm:$0xff]
  %v1546 = vld [vmem:[%s4 + $0x10] sm:$0xff]
  %v1547 = vld [vmem:[%s4 + $0x18] sm:$0xff]
  %v1548 = vld [vmem:[%s4 + $0x20] sm:$0xff]
  %v1549 = vld [vmem:[%s9] sm:$0xff]
  %v1550 = vld [vmem:[%s9 + $0x8] sm:$0xff]
  %v1551 = vld [vmem:[%s9 + $0x10] sm:$0xff]
  %v1552 = vld [vmem:[%s9 + $0x18] sm:$0xff]
  %v1553 = vld [vmem:[%s9 + $0x20] sm:$0xff]
  %v1554 = vld [vmem:[%s9 + $0x28] sm:$0xff]
  %v1555 = vmul.f32 %v1469, %v1469
  %v1556 = vmul.f32 %v1512, %v1512
  %v1557 = vmul.f32 %v1469, %v1512
  %vm1558 = vcmask 326656
  %v1560 = vsel %vm1558, %v1544, 0
  %v1563 = vsel %vm1558, %v1545, 0
  %v1566 = vsel %vm1558, %v1546, 0
  %v1569 = vsel %vm1558, %v1547, 0
  %v1572 = vsel %vm1558, %v1548, 0
  %1574 = vmatpush.msra.mxu0 0.0
  %1575 = vmatpush.msra.mxu0 0.0
  %1576 = vmatpush.msra.mxu0 0.0
  %1577 = vmatpush.msra.mxu0 0.0
  %1578 = vmatpush.msra.mxu0 0.0
  %1579 = vmatpush.msra.mxu0 0.0
  %1580 = vmatpush.msra.mxu0 0.0
  %1581 = vmatpush.msra.mxu0 0.0
  %1582 = vmatpush.msra.mxu0 0.0
  %1583 = vmatpush.msra.mxu0 0.0
  %1584 = vmatpush.msra.mxu0 0.0
  %1585 = vmatpush.msra.mxu0 %v1557
  %1586 = vmatpush.msra.mxu0 %v1556
  %1587 = vmatpush.msra.mxu0 %v1555
  %1588 = vmatpush.msra.mxu0 %v1512
  %1589 = vmatpush.msra.mxu0 %v1469
  %1590 = vmatmul.f32.gmra.mxu0 %v1560
  %v1591 = vpop.f32.mrf.mxu0
  %v1592 = vadd.f32 0.0, %v1591
  %1593 = vmatmul.f32.gmra.mxu0 %v1563
  %v1594 = vpop.f32.mrf.mxu0
  %v1595 = vadd.f32 0.0, %v1594
  %1596 = vmatmul.f32.gmra.mxu0 %v1566
  %v1597 = vpop.f32.mrf.mxu0
  %v1598 = vadd.f32 0.0, %v1597
  %1599 = vmatmul.f32.gmra.mxu0 %v1569
  %v1600 = vpop.f32.mrf.mxu0
  %v1601 = vadd.f32 0.0, %v1600
  %1602 = vmatmul.f32.gmra.mxu0 %v1572
  %v1603 = vpop.f32.mrf.mxu0
  %v1604 = vadd.f32 0.0, %v1603
  %1605 = vdwg.mxu0
  %v1607 = vsel %vm1514, %v1592, 0
  %v1610 = vsel %vm1514, %v1595, 0
  %v1613 = vsel %vm1514, %v1598, 0
  %v1616 = vsel %vm1514, %v1601, 0
  %v1619 = vsel %vm1514, %v1604, 0
  %1621 = vmatpush.msra.mxu0 0.0
  %1622 = vmatpush.msra.mxu0 0.0
  %1623 = vmatpush.msra.mxu0 0.0
  %1624 = vmatpush.msra.mxu0 0.0
  %1625 = vmatpush.msra.mxu0 0.0
  %1626 = vmatpush.msra.mxu0 0.0
  %1627 = vmatpush.msra.mxu0 0.0
  %1628 = vmatpush.msra.mxu0 0.0
  %1629 = vmatpush.msra.mxu0 0.0
  %1630 = vmatpush.msra.mxu0 0.0
  %1631 = vmatpush.msra.mxu0 %v1554
  %1632 = vmatpush.msra.mxu0 %v1553
  %1633 = vmatpush.msra.mxu0 %v1552
  %1634 = vmatpush.msra.mxu0 %v1551
  %1635 = vmatpush.msra.mxu0 %v1550
  %1636 = vmatpush.msra.mxu0 %v1549
  %1637 = vmatmul.f32.gmra.mxu0 %v1607
  %v1638 = vpop.f32.mrf.mxu0
  %v1639 = vadd.f32 0.0, %v1638
  %1640 = vmatmul.f32.gmra.mxu0 %v1610
  %v1641 = vpop.f32.mrf.mxu0
  %v1642 = vadd.f32 0.0, %v1641
  %1643 = vmatmul.f32.gmra.mxu0 %v1613
  %v1644 = vpop.f32.mrf.mxu0
  %v1645 = vadd.f32 0.0, %v1644
  %1646 = vmatmul.f32.gmra.mxu0 %v1616
  %v1647 = vpop.f32.mrf.mxu0
  %v1648 = vadd.f32 0.0, %v1647
  %1649 = vmatmul.f32.gmra.mxu0 %v1619
  %v1650 = vpop.f32.mrf.mxu0
  %v1651 = vadd.f32 0.0, %v1650
  %1652 = vdwg.mxu0
  %v1653 = vmul.f32 %v1639, %v1639
  %v1654 = vmul.f32 %v1642, %v1642
  %v1655 = vmul.f32 %v1639, %v1642
  %v1656 = vsub.f32 %v1645, %v1653
  %v1657 = vsub.f32 %v1648, %v1654
  %v1658 = vsub.f32 %v1651, %v1655
  %v1659 = vmul.f32 %v1658, 2.0
  %v1660 = vstv %s1543
  %v1661 = vadd.f32 %v1659, %v1660
  %v1662 = vadd.f32 %v1656, %v1657
  %v1663 = vadd.f32 %v1662, %v1660
  %v1664 = vrcp.pop %v1663
  %v1665 = vmul.f32 %v1661, %v1664
  %v1666 = vmul.f32 %v1655, 2.0
  %v1667 = vstv %s1541
  %v1668 = vadd.f32 %v1666, %v1667
  %v1669 = vadd.f32 %v1653, %v1654
  %v1670 = vadd.f32 %v1669, %v1667
  %v1671 = vrcp.pop %v1670
  %v1672 = vmul.f32 %v1668, %v1671
  %v1673 = vmul.f32 %v1665, %v1672
  %vm1674 = vcmask 40960
  %v1675 = vsel %vm1674, %v1673, 0.0
  %1676 = vadd.xlane.f32.xlu0 %v1675
  %v1677 = vpop.xlane.xlu0 %1676
  %v1678 = vrot.slane %v1677, 4
  %v1679 = vadd.f32 %v1677, %v1678
  %v1680 = vrot.slane %v1679, 2
  %v1681 = vadd.f32 %v1679, %v1680
  %v1682 = vrot.slane %v1681, 1
  %v1683 = vadd.f32 %v1681, %v1682
  %s1684 = vtos %v1683
  %s1685 = smul.f32 %s1684, 0.16666667
  %v1686 = vsel %vm1674, %v1665, 0.0
  %1687 = vadd.xlane.f32.xlu0 %v1686
  %v1688 = vpop.xlane.xlu0 %1687
  %v1689 = vrot.slane %v1688, 4
  %v1690 = vadd.f32 %v1688, %v1689
  %v1691 = vrot.slane %v1690, 2
  %v1692 = vadd.f32 %v1690, %v1691
  %v1693 = vrot.slane %v1692, 1
  %v1694 = vadd.f32 %v1692, %v1693
  %s1695 = vtos %v1694
  %s1696 = smul.f32 %s1695, 0.16666667
  %v1697 = vstv %s1685
  %1698 = vst [vmem:[%s20 + $0x2] sm:$0x1] %v1697
  %v1699 = vstv %s1696
  %1700 = vst [vmem:[%s21 + $0x2] sm:$0x1] %v1699
  %v1701 = vld [vmem:[%s14] sm:$0xf]
  %v1702 = vld [vmem:[%s18] sm:$0xff]
  %v1703 = vld [vmem:[%s18 + $0x8] sm:$0xff]
  %v1704 = vld [vmem:[%s18 + $0x10] sm:$0xff]
  %v1705 = vld [vmem:[%s18 + $0x18] sm:$0xff]
  %v1706 = vld [vmem:[%s18 + $0x20] sm:$0xff]
  %v1707 = vld [vmem:[%s18 + $0x28] sm:$0xff]
  %vm1708 = vcmask 64512
  %v1710 = vsel %vm1708, %v1701, 0
  %1712 = vmatpush.msra.mxu0 0.0
  %1713 = vmatpush.msra.mxu0 0.0
  %1714 = vmatpush.msra.mxu0 0.0
  %1715 = vmatpush.msra.mxu0 0.0
  %1716 = vmatpush.msra.mxu0 0.0
  %1717 = vmatpush.msra.mxu0 0.0
  %1718 = vmatpush.msra.mxu0 0.0
  %1719 = vmatpush.msra.mxu0 0.0
  %1720 = vmatpush.msra.mxu0 0.0
  %1721 = vmatpush.msra.mxu0 0.0
  %1722 = vmatpush.msra.mxu0 0.0
  %1723 = vmatpush.msra.mxu0 0.0
  %1724 = vmatpush.msra.mxu0 0.0
  %1725 = vmatpush.msra.mxu0 0.0
  %1726 = vmatpush.msra.mxu0 0.0
  %1727 = vmatpush.msra.mxu0 %v1469
  %1728 = vmatmul.f32.gmra.mxu0 %v1710
  %v1729 = vpop.f32.mrf.mxu0
  %v1730 = vadd.f32 0.0, %v1729
  %1731 = vdwg.mxu0
  %v1733 = vsel %vm1514, %v1730, 0
  %1735 = vmatpush.msra.mxu0 0.0
  %1736 = vmatpush.msra.mxu0 0.0
  %1737 = vmatpush.msra.mxu0 0.0
  %1738 = vmatpush.msra.mxu0 0.0
  %1739 = vmatpush.msra.mxu0 0.0
  %1740 = vmatpush.msra.mxu0 0.0
  %1741 = vmatpush.msra.mxu0 0.0
  %1742 = vmatpush.msra.mxu0 0.0
  %1743 = vmatpush.msra.mxu0 0.0
  %1744 = vmatpush.msra.mxu0 0.0
  %1745 = vmatpush.msra.mxu0 %v1707
  %1746 = vmatpush.msra.mxu0 %v1706
  %1747 = vmatpush.msra.mxu0 %v1705
  %1748 = vmatpush.msra.mxu0 %v1704
  %1749 = vmatpush.msra.mxu0 %v1703
  %1750 = vmatpush.msra.mxu0 %v1702
  %1751 = vmatmul.f32.gmra.mxu0 %v1733
  %v1752 = vpop.f32.mrf.mxu0
  %v1753 = vadd.f32 0.0, %v1752
  %1754 = vdwg.mxu0
  %1755 = vmatpush.msra.mxu0 0.0
  %1756 = vmatpush.msra.mxu0 0.0
  %1757 = vmatpush.msra.mxu0 0.0
  %1758 = vmatpush.msra.mxu0 0.0
  %1759 = vmatpush.msra.mxu0 0.0
  %1760 = vmatpush.msra.mxu0 0.0
  %1761 = vmatpush.msra.mxu0 0.0
  %1762 = vmatpush.msra.mxu0 0.0
  %1763 = vmatpush.msra.mxu0 0.0
  %1764 = vmatpush.msra.mxu0 0.0
  %1765 = vmatpush.msra.mxu0 0.0
  %1766 = vmatpush.msra.mxu0 0.0
  %1767 = vmatpush.msra.mxu0 0.0
  %1768 = vmatpush.msra.mxu0 0.0
  %1769 = vmatpush.msra.mxu0 0.0
  %1770 = vmatpush.msra.mxu0 %v1512
  %1771 = vmatmul.f32.gmra.mxu0 %v1710
  %v1772 = vpop.f32.mrf.mxu0
  %v1773 = vadd.f32 0.0, %v1772
  %1774 = vdwg.mxu0
  %v1776 = vsel %vm1514, %v1773, 0
  %1778 = vmatpush.msra.mxu0 0.0
  %1779 = vmatpush.msra.mxu0 0.0
  %1780 = vmatpush.msra.mxu0 0.0
  %1781 = vmatpush.msra.mxu0 0.0
  %1782 = vmatpush.msra.mxu0 0.0
  %1783 = vmatpush.msra.mxu0 0.0
  %1784 = vmatpush.msra.mxu0 0.0
  %1785 = vmatpush.msra.mxu0 0.0
  %1786 = vmatpush.msra.mxu0 0.0
  %1787 = vmatpush.msra.mxu0 0.0
  %1788 = vmatpush.msra.mxu0 %v1707
  %1789 = vmatpush.msra.mxu0 %v1706
  %1790 = vmatpush.msra.mxu0 %v1705
  %1791 = vmatpush.msra.mxu0 %v1704
  %1792 = vmatpush.msra.mxu0 %v1703
  %1793 = vmatpush.msra.mxu0 %v1702
  %1794 = vmatmul.f32.gmra.mxu0 %v1776
  %v1795 = vpop.f32.mrf.mxu0
  %v1796 = vadd.f32 0.0, %v1795
  %1797 = vdwg.mxu0
  %vm1798 = vcmask 191488
  %v1799 = vsel %vm1798, %v1753, -inf
  %1800 = vmax.xlane.f32.xlu0 %v1799
  %v1801 = vpop.xlane.xlu0 %1800
  %v1802 = vrot.slane %v1801, 4
  %v1803 = vmax.f32 %v1801, %v1802
  %v1804 = vrot.slane %v1803, 2
  %v1805 = vmax.f32 %v1803, %v1804
  %v1806 = vrot.slane %v1805, 1
  %v1807 = vmax.f32 %v1805, %v1806
  %s1808 = vtos %v1807
  %v1809 = vsel %vm1798, %v1753, inf
  %1810 = vmin.xlane.f32.xlu0 %v1809
  %v1811 = vpop.xlane.xlu0 %1810
  %v1812 = vrot.slane %v1811, 4
  %v1813 = vmin.f32 %v1811, %v1812
  %v1814 = vrot.slane %v1813, 2
  %v1815 = vmin.f32 %v1813, %v1814
  %v1816 = vrot.slane %v1815, 1
  %v1817 = vmin.f32 %v1815, %v1816
  %s1818 = vtos %v1817
  %p1819 = scmp.gt.f32.partialorder %s1808, 128.0
  %s1820 = scalar_select %p1819, 255.0, 1.0
  %p1821 = scmp.lt.f32.partialorder %s1818, -0.5
  %s1822 = scalar_select %p1821, -1.0, 0.0
  %s1823 = ssub.f32 %s1820, %s1822
  %s1824 = smul.f32 %s1823, 0.01
  %s1825 = smul.f32 %s1824, %s1824
  %s1826 = smul.f32 %s1823, 0.03
  %s1827 = smul.f32 %s1826, %s1826
  %v1828 = vld [vmem:[%s5] sm:$0x1]
  %v1829 = vld [vmem:[%s10] sm:$0xff]
  %v1830 = vld [vmem:[%s10 + $0x8] sm:$0xff]
  %v1831 = vld [vmem:[%s10 + $0x10] sm:$0xff]
  %v1833 = vsel %vm938, %v1828, 0
  %vm1835 = vcmask 1043456
  %v1837 = vsel %vm1835, %v1753, 0
  %1839 = vmatpush.msra.mxu0 0.0
  %1840 = vmatpush.msra.mxu0 0.0
  %1841 = vmatpush.msra.mxu0 0.0
  %1842 = vmatpush.msra.mxu0 0.0
  %1843 = vmatpush.msra.mxu0 0.0
  %1844 = vmatpush.msra.mxu0 0.0
  %1845 = vmatpush.msra.mxu0 0.0
  %1846 = vmatpush.msra.mxu0 0.0
  %1847 = vmatpush.msra.mxu0 0.0
  %1848 = vmatpush.msra.mxu0 0.0
  %1849 = vmatpush.msra.mxu0 0.0
  %1850 = vmatpush.msra.mxu0 0.0
  %1851 = vmatpush.msra.mxu0 0.0
  %1852 = vmatpush.msra.mxu0 0.0
  %1853 = vmatpush.msra.mxu0 0.0
  %1854 = vmatpush.msra.mxu0 %v1837
  %1855 = vmatmul.f32.gmra.mxu0 %v1833
  %v1856 = vpop.f32.mrf.mxu0
  %v1857 = vadd.f32 0.0, %v1856
  %1858 = vdwg.mxu0
  %vm1859 = vcmask 195584
  %v1861 = vsel %vm1859, %v1857, 0
  %1863 = vmatpush.msra.mxu0 0.0
  %1864 = vmatpush.msra.mxu0 0.0
  %1865 = vmatpush.msra.mxu0 0.0
  %1866 = vmatpush.msra.mxu0 0.0
  %1867 = vmatpush.msra.mxu0 0.0
  %1868 = vmatpush.msra.mxu0 0.0
  %1869 = vmatpush.msra.mxu0 0.0
  %1870 = vmatpush.msra.mxu0 0.0
  %1871 = vmatpush.msra.mxu0 0.0
  %1872 = vmatpush.msra.mxu0 0.0
  %1873 = vmatpush.msra.mxu0 0.0
  %1874 = vmatpush.msra.mxu0 0.0
  %1875 = vmatpush.msra.mxu0 0.0
  %1876 = vmatpush.msra.mxu0 %v1831
  %1877 = vmatpush.msra.mxu0 %v1830
  %1878 = vmatpush.msra.mxu0 %v1829
  %1879 = vmatmul.f32.gmra.mxu0 %v1861
  %v1880 = vpop.f32.mrf.mxu0
  %v1881 = vadd.f32 0.0, %v1880
  %1882 = vdwg.mxu0
  %v1884 = vsel %vm1835, %v1796, 0
  %1886 = vmatpush.msra.mxu0 0.0
  %1887 = vmatpush.msra.mxu0 0.0
  %1888 = vmatpush.msra.mxu0 0.0
  %1889 = vmatpush.msra.mxu0 0.0
  %1890 = vmatpush.msra.mxu0 0.0
  %1891 = vmatpush.msra.mxu0 0.0
  %1892 = vmatpush.msra.mxu0 0.0
  %1893 = vmatpush.msra.mxu0 0.0
  %1894 = vmatpush.msra.mxu0 0.0
  %1895 = vmatpush.msra.mxu0 0.0
  %1896 = vmatpush.msra.mxu0 0.0
  %1897 = vmatpush.msra.mxu0 0.0
  %1898 = vmatpush.msra.mxu0 0.0
  %1899 = vmatpush.msra.mxu0 0.0
  %1900 = vmatpush.msra.mxu0 0.0
  %1901 = vmatpush.msra.mxu0 %v1884
  %1902 = vmatmul.f32.gmra.mxu0 %v1833
  %v1903 = vpop.f32.mrf.mxu0
  %v1904 = vadd.f32 0.0, %v1903
  %1905 = vdwg.mxu0
  %v1907 = vsel %vm1859, %v1904, 0
  %1909 = vmatpush.msra.mxu0 0.0
  %1910 = vmatpush.msra.mxu0 0.0
  %1911 = vmatpush.msra.mxu0 0.0
  %1912 = vmatpush.msra.mxu0 0.0
  %1913 = vmatpush.msra.mxu0 0.0
  %1914 = vmatpush.msra.mxu0 0.0
  %1915 = vmatpush.msra.mxu0 0.0
  %1916 = vmatpush.msra.mxu0 0.0
  %1917 = vmatpush.msra.mxu0 0.0
  %1918 = vmatpush.msra.mxu0 0.0
  %1919 = vmatpush.msra.mxu0 0.0
  %1920 = vmatpush.msra.mxu0 0.0
  %1921 = vmatpush.msra.mxu0 0.0
  %1922 = vmatpush.msra.mxu0 %v1831
  %1923 = vmatpush.msra.mxu0 %v1830
  %1924 = vmatpush.msra.mxu0 %v1829
  %1925 = vmatmul.f32.gmra.mxu0 %v1907
  %v1926 = vpop.f32.mrf.mxu0
  %v1927 = vadd.f32 0.0, %v1926
  %1928 = vdwg.mxu0
  %v1929 = vmul.f32 %v1753, %v1753
  %v1931 = vsel %vm1835, %v1929, 0
  %1933 = vmatpush.msra.mxu0 0.0
  %1934 = vmatpush.msra.mxu0 0.0
  %1935 = vmatpush.msra.mxu0 0.0
  %1936 = vmatpush.msra.mxu0 0.0
  %1937 = vmatpush.msra.mxu0 0.0
  %1938 = vmatpush.msra.mxu0 0.0
  %1939 = vmatpush.msra.mxu0 0.0
  %1940 = vmatpush.msra.mxu0 0.0
  %1941 = vmatpush.msra.mxu0 0.0
  %1942 = vmatpush.msra.mxu0 0.0
  %1943 = vmatpush.msra.mxu0 0.0
  %1944 = vmatpush.msra.mxu0 0.0
  %1945 = vmatpush.msra.mxu0 0.0
  %1946 = vmatpush.msra.mxu0 0.0
  %1947 = vmatpush.msra.mxu0 0.0
  %1948 = vmatpush.msra.mxu0 %v1931
  %1949 = vmatmul.f32.gmra.mxu0 %v1833
  %v1950 = vpop.f32.mrf.mxu0
  %v1951 = vadd.f32 0.0, %v1950
  %1952 = vdwg.mxu0
  %v1954 = vsel %vm1859, %v1951, 0
  %1956 = vmatpush.msra.mxu0 0.0
  %1957 = vmatpush.msra.mxu0 0.0
  %1958 = vmatpush.msra.mxu0 0.0
  %1959 = vmatpush.msra.mxu0 0.0
  %1960 = vmatpush.msra.mxu0 0.0
  %1961 = vmatpush.msra.mxu0 0.0
  %1962 = vmatpush.msra.mxu0 0.0
  %1963 = vmatpush.msra.mxu0 0.0
  %1964 = vmatpush.msra.mxu0 0.0
  %1965 = vmatpush.msra.mxu0 0.0
  %1966 = vmatpush.msra.mxu0 0.0
  %1967 = vmatpush.msra.mxu0 0.0
  %1968 = vmatpush.msra.mxu0 0.0
  %1969 = vmatpush.msra.mxu0 %v1831
  %1970 = vmatpush.msra.mxu0 %v1830
  %1971 = vmatpush.msra.mxu0 %v1829
  %1972 = vmatmul.f32.gmra.mxu0 %v1954
  %v1973 = vpop.f32.mrf.mxu0
  %v1974 = vadd.f32 0.0, %v1973
  %1975 = vdwg.mxu0
  %v1976 = vmul.f32 %v1796, %v1796
  %v1978 = vsel %vm1835, %v1976, 0
  %1980 = vmatpush.msra.mxu0 0.0
  %1981 = vmatpush.msra.mxu0 0.0
  %1982 = vmatpush.msra.mxu0 0.0
  %1983 = vmatpush.msra.mxu0 0.0
  %1984 = vmatpush.msra.mxu0 0.0
  %1985 = vmatpush.msra.mxu0 0.0
  %1986 = vmatpush.msra.mxu0 0.0
  %1987 = vmatpush.msra.mxu0 0.0
  %1988 = vmatpush.msra.mxu0 0.0
  %1989 = vmatpush.msra.mxu0 0.0
  %1990 = vmatpush.msra.mxu0 0.0
  %1991 = vmatpush.msra.mxu0 0.0
  %1992 = vmatpush.msra.mxu0 0.0
  %1993 = vmatpush.msra.mxu0 0.0
  %1994 = vmatpush.msra.mxu0 0.0
  %1995 = vmatpush.msra.mxu0 %v1978
  %1996 = vmatmul.f32.gmra.mxu0 %v1833
  %v1997 = vpop.f32.mrf.mxu0
  %v1998 = vadd.f32 0.0, %v1997
  %1999 = vdwg.mxu0
  %v2001 = vsel %vm1859, %v1998, 0
  %2003 = vmatpush.msra.mxu0 0.0
  %2004 = vmatpush.msra.mxu0 0.0
  %2005 = vmatpush.msra.mxu0 0.0
  %2006 = vmatpush.msra.mxu0 0.0
  %2007 = vmatpush.msra.mxu0 0.0
  %2008 = vmatpush.msra.mxu0 0.0
  %2009 = vmatpush.msra.mxu0 0.0
  %2010 = vmatpush.msra.mxu0 0.0
  %2011 = vmatpush.msra.mxu0 0.0
  %2012 = vmatpush.msra.mxu0 0.0
  %2013 = vmatpush.msra.mxu0 0.0
  %2014 = vmatpush.msra.mxu0 0.0
  %2015 = vmatpush.msra.mxu0 0.0
  %2016 = vmatpush.msra.mxu0 %v1831
  %2017 = vmatpush.msra.mxu0 %v1830
  %2018 = vmatpush.msra.mxu0 %v1829
  %2019 = vmatmul.f32.gmra.mxu0 %v2001
  %v2020 = vpop.f32.mrf.mxu0
  %v2021 = vadd.f32 0.0, %v2020
  %2022 = vdwg.mxu0
  %v2023 = vmul.f32 %v1753, %v1796
  %v2025 = vsel %vm1835, %v2023, 0
  %2027 = vmatpush.msra.mxu0 0.0
  %2028 = vmatpush.msra.mxu0 0.0
  %2029 = vmatpush.msra.mxu0 0.0
  %2030 = vmatpush.msra.mxu0 0.0
  %2031 = vmatpush.msra.mxu0 0.0
  %2032 = vmatpush.msra.mxu0 0.0
  %2033 = vmatpush.msra.mxu0 0.0
  %2034 = vmatpush.msra.mxu0 0.0
  %2035 = vmatpush.msra.mxu0 0.0
  %2036 = vmatpush.msra.mxu0 0.0
  %2037 = vmatpush.msra.mxu0 0.0
  %2038 = vmatpush.msra.mxu0 0.0
  %2039 = vmatpush.msra.mxu0 0.0
  %2040 = vmatpush.msra.mxu0 0.0
  %2041 = vmatpush.msra.mxu0 0.0
  %2042 = vmatpush.msra.mxu0 %v2025
  %2043 = vmatmul.f32.gmra.mxu0 %v1833
  %v2044 = vpop.f32.mrf.mxu0
  %v2045 = vadd.f32 0.0, %v2044
  %2046 = vdwg.mxu0
  %v2048 = vsel %vm1859, %v2045, 0
  %2050 = vmatpush.msra.mxu0 0.0
  %2051 = vmatpush.msra.mxu0 0.0
  %2052 = vmatpush.msra.mxu0 0.0
  %2053 = vmatpush.msra.mxu0 0.0
  %2054 = vmatpush.msra.mxu0 0.0
  %2055 = vmatpush.msra.mxu0 0.0
  %2056 = vmatpush.msra.mxu0 0.0
  %2057 = vmatpush.msra.mxu0 0.0
  %2058 = vmatpush.msra.mxu0 0.0
  %2059 = vmatpush.msra.mxu0 0.0
  %2060 = vmatpush.msra.mxu0 0.0
  %2061 = vmatpush.msra.mxu0 0.0
  %2062 = vmatpush.msra.mxu0 0.0
  %2063 = vmatpush.msra.mxu0 %v1831
  %2064 = vmatpush.msra.mxu0 %v1830
  %2065 = vmatpush.msra.mxu0 %v1829
  %2066 = vmatmul.f32.gmra.mxu0 %v2048
  %v2067 = vpop.f32.mrf.mxu0
  %v2068 = vadd.f32 0.0, %v2067
  %2069 = vdwg.mxu0
  %v2070 = vmul.f32 %v1881, %v1881
  %v2071 = vmul.f32 %v1927, %v1927
  %v2072 = vmul.f32 %v1881, %v1927
  %v2073 = vsub.f32 %v1974, %v2070
  %v2074 = vsub.f32 %v2021, %v2071
  %v2075 = vsub.f32 %v2068, %v2072
  %v2076 = vmul.f32 %v2075, 2.0
  %v2077 = vstv %s1827
  %v2078 = vadd.f32 %v2076, %v2077
  %v2079 = vadd.f32 %v2073, %v2074
  %v2080 = vadd.f32 %v2079, %v2077
  %v2081 = vrcp.pop %v2080
  %v2082 = vmul.f32 %v2078, %v2081
  %v2083 = vmul.f32 %v2072, 2.0
  %v2084 = vstv %s1825
  %v2085 = vadd.f32 %v2083, %v2084
  %v2086 = vadd.f32 %v2070, %v2071
  %v2087 = vadd.f32 %v2086, %v2084
  %v2088 = vrcp.pop %v2087
  %v2089 = vmul.f32 %v2085, %v2088
  %v2090 = vmul.f32 %v2082, %v2089
  %v2091 = vsel %vm1674, %v2090, 0.0
  %2092 = vadd.xlane.f32.xlu0 %v2091
  %v2093 = vpop.xlane.xlu0 %2092
  %v2094 = vrot.slane %v2093, 4
  %v2095 = vadd.f32 %v2093, %v2094
  %v2096 = vrot.slane %v2095, 2
  %v2097 = vadd.f32 %v2095, %v2096
  %v2098 = vrot.slane %v2097, 1
  %v2099 = vadd.f32 %v2097, %v2098
  %s2100 = vtos %v2099
  %s2101 = smul.f32 %s2100, 0.16666667
  %v2102 = vsel %vm1674, %v2082, 0.0
  %2103 = vadd.xlane.f32.xlu0 %v2102
  %v2104 = vpop.xlane.xlu0 %2103
  %v2105 = vrot.slane %v2104, 4
  %v2106 = vadd.f32 %v2104, %v2105
  %v2107 = vrot.slane %v2106, 2
  %v2108 = vadd.f32 %v2106, %v2107
  %v2109 = vrot.slane %v2108, 1
  %v2110 = vadd.f32 %v2108, %v2109
  %s2111 = vtos %v2110
  %s2112 = smul.f32 %s2111, 0.16666667
  %v2113 = vstv %s2101
  %2114 = vst [vmem:[%s20 + $0x3] sm:$0x1] %v2113
  %v2115 = vstv %s2112
  %2116 = vst [vmem:[%s21 + $0x3] sm:$0x1] %v2115
  %v2117 = vld [vmem:[%s15] sm:$0x3]
  %v2118 = vld [vmem:[%s19] sm:$0xff]
  %v2119 = vld [vmem:[%s19 + $0x8] sm:$0xff]
  %v2120 = vld [vmem:[%s19 + $0x10] sm:$0xff]
  %v2122 = vsel %vm938, %v2117, 0
  %2124 = vmatpush.msra.mxu0 0.0
  %2125 = vmatpush.msra.mxu0 0.0
  %2126 = vmatpush.msra.mxu0 0.0
  %2127 = vmatpush.msra.mxu0 0.0
  %2128 = vmatpush.msra.mxu0 0.0
  %2129 = vmatpush.msra.mxu0 0.0
  %2130 = vmatpush.msra.mxu0 0.0
  %2131 = vmatpush.msra.mxu0 0.0
  %2132 = vmatpush.msra.mxu0 0.0
  %2133 = vmatpush.msra.mxu0 0.0
  %2134 = vmatpush.msra.mxu0 0.0
  %2135 = vmatpush.msra.mxu0 0.0
  %2136 = vmatpush.msra.mxu0 0.0
  %2137 = vmatpush.msra.mxu0 0.0
  %2138 = vmatpush.msra.mxu0 0.0
  %2139 = vmatpush.msra.mxu0 %v1837
  %2140 = vmatmul.f32.gmra.mxu0 %v2122
  %v2141 = vpop.f32.mrf.mxu0
  %v2142 = vadd.f32 0.0, %v2141
  %2143 = vdwg.mxu0
  %v2145 = vsel %vm1859, %v2142, 0
  %2147 = vmatpush.msra.mxu0 0.0
  %2148 = vmatpush.msra.mxu0 0.0
  %2149 = vmatpush.msra.mxu0 0.0
  %2150 = vmatpush.msra.mxu0 0.0
  %2151 = vmatpush.msra.mxu0 0.0
  %2152 = vmatpush.msra.mxu0 0.0
  %2153 = vmatpush.msra.mxu0 0.0
  %2154 = vmatpush.msra.mxu0 0.0
  %2155 = vmatpush.msra.mxu0 0.0
  %2156 = vmatpush.msra.mxu0 0.0
  %2157 = vmatpush.msra.mxu0 0.0
  %2158 = vmatpush.msra.mxu0 0.0
  %2159 = vmatpush.msra.mxu0 0.0
  %2160 = vmatpush.msra.mxu0 %v2120
  %2161 = vmatpush.msra.mxu0 %v2119
  %2162 = vmatpush.msra.mxu0 %v2118
  %2163 = vmatmul.f32.gmra.mxu0 %v2145
  %v2164 = vpop.f32.mrf.mxu0
  %v2165 = vadd.f32 0.0, %v2164
  %2166 = vdwg.mxu0
  %2167 = vmatpush.msra.mxu0 0.0
  %2168 = vmatpush.msra.mxu0 0.0
  %2169 = vmatpush.msra.mxu0 0.0
  %2170 = vmatpush.msra.mxu0 0.0
  %2171 = vmatpush.msra.mxu0 0.0
  %2172 = vmatpush.msra.mxu0 0.0
  %2173 = vmatpush.msra.mxu0 0.0
  %2174 = vmatpush.msra.mxu0 0.0
  %2175 = vmatpush.msra.mxu0 0.0
  %2176 = vmatpush.msra.mxu0 0.0
  %2177 = vmatpush.msra.mxu0 0.0
  %2178 = vmatpush.msra.mxu0 0.0
  %2179 = vmatpush.msra.mxu0 0.0
  %2180 = vmatpush.msra.mxu0 0.0
  %2181 = vmatpush.msra.mxu0 0.0
  %2182 = vmatpush.msra.mxu0 %v1884
  %2183 = vmatmul.f32.gmra.mxu0 %v2122
  %v2184 = vpop.f32.mrf.mxu0
  %v2185 = vadd.f32 0.0, %v2184
  %2186 = vdwg.mxu0
  %v2188 = vsel %vm1859, %v2185, 0
  %2190 = vmatpush.msra.mxu0 0.0
  %2191 = vmatpush.msra.mxu0 0.0
  %2192 = vmatpush.msra.mxu0 0.0
  %2193 = vmatpush.msra.mxu0 0.0
  %2194 = vmatpush.msra.mxu0 0.0
  %2195 = vmatpush.msra.mxu0 0.0
  %2196 = vmatpush.msra.mxu0 0.0
  %2197 = vmatpush.msra.mxu0 0.0
  %2198 = vmatpush.msra.mxu0 0.0
  %2199 = vmatpush.msra.mxu0 0.0
  %2200 = vmatpush.msra.mxu0 0.0
  %2201 = vmatpush.msra.mxu0 0.0
  %2202 = vmatpush.msra.mxu0 0.0
  %2203 = vmatpush.msra.mxu0 %v2120
  %2204 = vmatpush.msra.mxu0 %v2119
  %2205 = vmatpush.msra.mxu0 %v2118
  %2206 = vmatmul.f32.gmra.mxu0 %v2188
  %v2207 = vpop.f32.mrf.mxu0
  %v2208 = vadd.f32 0.0, %v2207
  %2209 = vdwg.mxu0
  %vm2210 = vcmask 91136
  %v2211 = vsel %vm2210, %v2165, -inf
  %2212 = vmax.xlane.f32.xlu0 %v2211
  %v2213 = vpop.xlane.xlu0 %2212
  %v2214 = vrot.slane %v2213, 4
  %v2215 = vmax.f32 %v2213, %v2214
  %v2216 = vrot.slane %v2215, 2
  %v2217 = vmax.f32 %v2215, %v2216
  %v2218 = vrot.slane %v2217, 1
  %v2219 = vmax.f32 %v2217, %v2218
  %s2220 = vtos %v2219
  %v2221 = vsel %vm2210, %v2165, inf
  %2222 = vmin.xlane.f32.xlu0 %v2221
  %v2223 = vpop.xlane.xlu0 %2222
  %v2224 = vrot.slane %v2223, 4
  %v2225 = vmin.f32 %v2223, %v2224
  %v2226 = vrot.slane %v2225, 2
  %v2227 = vmin.f32 %v2225, %v2226
  %v2228 = vrot.slane %v2227, 1
  %v2229 = vmin.f32 %v2227, %v2228
  %s2230 = vtos %v2229
  %p2231 = scmp.gt.f32.partialorder %s2220, 128.0
  %s2232 = scalar_select %p2231, 255.0, 1.0
  %p2233 = scmp.lt.f32.partialorder %s2230, -0.5
  %s2234 = scalar_select %p2233, -1.0, 0.0
  %s2235 = ssub.f32 %s2232, %s2234
  %s2236 = smul.f32 %s2235, 0.01
  %s2237 = smul.f32 %s2236, %s2236
  %s2238 = smul.f32 %s2235, 0.03
  %s2239 = smul.f32 %s2238, %s2238
  %v2240 = vld [vmem:[%s6] sm:$0x1]
  %v2241 = vld [vmem:[%s11] sm:$0xff]
  %v2242 = vld [vmem:[%s11 + $0x8] sm:$0xf]
  %vm2243 = vcmask 15360
  %v2245 = vsel %vm2243, %v2240, 0
  %vm2247 = vcmask 1041408
  %v2249 = vsel %vm2247, %v2165, 0
  %2251 = vmatpush.msra.mxu0 0.0
  %2252 = vmatpush.msra.mxu0 0.0
  %2253 = vmatpush.msra.mxu0 0.0
  %2254 = vmatpush.msra.mxu0 0.0
  %2255 = vmatpush.msra.mxu0 0.0
  %2256 = vmatpush.msra.mxu0 0.0
  %2257 = vmatpush.msra.mxu0 0.0
  %2258 = vmatpush.msra.mxu0 0.0
  %2259 = vmatpush.msra.mxu0 0.0
  %2260 = vmatpush.msra.mxu0 0.0
  %2261 = vmatpush.msra.mxu0 0.0
  %2262 = vmatpush.msra.mxu0 0.0
  %2263 = vmatpush.msra.mxu0 0.0
  %2264 = vmatpush.msra.mxu0 0.0
  %2265 = vmatpush.msra.mxu0 0.0
  %2266 = vmatpush.msra.mxu0 %v2249
  %2267 = vmatmul.f32.gmra.mxu0 %v2245
  %v2268 = vpop.f32.mrf.mxu0
  %v2269 = vadd.f32 0.0, %v2268
  %2270 = vdwg.mxu0
  %vm2271 = vcmask 97280
  %v2273 = vsel %vm2271, %v2269, 0
  %v2276 = vsel %vm1835, %v2242, 0
  %2278 = vmatpush.msra.mxu0 0.0
  %2279 = vmatpush.msra.mxu0 0.0
  %2280 = vmatpush.msra.mxu0 0.0
  %2281 = vmatpush.msra.mxu0 0.0
  %2282 = vmatpush.msra.mxu0 0.0
  %2283 = vmatpush.msra.mxu0 0.0
  %2284 = vmatpush.msra.mxu0 0.0
  %2285 = vmatpush.msra.mxu0 0.0
  %2286 = vmatpush.msra.mxu0 0.0
  %2287 = vmatpush.msra.mxu0 0.0
  %2288 = vmatpush.msra.mxu0 0.0
  %2289 = vmatpush.msra.mxu0 0.0
  %2290 = vmatpush.msra.mxu0 0.0
  %2291 = vmatpush.msra.mxu0 0.0
  %2292 = vmatpush.msra.mxu0 %v2276
  %2293 = vmatpush.msra.mxu0 %v2241
  %2294 = vmatmul.f32.gmra.mxu0 %v2273
  %v2295 = vpop.f32.mrf.mxu0
  %v2296 = vadd.f32 0.0, %v2295
  %2297 = vdwg.mxu0
  %v2299 = vsel %vm2247, %v2208, 0
  %2301 = vmatpush.msra.mxu0 0.0
  %2302 = vmatpush.msra.mxu0 0.0
  %2303 = vmatpush.msra.mxu0 0.0
  %2304 = vmatpush.msra.mxu0 0.0
  %2305 = vmatpush.msra.mxu0 0.0
  %2306 = vmatpush.msra.mxu0 0.0
  %2307 = vmatpush.msra.mxu0 0.0
  %2308 = vmatpush.msra.mxu0 0.0
  %2309 = vmatpush.msra.mxu0 0.0
  %2310 = vmatpush.msra.mxu0 0.0
  %2311 = vmatpush.msra.mxu0 0.0
  %2312 = vmatpush.msra.mxu0 0.0
  %2313 = vmatpush.msra.mxu0 0.0
  %2314 = vmatpush.msra.mxu0 0.0
  %2315 = vmatpush.msra.mxu0 0.0
  %2316 = vmatpush.msra.mxu0 %v2299
  %2317 = vmatmul.f32.gmra.mxu0 %v2245
  %v2318 = vpop.f32.mrf.mxu0
  %v2319 = vadd.f32 0.0, %v2318
  %2320 = vdwg.mxu0
  %v2322 = vsel %vm2271, %v2319, 0
  %2324 = vmatpush.msra.mxu0 0.0
  %2325 = vmatpush.msra.mxu0 0.0
  %2326 = vmatpush.msra.mxu0 0.0
  %2327 = vmatpush.msra.mxu0 0.0
  %2328 = vmatpush.msra.mxu0 0.0
  %2329 = vmatpush.msra.mxu0 0.0
  %2330 = vmatpush.msra.mxu0 0.0
  %2331 = vmatpush.msra.mxu0 0.0
  %2332 = vmatpush.msra.mxu0 0.0
  %2333 = vmatpush.msra.mxu0 0.0
  %2334 = vmatpush.msra.mxu0 0.0
  %2335 = vmatpush.msra.mxu0 0.0
  %2336 = vmatpush.msra.mxu0 0.0
  %2337 = vmatpush.msra.mxu0 0.0
  %2338 = vmatpush.msra.mxu0 %v2276
  %2339 = vmatpush.msra.mxu0 %v2241
  %2340 = vmatmul.f32.gmra.mxu0 %v2322
  %v2341 = vpop.f32.mrf.mxu0
  %v2342 = vadd.f32 0.0, %v2341
  %2343 = vdwg.mxu0
  %v2344 = vmul.f32 %v2165, %v2165
  %v2346 = vsel %vm2247, %v2344, 0
  %2348 = vmatpush.msra.mxu0 0.0
  %2349 = vmatpush.msra.mxu0 0.0
  %2350 = vmatpush.msra.mxu0 0.0
  %2351 = vmatpush.msra.mxu0 0.0
  %2352 = vmatpush.msra.mxu0 0.0
  %2353 = vmatpush.msra.mxu0 0.0
  %2354 = vmatpush.msra.mxu0 0.0
  %2355 = vmatpush.msra.mxu0 0.0
  %2356 = vmatpush.msra.mxu0 0.0
  %2357 = vmatpush.msra.mxu0 0.0
  %2358 = vmatpush.msra.mxu0 0.0
  %2359 = vmatpush.msra.mxu0 0.0
  %2360 = vmatpush.msra.mxu0 0.0
  %2361 = vmatpush.msra.mxu0 0.0
  %2362 = vmatpush.msra.mxu0 0.0
  %2363 = vmatpush.msra.mxu0 %v2346
  %2364 = vmatmul.f32.gmra.mxu0 %v2245
  %v2365 = vpop.f32.mrf.mxu0
  %v2366 = vadd.f32 0.0, %v2365
  %2367 = vdwg.mxu0
  %v2369 = vsel %vm2271, %v2366, 0
  %2371 = vmatpush.msra.mxu0 0.0
  %2372 = vmatpush.msra.mxu0 0.0
  %2373 = vmatpush.msra.mxu0 0.0
  %2374 = vmatpush.msra.mxu0 0.0
  %2375 = vmatpush.msra.mxu0 0.0
  %2376 = vmatpush.msra.mxu0 0.0
  %2377 = vmatpush.msra.mxu0 0.0
  %2378 = vmatpush.msra.mxu0 0.0
  %2379 = vmatpush.msra.mxu0 0.0
  %2380 = vmatpush.msra.mxu0 0.0
  %2381 = vmatpush.msra.mxu0 0.0
  %2382 = vmatpush.msra.mxu0 0.0
  %2383 = vmatpush.msra.mxu0 0.0
  %2384 = vmatpush.msra.mxu0 0.0
  %2385 = vmatpush.msra.mxu0 %v2276
  %2386 = vmatpush.msra.mxu0 %v2241
  %2387 = vmatmul.f32.gmra.mxu0 %v2369
  %v2388 = vpop.f32.mrf.mxu0
  %v2389 = vadd.f32 0.0, %v2388
  %2390 = vdwg.mxu0
  %v2391 = vmul.f32 %v2208, %v2208
  %v2393 = vsel %vm2247, %v2391, 0
  %2395 = vmatpush.msra.mxu0 0.0
  %2396 = vmatpush.msra.mxu0 0.0
  %2397 = vmatpush.msra.mxu0 0.0
  %2398 = vmatpush.msra.mxu0 0.0
  %2399 = vmatpush.msra.mxu0 0.0
  %2400 = vmatpush.msra.mxu0 0.0
  %2401 = vmatpush.msra.mxu0 0.0
  %2402 = vmatpush.msra.mxu0 0.0
  %2403 = vmatpush.msra.mxu0 0.0
  %2404 = vmatpush.msra.mxu0 0.0
  %2405 = vmatpush.msra.mxu0 0.0
  %2406 = vmatpush.msra.mxu0 0.0
  %2407 = vmatpush.msra.mxu0 0.0
  %2408 = vmatpush.msra.mxu0 0.0
  %2409 = vmatpush.msra.mxu0 0.0
  %2410 = vmatpush.msra.mxu0 %v2393
  %2411 = vmatmul.f32.gmra.mxu0 %v2245
  %v2412 = vpop.f32.mrf.mxu0
  %v2413 = vadd.f32 0.0, %v2412
  %2414 = vdwg.mxu0
  %v2416 = vsel %vm2271, %v2413, 0
  %2418 = vmatpush.msra.mxu0 0.0
  %2419 = vmatpush.msra.mxu0 0.0
  %2420 = vmatpush.msra.mxu0 0.0
  %2421 = vmatpush.msra.mxu0 0.0
  %2422 = vmatpush.msra.mxu0 0.0
  %2423 = vmatpush.msra.mxu0 0.0
  %2424 = vmatpush.msra.mxu0 0.0
  %2425 = vmatpush.msra.mxu0 0.0
  %2426 = vmatpush.msra.mxu0 0.0
  %2427 = vmatpush.msra.mxu0 0.0
  %2428 = vmatpush.msra.mxu0 0.0
  %2429 = vmatpush.msra.mxu0 0.0
  %2430 = vmatpush.msra.mxu0 0.0
  %2431 = vmatpush.msra.mxu0 0.0
  %2432 = vmatpush.msra.mxu0 %v2276
  %2433 = vmatpush.msra.mxu0 %v2241
  %2434 = vmatmul.f32.gmra.mxu0 %v2416
  %v2435 = vpop.f32.mrf.mxu0
  %v2436 = vadd.f32 0.0, %v2435
  %2437 = vdwg.mxu0
  %v2438 = vmul.f32 %v2165, %v2208
  %v2440 = vsel %vm2247, %v2438, 0
  %2442 = vmatpush.msra.mxu0 0.0
  %2443 = vmatpush.msra.mxu0 0.0
  %2444 = vmatpush.msra.mxu0 0.0
  %2445 = vmatpush.msra.mxu0 0.0
  %2446 = vmatpush.msra.mxu0 0.0
  %2447 = vmatpush.msra.mxu0 0.0
  %2448 = vmatpush.msra.mxu0 0.0
  %2449 = vmatpush.msra.mxu0 0.0
  %2450 = vmatpush.msra.mxu0 0.0
  %2451 = vmatpush.msra.mxu0 0.0
  %2452 = vmatpush.msra.mxu0 0.0
  %2453 = vmatpush.msra.mxu0 0.0
  %2454 = vmatpush.msra.mxu0 0.0
  %2455 = vmatpush.msra.mxu0 0.0
  %2456 = vmatpush.msra.mxu0 0.0
  %2457 = vmatpush.msra.mxu0 %v2440
  %2458 = vmatmul.f32.gmra.mxu0 %v2245
  %v2459 = vpop.f32.mrf.mxu0
  %v2460 = vadd.f32 0.0, %v2459
  %2461 = vdwg.mxu0
  %v2463 = vsel %vm2271, %v2460, 0
  %2465 = vmatpush.msra.mxu0 0.0
  %2466 = vmatpush.msra.mxu0 0.0
  %2467 = vmatpush.msra.mxu0 0.0
  %2468 = vmatpush.msra.mxu0 0.0
  %2469 = vmatpush.msra.mxu0 0.0
  %2470 = vmatpush.msra.mxu0 0.0
  %2471 = vmatpush.msra.mxu0 0.0
  %2472 = vmatpush.msra.mxu0 0.0
  %2473 = vmatpush.msra.mxu0 0.0
  %2474 = vmatpush.msra.mxu0 0.0
  %2475 = vmatpush.msra.mxu0 0.0
  %2476 = vmatpush.msra.mxu0 0.0
  %2477 = vmatpush.msra.mxu0 0.0
  %2478 = vmatpush.msra.mxu0 0.0
  %2479 = vmatpush.msra.mxu0 %v2276
  %2480 = vmatpush.msra.mxu0 %v2241
  %2481 = vmatmul.f32.gmra.mxu0 %v2463
  %v2482 = vpop.f32.mrf.mxu0
  %v2483 = vadd.f32 0.0, %v2482
  %2484 = vdwg.mxu0
  %v2485 = vmul.f32 %v2296, %v2296
  %v2486 = vmul.f32 %v2342, %v2342
  %v2487 = vmul.f32 %v2296, %v2342
  %v2488 = vsub.f32 %v2389, %v2485
  %v2489 = vsub.f32 %v2436, %v2486
  %v2490 = vsub.f32 %v2483, %v2487
  %v2491 = vmul.f32 %v2490, 2.0
  %v2492 = vstv %s2239
  %v2493 = vadd.f32 %v2491, %v2492
  %v2494 = vadd.f32 %v2488, %v2489
  %v2495 = vadd.f32 %v2494, %v2492
  %v2496 = vrcp.pop %v2495
  %v2497 = vmul.f32 %v2493, %v2496
  %v2498 = vmul.f32 %v2487, 2.0
  %v2499 = vstv %s2237
  %v2500 = vadd.f32 %v2498, %v2499
  %v2501 = vadd.f32 %v2485, %v2486
  %v2502 = vadd.f32 %v2501, %v2499
  %v2503 = vrcp.pop %v2502
  %v2504 = vmul.f32 %v2500, %v2503
  %v2505 = vmul.f32 %v2497, %v2504
  %v2506 = vsel %vm1674, %v2505, 0.0
  %2507 = vadd.xlane.f32.xlu0 %v2506
  %v2508 = vpop.xlane.xlu0 %2507
  %v2509 = vrot.slane %v2508, 4
  %v2510 = vadd.f32 %v2508, %v2509
  %v2511 = vrot.slane %v2510, 2
  %v2512 = vadd.f32 %v2510, %v2511
  %v2513 = vrot.slane %v2512, 1
  %v2514 = vadd.f32 %v2512, %v2513
  %s2515 = vtos %v2514
  %s2516 = smul.f32 %s2515, 0.16666667
  %v2517 = vsel %vm1674, %v2497, 0.0
  %2518 = vadd.xlane.f32.xlu0 %v2517
  %v2519 = vpop.xlane.xlu0 %2518
  %v2520 = vrot.slane %v2519, 4
  %v2521 = vadd.f32 %v2519, %v2520
  %v2522 = vrot.slane %v2521, 2
  %v2523 = vadd.f32 %v2521, %v2522
  %v2524 = vrot.slane %v2523, 1
  %v2525 = vadd.f32 %v2523, %v2524
  %s2526 = vtos %v2525
  %s2527 = smul.f32 %s2526, 0.16666667
  %v2528 = vstv %s2516
  %2529 = vst [vmem:[%s20 + $0x4] sm:$0x1] %v2528
  %v2530 = vstv %s2527
  %2531 = vst [vmem:[%s21 + $0x4] sm:$0x1] %v2530
  // Predicated region
  $region82: #{_lambda_.1} parent=0 // pred_check
    _
  $region83: #{_lambda_.1} parent=0 // pred_check_branch
    %2533 = sbr.rel (0) target = $region85
  $region84: #{_lambda_.1} parent=0 // pred_region
    _
  $region85: #{_lambda_.1} parent=0 // pred_fallthru
    _
  // Predicated region
  $region86: #{_lambda_.1} parent=0 // pred_check
    _
  $region87: #{_lambda_.1} parent=0 // pred_check_branch
    %2535 = sbr.rel (0) target = $region89
  $region88: #{_lambda_.1} parent=0 // pred_region
    _
  $region89: #{_lambda_.1} parent=0 // pred_fallthru
    _
  // Predicated region
  $region90: #{_lambda_.1} parent=0 // pred_check
    _
  $region91: #{_lambda_.1} parent=0 // pred_check_branch
    %2537 = sbr.rel (0) target = $region93
  $region92: #{_lambda_.1} parent=0 // pred_region
    _
  $region93: #{_lambda_.1} parent=0 // pred_fallthru
    _
  // Predicated region
  $region94: #{_lambda_.1} parent=0 // pred_check
    _
  $region95: #{_lambda_.1} parent=0 // pred_check_branch
    %2539 = sbr.rel (0) target = $region97
  $region96: #{_lambda_.1} parent=0 // pred_region
    _
  $region97: #{_lambda_.1} parent=0 // pred_fallthru
    _

</llo_original>
